<compile_context>
chip_gen: v7x
topology: tpu7x:2x2x1
jax: 0.10.0
libtpu: 0.0.40
codegen_flags: <defaults>
</compile_context>

<pallas_src>
import functools

import jax
import jax.numpy as jnp
from jax.experimental import pallas as pl
from jax.experimental.pallas import tpu as pltpu

OUT_SIZE = 256   # target spatial size from the reference forward()
LANE = 128       # TPU lane width; head output padded to a multiple of this


# ----------------------------------------------------------------------------
# Bilinear interpolation matrix (PyTorch F.interpolate, align_corners=False).
# Rows are convex (sum to 1), so resizing a constant plane is exact.
# ----------------------------------------------------------------------------
def bilinear_matrix(in_size: int, out_size: int) -> jnp.ndarray:
    scale = in_size / out_size
    i = jnp.arange(out_size, dtype=jnp.float32)
    src = jnp.clip((i + 0.5) * scale - 0.5, 0.0, float(in_size - 1))
    lo = jnp.floor(src).astype(jnp.int32)
    hi = jnp.minimum(lo + 1, in_size - 1)
    w_hi = src - lo.astype(jnp.float32)
    w_lo = 1.0 - w_hi
    rows = jnp.arange(out_size, dtype=jnp.int32)
    a = jnp.zeros((out_size, in_size), dtype=jnp.float32)
    a = a.at[rows, lo].add(w_lo)
    a = a.at[rows, hi].add(w_hi)
    return a


# ----------------------------------------------------------------------------
# Fused kernel: [bilinear resize + conv1x1 + bias] (two MXU matmuls, bias folded
# into the contraction) + ReLU + global average pool (sublane-first) + partial
# lane-padded linear head.  One (batch block, hidden block) per grid step.
# ----------------------------------------------------------------------------
def _fused_kernel(x_ref, awt_ref, ball_ref, w2_ref, o_ref, *, nb, kpad, hid_chunk):
    inv_area = 1.0 / float(OUT_SIZE * OUT_SIZE)
    w_in = x_ref.shape[-1]

    # Width resize of all nb batch elements in ONE MXU matmul.
    # kpad is a multiple of 16, so this bf16 leading-dim merge is tile-aligned.
    x_all = x_ref[...].reshape(nb * kpad, w_in)                         # bf16 (nb*Kpad, W)
    xw_all = jnp.dot(x_all, awt_ref[...],
                     preferred_element_type=jnp.float32)                # (nb*Kpad, 256) f32
    xw_all = xw_all.astype(jnp.bfloat16)                                # bf16 feed for 2nd matmul

    ball = ball_ref[...]                                                # (hid_chunk*256, Kpad) bf16
    w2 = w2_ref[0]                                                      # (hid_chunk, ncls_pad) f32

    rows = []
    for b in range(nb):                                                 # static unroll, nb <= 8
        xw_b = xw_all[b * kpad:(b + 1) * kpad, :]                       # sublane-aligned slice
        # fused [height resize + 1x1 channel mix + bias] (bias via ones row / bias col)
        p = jnp.dot(ball, xw_b, preferred_element_type=jnp.float32)     # (hid_chunk*256, 256)
        h = jnp.maximum(p, 0.0)                                         # ReLU
        h3 = h.reshape(hid_chunk, OUT_SIZE, OUT_SIZE)                   # leading-dim split only
        # global average pool: bulk of the reduction over the SUBLANE axis first
        # (VPU vreg adds), then a tiny lane reduce on (hid_chunk, 256).
        s = jnp.sum(h3, axis=1)                                         # (hid_chunk, 256)
        pooled = jnp.sum(s, axis=1, keepdims=True) * inv_area           # (hid_chunk, 1)
        # partial linear-head contribution of this hidden block (b2 added in wrapper)
        rows.append(jnp.sum(w2 * pooled, axis=0, keepdims=True))        # (1, ncls_pad)

    o_ref[0] = jnp.concatenate(rows, axis=0)                            # (nb, ncls_pad) lane-dense


@jax.jit
def generic_backbone_forward(x, w1, b1, w2, b2):
    B, C, H, W = x.shape
    hidden = w1.shape[1]
    ncls = w2.shape[1]
    ncls_pad = ((ncls + LANE - 1) // LANE) * LANE

    K = C * H
    k_pad = ((K + 1 + 15) // 16) * 16        # room for the ones row, bf16-tile aligned

    # resize operators (identity when the input is already 256x256, so one code path
    # preserves the "resize only if needed" semantics of the reference forward()).
    a_h = bilinear_matrix(H, OUT_SIZE)                     # (256, H)  f32
    a_w_t = bilinear_matrix(W, OUT_SIZE).T.astype(jnp.bfloat16)   # (W, 256) bf16

    # Fold the 1x1 channel mix into the height-resize operator and fold the bias
    # into an extra contraction column:
    #   ball[(k,o), (c,h)] = W1[c,k] * A_h[o,h];  ball[(k,o), K] = b1[k]
    ball_core = jnp.einsum("ck,oh->koch", w1.astype(jnp.float32), a_h)
    ball_core = ball_core.reshape(hidden * OUT_SIZE, K)
    b1_col = jnp.repeat(b1.reshape(hidden).astype(jnp.float32), OUT_SIZE)
    ball = jnp.zeros((hidden * OUT_SIZE, k_pad), jnp.float32)
    ball = ball.at[:, :K].set(ball_core).at[:, K].set(b1_col)
    ball = ball.astype(jnp.bfloat16)

    # `.float()` of the reference forward; tiny (16x16) input.  Append a ones row at
    # index K (bilinear rows are convex -> it width-resizes to exact ones) so the
    # bias column of `ball` contracts against 1.
    x2 = x.astype(jnp.float32).reshape(B, K, W)
    pad_rows = jnp.zeros((B, k_pad - K, W), jnp.float32).at[:, 0, :].set(1.0)
    x2p = jnp.concatenate([x2, pad_rows], axis=1).astype(jnp.bfloat16)   # (B, Kpad, W)

    # batch blocking: nb batch elements per grid step (nb = B when B<=8, else 8 with
    # zero-padding so the output block's sublane dim is 8-aligned or full-dim).
    if B <= 8:
        nb, b_pad = B, B
    else:
        nb, b_pad = 8, ((B + 7) // 8) * 8
    if b_pad != B:
        x2p = jnp.concatenate(
            [x2p, jnp.zeros((b_pad - B, k_pad, W), x2p.dtype)], axis=0)

    # hidden-plane blocks: >=2 when possible (keeps both v7x TCs busy at any batch
    # size) and chunk <= 8 (caps the (chunk*256,256) f32 temporaries as hidden grows).
    n_hblocks = 1
    while (hidden // n_hblocks > 8 or n_hblocks < 2) and hidden % (n_hblocks * 2) == 0:
        n_hblocks *= 2
    hid_chunk = hidden // n_hblocks

    # lane-padded head weights, pre-split per hidden block (f32 elementwise path)
    w2p = jnp.zeros((hidden, ncls_pad), jnp.float32).at[:, :ncls].set(w2)
    w2p = w2p.reshape(n_hblocks, hid_chunk, ncls_pad)

    kernel = functools.partial(_fused_kernel, nb=nb, kpad=k_pad, hid_chunk=hid_chunk)

    out_part = pl.pallas_call(
        kernel,
        out_shape=jax.ShapeDtypeStruct((n_hblocks, b_pad, ncls_pad), jnp.float32),
        grid_spec=pltpu.PrefetchScalarGridSpec(
            num_scalar_prefetch=0,
            grid=(b_pad // nb, n_hblocks),
            in_specs=[
                pl.BlockSpec((nb, k_pad, W), lambda bi, hi: (bi, 0, 0)),
                pl.BlockSpec((W, OUT_SIZE), lambda bi, hi: (0, 0)),
                pl.BlockSpec((hid_chunk * OUT_SIZE, k_pad), lambda bi, hi: (hi, 0)),
                pl.BlockSpec((1, hid_chunk, ncls_pad), lambda bi, hi: (hi, 0, 0)),
            ],
            out_specs=pl.BlockSpec((1, nb, ncls_pad), lambda bi, hi: (hi, bi, 0)),
        ),
        compiler_params=pltpu.CompilerParams(
            dimension_semantics=("parallel", "parallel"),
            vmem_limit_bytes=16 << 20,
        ),
    )(x2p, a_w_t, ball, w2p)

    # tiny final reduction over hidden blocks + head bias, strip padding
    out = jnp.sum(out_part, axis=0)[:B, :ncls] + b2.reshape(1, ncls)
    return out


# ----------------------------------------------------------------------------
# Pure-JAX f32 reference in the ORIGINAL op order (resize -> conv1x1 -> ReLU ->
# GAP -> head) to validate the fused / reordered kernel.
# ----------------------------------------------------------------------------
def _reference_forward(x, w1, b1, w2, b2):
    B, C, H, W = x.shape
    a_h = bilinear_matrix(H, OUT_SIZE)                 # (256, H)
    a_w = bilinear_matrix(W, OUT_SIZE)                 # (256, W)
    xr = jnp.einsum("oh,bchw,pw->bcop", a_h, x.astype(jnp.float32), a_w)   # (B,C,256,256)
    xf = jnp.transpose(xr, (0, 2, 3, 1)).reshape(B, OUT_SIZE * OUT_SIZE, C)
    h = jnp.maximum(xf @ w1 + b1, 0.0)
    pooled = jnp.mean(h, axis=1)
    return pooled @ w2 + b2


if __name__ == "__main__":
    B, C, H, W = 2, 4, 16, 16
    HIDDEN, NCLS = 8, 8

    key = jax.random.PRNGKey(0)
    kx, kw1, kb1, kw2, kb2 = jax.random.split(key, 5)
    x = jax.random.normal(kx, (B, C, H, W), dtype=jnp.float32)

    # deterministic synthetic backbone parameters (stand-in for the unspecified model.model)
    w1 = jax.random.normal(kw1, (C, HIDDEN), dtype=jnp.float32) * 0.1
    b1 = jax.random.normal(kb1, (1, HIDDEN), dtype=jnp.float32) * 0.01
    w2 = jax.random.normal(kw2, (HIDDEN, NCLS), dtype=jnp.float32) * 0.1
    b2 = jax.random.normal(kb2, (1, NCLS), dtype=jnp.float32) * 0.01

    out = generic_backbone_forward(x, w1, b1, w2, b2)
    jax.block_until_ready(out)

    ref = _reference_forward(x, w1, b1, w2, b2)
    assert out.shape == (B, NCLS) and out.dtype == jnp.float32
    # bf16 matmul operands in the kernel vs f32 reference -> relaxed tolerance
    assert bool(jnp.allclose(out, ref, rtol=2e-2, atol=2e-3)), "kernel/reference mismatch"
    print("KERNEL_OK")
</pallas_src>

<mosaic_0001>
module attributes {stable_mosaic.version = 11 : i64} {
  func.func private @main(%arg0: i32) attributes {dimension_semantics = [#tpu.dimension_semantics<core_parallel>], iteration_bounds = array<i64: 2>, tpu.core_type = #tpu.core_type<sc_scalar_subcore>, window_params = []} {
    return
  }
}

module attributes {stable_mosaic.version = 11 : i64} {
  func.func private @main(%arg0: i32) attributes {dimension_semantics = [#tpu.dimension_semantics<core_parallel>], iteration_bounds = array<i64: 2>, tpu.core_type = #tpu.core_type<sc_scalar_subcore>, window_params = []} {
    return
  }
}

module attributes {stable_mosaic.version = 11 : i64} {
  func.func @_fused_kernel(%arg0: i32, %arg1: i32, %arg2: memref<2x80x16xbf16, #tpu.memory_space<vmem>>, %arg3: memref<16x256xbf16, #tpu.memory_space<vmem>>, %arg4: memref<1024x80xbf16, #tpu.memory_space<vmem>>, %arg5: memref<1x4x128xf32, #tpu.memory_space<vmem>>, %arg6: memref<1x2x128xf32, #tpu.memory_space<vmem>>) attributes {dimension_semantics = [#tpu.dimension_semantics<parallel>, #tpu.dimension_semantics<parallel>], iteration_bounds = array<i64: 1, 2>, scalar_prefetch = 0 : i64, scratch_operands = 0 : i64, tpu.core_type = #tpu.core_type<tc>, window_params = [{transform_indices = @transform_0, window_bounds = array<i64: 2, 80, 16>}, {pipeline_mode = #tpu.pipeline_mode<synchronous>, transform_indices = @transform_1, window_bounds = array<i64: 16, 256>}, {transform_indices = @transform_2, window_bounds = array<i64: 1024, 80>}, {transform_indices = @transform_3, window_bounds = array<i64: 1, 4, 128>}, {transform_indices = @transform_4, window_bounds = array<i64: 1, 2, 128>}]} {
    %c0 = arith.constant 0 : index
    %c0_0 = arith.constant 0 : index
    %c0_1 = arith.constant 0 : index
    %0 = vector.load %arg2[%c0, %c0_0, %c0_1] : memref<2x80x16xbf16, #tpu.memory_space<vmem>>, vector<2x80x16xbf16>
    %1 = vector.shape_cast %0 : vector<2x80x16xbf16> to vector<160x16xbf16>
    %c0_2 = arith.constant 0 : index
    %c0_3 = arith.constant 0 : index
    %2 = vector.load %arg3[%c0_2, %c0_3] : memref<16x256xbf16, #tpu.memory_space<vmem>>, vector<16x256xbf16>
    %cst = arith.constant dense<0.000000e+00> : vector<160x256xf32>
    %3 = tpu.matmul %1, %2, %cst {dimension_numbers = #tpu.dot_dimension_numbers<[1], [0], [0], [1], [0, 0, 1, 1], [], []>} : vector<160x16xbf16>, vector<16x256xbf16>, vector<160x256xf32> -> vector<160x256xf32>
    %4 = arith.truncf %3 : vector<160x256xf32> to vector<160x256xbf16>
    %c0_4 = arith.constant 0 : index
    %c0_5 = arith.constant 0 : index
    %5 = vector.load %arg4[%c0_4, %c0_5] : memref<1024x80xbf16, #tpu.memory_space<vmem>>, vector<1024x80xbf16>
    %c0_6 = arith.constant 0 : index
    %c0_7 = arith.constant 0 : index
    %c0_8 = arith.constant 0 : index
    %6 = vector.load %arg5[%c0_6, %c0_7, %c0_8] : memref<1x4x128xf32, #tpu.memory_space<vmem>>, vector<1x4x128xf32>
    %7 = vector.shape_cast %6 : vector<1x4x128xf32> to vector<4x128xf32>
    %8 = vector.extract_strided_slice %4 {offsets = [0, 0], sizes = [80, 256], strides = [1, 1]} : vector<160x256xbf16> to vector<80x256xbf16>
    %cst_9 = arith.constant dense<0.000000e+00> : vector<1024x256xf32>
    %9 = tpu.matmul %5, %8, %cst_9 {dimension_numbers = #tpu.dot_dimension_numbers<[1], [0], [0], [1], [0, 0, 1, 1], [], []>} : vector<1024x80xbf16>, vector<80x256xbf16>, vector<1024x256xf32> -> vector<1024x256xf32>
    %cst_10 = arith.constant 0.000000e+00 : f32
    %10 = vector.broadcast %cst_10 : f32 to vector<1024x256xf32>
    %11 = arith.maximumf %9, %10 : vector<1024x256xf32>
    %12 = vector.shape_cast %11 : vector<1024x256xf32> to vector<4x256x256xf32>
    %cst_11 = arith.constant dense<0.000000e+00> : vector<4x256xf32>
    %13 = vector.multi_reduction <add>, %12, %cst_11 [1] : vector<4x256x256xf32> to vector<4x256xf32>
    %cst_12 = arith.constant dense<0.000000e+00> : vector<4xf32>
    %14 = vector.multi_reduction <add>, %13, %cst_12 [1] : vector<4x256xf32> to vector<4xf32>
    %15 = vector.shape_cast %14 : vector<4xf32> to vector<4x1xf32>
    %cst_13 = arith.constant 1.52587891E-5 : f32
    %16 = vector.broadcast %cst_13 : f32 to vector<4x1xf32>
    %17 = arith.mulf %15, %16 : vector<4x1xf32>
    %18 = vector.broadcast %17 : vector<4x1xf32> to vector<4x128xf32>
    %19 = arith.mulf %7, %18 : vector<4x128xf32>
    %cst_14 = arith.constant dense<0.000000e+00> : vector<128xf32>
    %20 = vector.multi_reduction <add>, %19, %cst_14 [0] : vector<4x128xf32> to vector<128xf32>
    %21 = vector.shape_cast %20 : vector<128xf32> to vector<1x128xf32>
    %22 = vector.extract_strided_slice %4 {offsets = [80, 0], sizes = [80, 256], strides = [1, 1]} : vector<160x256xbf16> to vector<80x256xbf16>
    %cst_15 = arith.constant dense<0.000000e+00> : vector<1024x256xf32>
    %23 = tpu.matmul %5, %22, %cst_15 {dimension_numbers = #tpu.dot_dimension_numbers<[1], [0], [0], [1], [0, 0, 1, 1], [], []>} : vector<1024x80xbf16>, vector<80x256xbf16>, vector<1024x256xf32> -> vector<1024x256xf32>
    %cst_16 = arith.constant 0.000000e+00 : f32
    %24 = vector.broadcast %cst_16 : f32 to vector<1024x256xf32>
    %25 = arith.maximumf %23, %24 : vector<1024x256xf32>
    %26 = vector.shape_cast %25 : vector<1024x256xf32> to vector<4x256x256xf32>
    %cst_17 = arith.constant dense<0.000000e+00> : vector<4x256xf32>
    %27 = vector.multi_reduction <add>, %26, %cst_17 [1] : vector<4x256x256xf32> to vector<4x256xf32>
    %cst_18 = arith.constant dense<0.000000e+00> : vector<4xf32>
    %28 = vector.multi_reduction <add>, %27, %cst_18 [1] : vector<4x256xf32> to vector<4xf32>
    %29 = vector.shape_cast %28 : vector<4xf32> to vector<4x1xf32>
    %cst_19 = arith.constant 1.52587891E-5 : f32
    %30 = vector.broadcast %cst_19 : f32 to vector<4x1xf32>
    %31 = arith.mulf %29, %30 : vector<4x1xf32>
    %32 = vector.broadcast %31 : vector<4x1xf32> to vector<4x128xf32>
    %33 = arith.mulf %7, %32 : vector<4x128xf32>
    %cst_20 = arith.constant dense<0.000000e+00> : vector<128xf32>
    %34 = vector.multi_reduction <add>, %33, %cst_20 [0] : vector<4x128xf32> to vector<128xf32>
    %35 = vector.shape_cast %34 : vector<128xf32> to vector<1x128xf32>
    %36 = tpu.concatenate %21, %35 in 0 : vector<1x128xf32>, vector<1x128xf32> -> vector<2x128xf32>
    %c0_21 = arith.constant 0 : index
    %c0_22 = arith.constant 0 : index
    %c0_23 = arith.constant 0 : index
    %37 = vector.load %arg6[%c0_21, %c0_22, %c0_23] : memref<1x2x128xf32, #tpu.memory_space<vmem>>, vector<1x2x128xf32>
    %38 = vector.shape_cast %37 : vector<1x2x128xf32> to vector<2x128xf32>
    %39 = vector.shape_cast %36 : vector<2x128xf32> to vector<1x2x128xf32>
    tpu.vector_store %arg6[%c0_21, %c0_22, %c0_23], %39 {strides = array<i32>} : memref<1x2x128xf32, #tpu.memory_space<vmem>>, vector<1x2x128xf32>,
    return
  }
  func.func @transform_0(%arg0: i32, %arg1: i32) -> (i32, i32, i32) {
    %c0_i32 = arith.constant 0 : i32
    %c0_i32_0 = arith.constant 0 : i32
    %c0_i32_1 = arith.constant 0 : i32
    return %arg0, %c0_i32, %c0_i32_0 : i32, i32, i32
  }
  func.func @transform_1(%arg0: i32, %arg1: i32) -> (i32, i32) {
    %c0_i32 = arith.constant 0 : i32
    %c0_i32_0 = arith.constant 0 : i32
    %c0_i32_1 = arith.constant 0 : i32
    return %c0_i32, %c0_i32_0 : i32, i32
  }
  func.func @transform_2(%arg0: i32, %arg1: i32) -> (i32, i32) {
    %c0_i32 = arith.constant 0 : i32
    %c0_i32_0 = arith.constant 0 : i32
    return %arg1, %c0_i32 : i32, i32
  }
  func.func @transform_3(%arg0: i32, %arg1: i32) -> (i32, i32, i32) {
    %c0_i32 = arith.constant 0 : i32
    %c0_i32_0 = arith.constant 0 : i32
    %c0_i32_1 = arith.constant 0 : i32
    return %arg1, %c0_i32, %c0_i32_0 : i32, i32, i32
  }
  func.func @transform_4(%arg0: i32, %arg1: i32) -> (i32, i32, i32) {
    %c0_i32 = arith.constant 0 : i32
    %c0_i32_0 = arith.constant 0 : i32
    return %arg1, %arg0, %c0_i32 : i32, i32, i32
  }
}

</mosaic_0001>

<llo_original>
// kernel: generic_backbone_forward.1
$region0: #{generic_backbone_forward.1}
  #allocation0 [shape = 'u32[]', space=smem, size = 0x4, offset = 0x4, fixed_abs, tag = 'smem constant byte address 0x4 - core index']
  #allocation1 [shape = 'u32[144,128]{1,0:T(1,128)}', space=vmem, size = 0x12000, scoped, tag = 'internal scratch']
  %s0 = inlined_call_operand.vmem [shape: bf16[2,80,16], index: 0, kind: input, shape index: {}]
  %s1 = inlined_call_operand.vmem [shape: bf16[16,256], index: 1, kind: input, shape index: {}]
  %s2 = inlined_call_operand.vmem [shape: bf16[2048,80], index: 2, kind: input, shape index: {}]
  %s3 = inlined_call_operand.vmem [shape: f32[2,4,128], index: 3, kind: input, shape index: {}]
  %s4 = inlined_call_operand.vmem [shape: f32[2,2,128], index: 4, kind: output, shape index: {}]
  %s5 = sld [smem:[#allocation0]]
  $region49: #{generic_backbone_forward.1} parent=0
    _
  %s7 = ssub.s32 1, %s5
  %s8 = scalar_select 0, %s7, %s5
  loop: start=0, step=1, limit=4
  $region2: #{generic_backbone_forward.1} parent=0 // loop_pre_header
    _
  $region3: #{generic_backbone_forward.1} parent=0 // loop_header
    %s10 = sphi 0, %s14
    %p11 = scmp.ge.s32.totalorder %s10, 4
    %s17 = sphi 0, %s29
    %s18 = sphi 0, %s25
    %s19 = sphi 0, %s17
    %s20 = sphi 0, %s18
    %s21 = sphi 0, %s19
    %s22 = sphi 0, %s20
    %s32 = sphi 0, %s34
    %s35 = sphi 0, %s32
    %s36 = sphi 0, %s35
    %s52 = sphi 0, %s36
    %s56 = sphi 0, %s56
    %s58 = sphi 0, %s56
    %s59 = sphi 0, %s58
    %s73 = sphi 0, %s59
    %s79 = sphi 0, %s81
    %s82 = sphi 0, %s79
    %s83 = sphi 0, %s82
    %s99 = sphi 0, %s83
    %s105 = sphi 0, %s107
    %s108 = sphi 0, %s105
    %s109 = sphi 0, %s108
    %s125 = sphi 0, %s109
    %s133 = sphi 0, %s135
    %s136 = sphi 0, %s133
    %s137 = sphi 0, %s136
    %s153 = sphi 0, %s137
  $region4: #{generic_backbone_forward.1} parent=0 // loop_header_branch
    %13 = sbr.rel (%p11) target = $region8
  $region5: #{generic_backbone_forward.1} parent=0 // loop_body
    %s15 = ssub.s32 %s10, 1
    %s16 = ssub.s32 %s10, 2
    %s23 = sadd.s32 1, %s18
    %p24 = scmp.ge.s32.totalorder %s23, 2
    %s25 = scalar_select %p24, 0, %s23
    %s26 = sadd.s32 1, %s17
    %s27 = scalar_select %p24, %s26, %s17
    %p28 = scmp.ge.s32.totalorder %s27, 1
    %s29 = scalar_select %p28, 0, %s27
    %s30 = ssub.s32 %s17, %s29
    %p31 = scmp.eq.s32.totalorder %s30, 0
    %s33 = sadd.s32 %s32, 1
    %s34 = scalar_select %p31, %s32, %s33
    %p37 = pneg %p31
    %p38 = scmp.eq.s32.totalorder %s10, 1
    %p39 = por %p37, %p38
    %p40 = scmp.ne.s32.totalorder %s32, %s35
    %p41 = scmp.eq.s32.totalorder %s10, 0
    %p42 = por %p40, %p41
    %p43 = scmp.ne.s32.totalorder %s32, %s35
    %p44 = scmp.eq.s32.totalorder %s15, 1
    %p45 = por %p43, %p44
    %p46 = scmp.ne.s32.totalorder %s35, %s36
    %p47 = scmp.eq.s32.totalorder %s15, 0
    %p48 = por %p46, %p47
    %p49 = scmp.ne.s32.totalorder %s35, %s36
    %p50 = scmp.eq.s32.totalorder %s16, 1
    %p51 = por %p49, %p50
    %p53 = scmp.ne.s32.totalorder %s36, %s52
    %p54 = scmp.eq.s32.totalorder %s16, 0
    %p55 = por %p53, %p54
    %s57 = sadd.s32 %s56, 1
    %p60 = scmp.eq.s32.totalorder %s10, 1
    %p61 = scmp.ne.s32.totalorder %s56, %s58
    %p62 = scmp.eq.s32.totalorder %s10, 0
    %p63 = por %p61, %p62
    %p64 = scmp.ne.s32.totalorder %s56, %s58
    %p65 = scmp.eq.s32.totalorder %s15, 1
    %p66 = por %p64, %p65
    %p67 = scmp.ne.s32.totalorder %s58, %s59
    %p68 = scmp.eq.s32.totalorder %s15, 0
    %p69 = por %p67, %p68
    %p70 = scmp.ne.s32.totalorder %s58, %s59
    %p71 = scmp.eq.s32.totalorder %s16, 1
    %p72 = por %p70, %p71
    %p74 = scmp.ne.s32.totalorder %s59, %s73
    %p75 = scmp.eq.s32.totalorder %s16, 0
    %p76 = por %p74, %p75
    %s77 = ssub.s32 %s18, %s25
    %p78 = scmp.eq.s32.totalorder %s77, 0
    %s80 = sadd.s32 %s79, 1
    %s81 = scalar_select %p78, %s79, %s80
    %p84 = pneg %p78
    %p85 = scmp.eq.s32.totalorder %s10, 1
    %p86 = por %p84, %p85
    %p87 = scmp.ne.s32.totalorder %s79, %s82
    %p88 = scmp.eq.s32.totalorder %s10, 0
    %p89 = por %p87, %p88
    %p90 = scmp.ne.s32.totalorder %s79, %s82
    %p91 = scmp.eq.s32.totalorder %s15, 1
    %p92 = por %p90, %p91
    %p93 = scmp.ne.s32.totalorder %s82, %s83
    %p94 = scmp.eq.s32.totalorder %s15, 0
    %p95 = por %p93, %p94
    %p96 = scmp.ne.s32.totalorder %s82, %s83
    %p97 = scmp.eq.s32.totalorder %s16, 1
    %p98 = por %p96, %p97
    %p100 = scmp.ne.s32.totalorder %s83, %s99
    %p101 = scmp.eq.s32.totalorder %s16, 0
    %p102 = por %p100, %p101
    %s103 = ssub.s32 %s18, %s25
    %p104 = scmp.eq.s32.totalorder %s103, 0
    %s106 = sadd.s32 %s105, 1
    %s107 = scalar_select %p104, %s105, %s106
    %p110 = pneg %p104
    %p111 = scmp.eq.s32.totalorder %s10, 1
    %p112 = por %p110, %p111
    %p113 = scmp.ne.s32.totalorder %s105, %s108
    %p114 = scmp.eq.s32.totalorder %s10, 0
    %p115 = por %p113, %p114
    %p116 = scmp.ne.s32.totalorder %s105, %s108
    %p117 = scmp.eq.s32.totalorder %s15, 1
    %p118 = por %p116, %p117
    %p119 = scmp.ne.s32.totalorder %s108, %s109
    %p120 = scmp.eq.s32.totalorder %s15, 0
    %p121 = por %p119, %p120
    %p122 = scmp.ne.s32.totalorder %s108, %s109
    %p123 = scmp.eq.s32.totalorder %s16, 1
    %p124 = por %p122, %p123
    %p126 = scmp.ne.s32.totalorder %s109, %s125
    %p127 = scmp.eq.s32.totalorder %s16, 0
    %p128 = por %p126, %p127
    %s129 = ssub.s32 %s18, %s25
    %s130 = ssub.s32 %s17, %s29
    %s131 = sor.u32 %s129, %s130
    %p132 = scmp.eq.s32.totalorder %s131, 0
    %s134 = sadd.s32 %s133, 1
    %s135 = scalar_select %p132, %s133, %s134
    %p138 = pneg %p132
    %p139 = scmp.eq.s32.totalorder %s10, 1
    %p140 = por %p138, %p139
    %p141 = scmp.ne.s32.totalorder %s133, %s136
    %p142 = scmp.eq.s32.totalorder %s10, 0
    %p143 = por %p141, %p142
    %p144 = scmp.ne.s32.totalorder %s133, %s136
    %p145 = scmp.eq.s32.totalorder %s15, 1
    %p146 = por %p144, %p145
    %p147 = scmp.ne.s32.totalorder %s136, %s137
    %p148 = scmp.eq.s32.totalorder %s15, 0
    %p149 = por %p147, %p148
    %p150 = scmp.ne.s32.totalorder %s136, %s137
    %p151 = scmp.eq.s32.totalorder %s16, 1
    %p152 = por %p150, %p151
    %p154 = scmp.ne.s32.totalorder %s137, %s153
    %p155 = scmp.eq.s32.totalorder %s16, 0
    %p156 = por %p154, %p155
    %p157 = scmp.le.s32.totalorder 1, %s10
    %p158 = scmp.lt.s32.totalorder %s10, 3
    %p159 = pnand %p157, %p158
    %p160 = pneg %p159
    // Predicated region
    $region9: #{generic_backbone_forward.1} parent=5 // pred_check
      _
    $region10: #{generic_backbone_forward.1} parent=5 // pred_check_branch
      %162 = sbr.rel (%p159) target = $region12
    $region11: #{generic_backbone_forward.1} parent=5 // pred_region
      %s163 = ssub.s32 %s10, 1
      // Predicated region
      $region13: #{generic_backbone_forward.1} parent=11 // pred_check
        %p164 = pneg %p48
      $region14: #{generic_backbone_forward.1} parent=11 // pred_check_branch
        %166 = sbr.rel (%p164) target = $region16
      $region15: #{generic_backbone_forward.1} parent=11 // pred_region
        %s167 = smul.u32 2, %s19
        %p168 = scmp.lt.s32.totalorder %s167, 1
        %s169 = scalar_select %p168, %s167, 1
        %s170 = smul.addr %s169, 10
        %s171 = smul.addr %s170, 4
        %s172 = scalar_lea.vmem %s0, %s171
        %s173 = smul.u32 2, %s19
      $region16: #{generic_backbone_forward.1} parent=11 // pred_fallthru
        _
      // Predicated region
      $region17: #{generic_backbone_forward.1} parent=11 // pred_check
        %p174 = pneg %p69
      $region18: #{generic_backbone_forward.1} parent=11 // pred_check_branch
        %176 = sbr.rel (%p174) target = $region20
      $region19: #{generic_backbone_forward.1} parent=11 // pred_region
        _
      $region20: #{generic_backbone_forward.1} parent=11 // pred_fallthru
        _
    $region12: #{generic_backbone_forward.1} parent=5 // pred_fallthru
      _
    %p177 = scmp.lt.s32.totalorder %s10, 2
    // Predicated region
    $region21: #{generic_backbone_forward.1} parent=5 // pred_check
      %p178 = pneg %p177
    $region22: #{generic_backbone_forward.1} parent=5 // pred_check_branch
      %180 = sbr.rel (%p178) target = $region24
    $region23: #{generic_backbone_forward.1} parent=5 // pred_region
      // Predicated region
      $region25: #{generic_backbone_forward.1} parent=23 // pred_check
        %p181 = pneg %p89
      $region26: #{generic_backbone_forward.1} parent=23 // pred_check_branch
        %183 = sbr.rel (%p181) target = $region28
      $region27: #{generic_backbone_forward.1} parent=23 // pred_region
        %s184 = smul.u32 128, %s18
        %p185 = scmp.lt.s32.totalorder %s184, 255
        %s186 = scalar_select %p185, %s184, 255
        %s187 = smul.addr %s186, 4
        %s188 = scalar_lea.vmem %s2, %s187
        %s189 = smul.u32 128, %s18
      $region28: #{generic_backbone_forward.1} parent=23 // pred_fallthru
        _
      // Predicated region
      $region29: #{generic_backbone_forward.1} parent=23 // pred_check
        %p190 = pneg %p115
      $region30: #{generic_backbone_forward.1} parent=23 // pred_check_branch
        %192 = sbr.rel (%p190) target = $region32
      $region31: #{generic_backbone_forward.1} parent=23 // pred_region
        %p193 = scmp.lt.s32.totalorder %s18, 1
        %s194 = scalar_select %p193, %s18, 1
        %s195 = smul.addr %s194, 4
        %s196 = scalar_lea.vmem %s3, %s195
      $region32: #{generic_backbone_forward.1} parent=23 // pred_fallthru
        _
    $region24: #{generic_backbone_forward.1} parent=5 // pred_fallthru
      _
    %p197 = scmp.le.s32.totalorder 1, %s10
    %p198 = scmp.lt.s32.totalorder %s10, 3
    %p199 = pnand %p197, %p198
    %p200 = pneg %p199
    // Predicated region
    $region33: #{generic_backbone_forward.1} parent=5 // pred_check
      _
    $region34: #{generic_backbone_forward.1} parent=5 // pred_check_branch
      %202 = sbr.rel (%p199) target = $region36
    $region35: #{generic_backbone_forward.1} parent=5 // pred_region
      %s203 = ssub.s32 %s10, 1
      %s204 = smul.u32 2, %s19
      %p205 = scmp.lt.s32.totalorder %s204, 1
      %s206 = scalar_select %p205, %s204, 1
      %s207 = smul.addr %s206, 10
      %s208 = smul.addr %s207, 4
      %s209 = scalar_lea.vmem %s0, %s208
      %p210 = pneg %p48
      %p211 = pneg %p45
      %p212 = pneg %p69
      %p213 = pneg %p66
      %s214 = smul.u32 128, %s20
      %p215 = scmp.lt.s32.totalorder %s214, 255
      %s216 = scalar_select %p215, %s214, 255
      %s217 = smul.addr %s216, 4
      %s218 = scalar_lea.vmem %s2, %s217
      %p219 = pneg %p95
      %p220 = pneg %p92
      %p221 = scmp.lt.s32.totalorder %s20, 1
      %s222 = scalar_select %p221, %s20, 1
      %s223 = smul.addr %s222, 4
      %s224 = scalar_lea.vmem %s3, %s223
      %p225 = pneg %p121
      %p226 = pneg %p118
      %p227 = pneg %p149
      %p228 = pneg %p146
      %p229 = scmp.lt.s32.totalorder %s20, 1
      %s230 = scalar_select %p229, %s20, 1
      %p231 = scmp.lt.s32.totalorder %s19, 0
      %s232 = scalar_select %p231, %s19, 0
      %s233 = sadd.s32 %s232, %s230
      %s234 = smul.addr %s233, 2
      %s235 = scalar_lea.vmem %s4, %s234
      %s236 = smul.u32 2, %s19
      %p237 = scmp.lt.s32.totalorder %s236, 1
      %s238 = scalar_select %p237, %s236, 1
      %s239 = smul.addr %s238, 10
      %s240 = smul.addr %s239, 4
      %s241 = scalar_lea.vmem %s0, %s240
      %s242 = smul.u32 2, %s19
      %s243 = smul.u32 128, %s20
      %p244 = scmp.lt.s32.totalorder %s243, 255
      %s245 = scalar_select %p244, %s243, 255
      %s246 = smul.addr %s245, 4
      %s247 = scalar_lea.vmem %s2, %s246
      %s248 = smul.u32 128, %s20
      %p249 = scmp.lt.s32.totalorder %s20, 1
      %s250 = scalar_select %p249, %s20, 1
      %s251 = smul.addr %s250, 4
      %s252 = scalar_lea.vmem %s3, %s251
      %p253 = scmp.lt.s32.totalorder %s20, 1
      %s254 = scalar_select %p253, %s20, 1
      %p255 = scmp.lt.s32.totalorder %s19, 0
      %s256 = scalar_select %p255, %s19, 0
      %s257 = sadd.s32 %s256, %s254
      %s258 = smul.addr %s257, 2
      %s259 = scalar_lea.vmem %s4, %s258
      %v261 = vld [vmem:[%s241] sm:$0xf]
      %v262 = vld [vmem:[%s241 + $0x4] sm:$0xf]
      %v263 = vld [vmem:[%s241 + $0x8] sm:$0xf]
      %v264 = vld [vmem:[%s241 + $0xc] sm:$0xf]
      %v265 = vld [vmem:[%s241 + $0x10] sm:$0xf]
      %v266 = vld [vmem:[%s241 + $0x14] sm:$0xf]
      %v267 = vld [vmem:[%s241 + $0x18] sm:$0xf]
      %v268 = vld [vmem:[%s241 + $0x1c] sm:$0xf]
      %v269 = vld [vmem:[%s241 + $0x20] sm:$0xf]
      %v270 = vld [vmem:[%s241 + $0x24] sm:$0xf]
      %v271 = vld [vmem:[%s241 + $0x28] sm:$0xf]
      %v272 = vld [vmem:[%s241 + $0x2c] sm:$0xf]
      %v273 = vld [vmem:[%s241 + $0x30] sm:$0xf]
      %v274 = vld [vmem:[%s241 + $0x34] sm:$0xf]
      %v275 = vld [vmem:[%s241 + $0x38] sm:$0xf]
      %v276 = vld [vmem:[%s241 + $0x3c] sm:$0xf]
      %v277 = vld [vmem:[%s241 + $0x40] sm:$0xf]
      %v278 = vld [vmem:[%s241 + $0x44] sm:$0xf]
      %v279 = vld [vmem:[%s241 + $0x48] sm:$0xf]
      %v280 = vld [vmem:[%s241 + $0x4c] sm:$0xf]
      %v281 = vld [vmem:[%s1] sm:$0xff]
      %v282 = vld [vmem:[%s1 + $0x8] sm:$0xff]
      %v303 = vunpack.c.l.b16 %v261
      %v304 = vunpack.c.l.b16 %v262
      %v305 = vunpack.c.l.b16 %v263
      %v306 = vunpack.c.l.b16 %v264
      %v307 = vunpack.c.l.b16 %v265
      %v308 = vunpack.c.l.b16 %v266
      %v309 = vunpack.c.l.b16 %v267
      %v310 = vunpack.c.l.b16 %v268
      %v311 = vunpack.c.l.b16 %v269
      %v312 = vunpack.c.l.b16 %v270
      %v313 = vunpack.c.l.b16 %v271
      %v314 = vunpack.c.l.b16 %v272
      %v315 = vunpack.c.l.b16 %v273
      %v316 = vunpack.c.l.b16 %v274
      %v317 = vunpack.c.l.b16 %v275
      %v318 = vunpack.c.l.b16 %v276
      %v319 = vunpack.c.l.b16 %v277
      %v320 = vunpack.c.l.b16 %v278
      %v321 = vunpack.c.l.b16 %v279
      %v322 = vunpack.c.l.b16 %v280
      %v323 = vpack.c.b16 %v304, %v303
      %v324 = vpack.c.b16 %v306, %v305
      %v325 = vpack.c.b16 %v308, %v307
      %v326 = vpack.c.b16 %v310, %v309
      %v327 = vpack.c.b16 %v312, %v311
      %v328 = vpack.c.b16 %v314, %v313
      %v329 = vpack.c.b16 %v316, %v315
      %v330 = vpack.c.b16 %v318, %v317
      %v331 = vpack.c.b16 %v320, %v319
      %v332 = vpack.c.b16 %v322, %v321
      %v335 = vunpack.c.l.b16 %v281
      %v336 = vunpack.c.h.b16 %v281
      %v337 = vunpack.c.l.b16 %v282
      %v338 = vunpack.c.h.b16 %v282
      %v339 = vpack.c.b16 %v337, %v335
      %v340 = vpack.c.b16 %v338, %v336
      %vm343 = vcmask 130048
      %v345 = vsel %vm343, %v323, 0
      %v348 = vsel %vm343, %v324, 0
      %v351 = vsel %vm343, %v325, 0
      %v354 = vsel %vm343, %v326, 0
      %v357 = vsel %vm343, %v327, 0
      %v360 = vsel %vm343, %v328, 0
      %v363 = vsel %vm343, %v329, 0
      %v366 = vsel %vm343, %v330, 0
      %v369 = vsel %vm343, %v331, 0
      %v372 = vsel %vm343, %v332, 0
      %374 = vmatprep.subr.bf16.mxu0 %v340
      %375 = vmatpush1.bf16.msra.mxu0 %v339
      %376 = vmatprep.subr.bf16.mxu0 0
      %377 = vmatpush1.bf16.msra.mxu0 0
      %378 = vmatprep.subr.bf16.mxu0 0
      %379 = vmatpush1.bf16.msra.mxu0 0
      %380 = vmatprep.subr.bf16.mxu0 0
      %381 = vmatpush1.bf16.msra.mxu0 0
      %382 = vmatprep.subr.bf16.mxu0 0
      %383 = vmatpush1.bf16.msra.mxu0 0
      %384 = vmatprep.subr.bf16.mxu0 0
      %385 = vmatpush1.bf16.msra.mxu0 0
      %386 = vmatprep.subr.bf16.mxu0 0
      %387 = vmatpush1.bf16.msra.mxu0 0
      %388 = vmatprep.subr.bf16.mxu0 0
      %389 = vmatpush1.bf16.msra.mxu0 0
      %390 = vmatprep.subr.bf16.mxu0 0
      %391 = vmatpush1.bf16.msra.mxu0 0
      %392 = vmatprep.subr.bf16.mxu0 0
      %393 = vmatpush1.bf16.msra.mxu0 0
      %394 = vmatprep.subr.bf16.mxu0 0
      %395 = vmatpush1.bf16.msra.mxu0 0
      %396 = vmatprep.subr.bf16.mxu0 0
      %397 = vmatpush1.bf16.msra.mxu0 0
      %398 = vmatprep.subr.bf16.mxu0 0
      %399 = vmatpush1.bf16.msra.mxu0 0
      %400 = vmatprep.subr.bf16.mxu0 0
      %401 = vmatpush1.bf16.msra.mxu0 0
      %402 = vmatprep.subr.bf16.mxu0 0
      %403 = vmatpush1.bf16.msra.mxu0 0
      %404 = vmatprep.subr.bf16.mxu0 0
      %405 = vmatpush1.bf16.msra.mxu0 0
      %406 = vmatprep.mubr.bf16.mxu0 0
      %407 = vmatmul.mubr.bf16.gmra.mrb[0].mxu0 %v345
      %v408 = vpop.f32.mrb[0].mxu0
      %v409 = vadd.f32 0.0, %v408
      %v410 = vpop.f32.mrb[0].mxu0
      %v411 = vadd.f32 0.0, %v410
      %v412 = vpop.f32.mrb[0].mxu0
      %v413 = vadd.f32 0.0, %v412
      %v414 = vpop.f32.mrb[0].mxu0
      %v415 = vadd.f32 0.0, %v414
      %416 = vmatprep.mubr.bf16.mxu0 0
      %417 = vmatmul.mubr.bf16.gmra.mrb[0].mxu0 %v348
      %v418 = vpop.f32.mrb[0].mxu0
      %v419 = vadd.f32 0.0, %v418
      %v420 = vpop.f32.mrb[0].mxu0
      %v421 = vadd.f32 0.0, %v420
      %v422 = vpop.f32.mrb[0].mxu0
      %v423 = vadd.f32 0.0, %v422
      %v424 = vpop.f32.mrb[0].mxu0
      %v425 = vadd.f32 0.0, %v424
      %426 = vmatprep.mubr.bf16.mxu0 0
      %427 = vmatmul.mubr.bf16.gmra.mrb[0].mxu0 %v351
      %v428 = vpop.f32.mrb[0].mxu0
      %v429 = vadd.f32 0.0, %v428
      %v430 = vpop.f32.mrb[0].mxu0
      %v431 = vadd.f32 0.0, %v430
      %v432 = vpop.f32.mrb[0].mxu0
      %v433 = vadd.f32 0.0, %v432
      %v434 = vpop.f32.mrb[0].mxu0
      %v435 = vadd.f32 0.0, %v434
      %436 = vmatprep.mubr.bf16.mxu0 0
      %437 = vmatmul.mubr.bf16.gmra.mrb[0].mxu0 %v354
      %v438 = vpop.f32.mrb[0].mxu0
      %v439 = vadd.f32 0.0, %v438
      %v440 = vpop.f32.mrb[0].mxu0
      %v441 = vadd.f32 0.0, %v440
      %v442 = vpop.f32.mrb[0].mxu0
      %v443 = vadd.f32 0.0, %v442
      %v444 = vpop.f32.mrb[0].mxu0
      %v445 = vadd.f32 0.0, %v444
      %446 = vmatprep.mubr.bf16.mxu0 0
      %447 = vmatmul.mubr.bf16.gmra.mrb[0].mxu0 %v357
      %v448 = vpop.f32.mrb[0].mxu0
      %v449 = vadd.f32 0.0, %v448
      %v450 = vpop.f32.mrb[0].mxu0
      %v451 = vadd.f32 0.0, %v450
      %v452 = vpop.f32.mrb[0].mxu0
      %v453 = vadd.f32 0.0, %v452
      %v454 = vpop.f32.mrb[0].mxu0
      %v455 = vadd.f32 0.0, %v454
      %456 = vmatprep.mubr.bf16.mxu0 0
      %457 = vmatmul.mubr.bf16.gmra.mrb[0].mxu0 %v360
      %v458 = vpop.f32.mrb[0].mxu0
      %v459 = vadd.f32 0.0, %v458
      %v460 = vpop.f32.mrb[0].mxu0
      %v461 = vadd.f32 0.0, %v460
      %v462 = vpop.f32.mrb[0].mxu0
      %v463 = vadd.f32 0.0, %v462
      %v464 = vpop.f32.mrb[0].mxu0
      %v465 = vadd.f32 0.0, %v464
      %466 = vmatprep.mubr.bf16.mxu0 0
      %467 = vmatmul.mubr.bf16.gmra.mrb[0].mxu0 %v363
      %v468 = vpop.f32.mrb[0].mxu0
      %v469 = vadd.f32 0.0, %v468
      %v470 = vpop.f32.mrb[0].mxu0
      %v471 = vadd.f32 0.0, %v470
      %v472 = vpop.f32.mrb[0].mxu0
      %v473 = vadd.f32 0.0, %v472
      %v474 = vpop.f32.mrb[0].mxu0
      %v475 = vadd.f32 0.0, %v474
      %476 = vmatprep.mubr.bf16.mxu0 0
      %477 = vmatmul.mubr.bf16.gmra.mrb[0].mxu0 %v366
      %v478 = vpop.f32.mrb[0].mxu0
      %v479 = vadd.f32 0.0, %v478
      %v480 = vpop.f32.mrb[0].mxu0
      %v481 = vadd.f32 0.0, %v480
      %v482 = vpop.f32.mrb[0].mxu0
      %v483 = vadd.f32 0.0, %v482
      %v484 = vpop.f32.mrb[0].mxu0
      %v485 = vadd.f32 0.0, %v484
      %486 = vmatprep.mubr.bf16.mxu0 0
      %487 = vmatmul.mubr.bf16.gmra.mrb[0].mxu0 %v369
      %v488 = vpop.f32.mrb[0].mxu0
      %v489 = vadd.f32 0.0, %v488
      %v490 = vpop.f32.mrb[0].mxu0
      %v491 = vadd.f32 0.0, %v490
      %v492 = vpop.f32.mrb[0].mxu0
      %v493 = vadd.f32 0.0, %v492
      %v494 = vpop.f32.mrb[0].mxu0
      %v495 = vadd.f32 0.0, %v494
      %496 = vmatprep.mubr.bf16.mxu0 0
      %497 = vmatmul.mubr.bf16.gmra.mrb[0].mxu0 %v372
      %v498 = vpop.f32.mrb[0].mxu0
      %v499 = vadd.f32 0.0, %v498
      %v500 = vpop.f32.mrb[0].mxu0
      %v501 = vadd.f32 0.0, %v500
      %v502 = vpop.f32.mrb[0].mxu0
      %v503 = vadd.f32 0.0, %v502
      %v504 = vpop.f32.mrb[0].mxu0
      %v505 = vadd.f32 0.0, %v504
      %506 = vdwg.mxu0
      %v507 = vpack.c.bf16 %v413, %v409
      %v508 = vpack.c.bf16 %v415, %v411
      %v509 = vpack.c.bf16 %v423, %v419
      %v510 = vpack.c.bf16 %v425, %v421
      %v511 = vpack.c.bf16 %v433, %v429
      %v512 = vpack.c.bf16 %v435, %v431
      %v513 = vpack.c.bf16 %v443, %v439
      %v514 = vpack.c.bf16 %v445, %v441
      %v515 = vpack.c.bf16 %v453, %v449
      %v516 = vpack.c.bf16 %v455, %v451
      %v517 = vpack.c.bf16 %v463, %v459
      %v518 = vpack.c.bf16 %v465, %v461
      %v519 = vpack.c.bf16 %v473, %v469
      %v520 = vpack.c.bf16 %v475, %v471
      %v521 = vpack.c.bf16 %v483, %v479
      %v522 = vpack.c.bf16 %v485, %v481
      %v523 = vpack.c.bf16 %v493, %v489
      %v524 = vpack.c.bf16 %v495, %v491
      %v525 = vpack.c.bf16 %v503, %v499
      %v526 = vpack.c.bf16 %v505, %v501
      %v527 = vld [vmem:[%s247] sm:$0xf]
      %v528 = vld [vmem:[%s247 + $0x4] sm:$0xf]
      %v529 = vld [vmem:[%s247 + $0x8] sm:$0xf]
      %v530 = vld [vmem:[%s247 + $0xc] sm:$0xf]
      %v531 = vld [vmem:[%s247 + $0x10] sm:$0xf]
      %v532 = vld [vmem:[%s247 + $0x14] sm:$0xf]
      %v533 = vld [vmem:[%s247 + $0x18] sm:$0xf]
      %v534 = vld [vmem:[%s247 + $0x1c] sm:$0xf]
      %v535 = vld [vmem:[%s247 + $0x20] sm:$0xf]
      %v536 = vld [vmem:[%s247 + $0x24] sm:$0xf]
      %v537 = vld [vmem:[%s247 + $0x28] sm:$0xf]
      %v538 = vld [vmem:[%s247 + $0x2c] sm:$0xf]
      %v539 = vld [vmem:[%s247 + $0x30] sm:$0xf]
      %v540 = vld [vmem:[%s247 + $0x34] sm:$0xf]
      %v541 = vld [vmem:[%s247 + $0x38] sm:$0xf]
      %v542 = vld [vmem:[%s247 + $0x3c] sm:$0xf]
      %v543 = vld [vmem:[%s247 + $0x40] sm:$0xf]
      %v544 = vld [vmem:[%s247 + $0x44] sm:$0xf]
      %v545 = vld [vmem:[%s247 + $0x48] sm:$0xf]
      %v546 = vld [vmem:[%s247 + $0x4c] sm:$0xf]
      %v547 = vld [vmem:[%s247 + $0x50] sm:$0xf]
      %v548 = vld [vmem:[%s247 + $0x54] sm:$0xf]
      %v549 = vld [vmem:[%s247 + $0x58] sm:$0xf]
      %v550 = vld [vmem:[%s247 + $0x5c] sm:$0xf]
      %v551 = vld [vmem:[%s247 + $0x60] sm:$0xf]
      %v552 = vld [vmem:[%s247 + $0x64] sm:$0xf]
      %v553 = vld [vmem:[%s247 + $0x68] sm:$0xf]
      %v554 = vld [vmem:[%s247 + $0x6c] sm:$0xf]
      %v555 = vld [vmem:[%s247 + $0x70] sm:$0xf]
      %v556 = vld [vmem:[%s247 + $0x74] sm:$0xf]
      %v557 = vld [vmem:[%s247 + $0x78] sm:$0xf]
      %v558 = vld [vmem:[%s247 + $0x7c] sm:$0xf]
      %v559 = vld [vmem:[%s247 + $0x80] sm:$0xf]
      %v560 = vld [vmem:[%s247 + $0x84] sm:$0xf]
      %v561 = vld [vmem:[%s247 + $0x88] sm:$0xf]
      %v562 = vld [vmem:[%s247 + $0x8c] sm:$0xf]
      %v563 = vld [vmem:[%s247 + $0x90] sm:$0xf]
      %v564 = vld [vmem:[%s247 + $0x94] sm:$0xf]
      %v565 = vld [vmem:[%s247 + $0x98] sm:$0xf]
      %v566 = vld [vmem:[%s247 + $0x9c] sm:$0xf]
      %v567 = vld [vmem:[%s247 + $0xa0] sm:$0xf]
      %v568 = vld [vmem:[%s247 + $0xa4] sm:$0xf]
      %v569 = vld [vmem:[%s247 + $0xa8] sm:$0xf]
      %v570 = vld [vmem:[%s247 + $0xac] sm:$0xf]
      %v571 = vld [vmem:[%s247 + $0xb0] sm:$0xf]
      %v572 = vld [vmem:[%s247 + $0xb4] sm:$0xf]
      %v573 = vld [vmem:[%s247 + $0xb8] sm:$0xf]
      %v574 = vld [vmem:[%s247 + $0xbc] sm:$0xf]
      %v575 = vld [vmem:[%s247 + $0xc0] sm:$0xf]
      %v576 = vld [vmem:[%s247 + $0xc4] sm:$0xf]
      %v577 = vld [vmem:[%s247 + $0xc8] sm:$0xf]
      %v578 = vld [vmem:[%s247 + $0xcc] sm:$0xf]
      %v579 = vld [vmem:[%s247 + $0xd0] sm:$0xf]
      %v580 = vld [vmem:[%s247 + $0xd4] sm:$0xf]
      %v581 = vld [vmem:[%s247 + $0xd8] sm:$0xf]
      %v582 = vld [vmem:[%s247 + $0xdc] sm:$0xf]
      %v583 = vld [vmem:[%s247 + $0xe0] sm:$0xf]
      %v584 = vld [vmem:[%s247 + $0xe4] sm:$0xf]
      %v585 = vld [vmem:[%s247 + $0xe8] sm:$0xf]
      %v586 = vld [vmem:[%s247 + $0xec] sm:$0xf]
      %v587 = vld [vmem:[%s247 + $0xf0] sm:$0xf]
      %v588 = vld [vmem:[%s247 + $0xf4] sm:$0xf]
      %v589 = vld [vmem:[%s247 + $0xf8] sm:$0xf]
      %v590 = vld [vmem:[%s247 + $0xfc] sm:$0xf]
      %v591 = vld [vmem:[%s247 + $0x100] sm:$0xf]
      %v592 = vld [vmem:[%s247 + $0x104] sm:$0xf]
      %v593 = vld [vmem:[%s247 + $0x108] sm:$0xf]
      %v594 = vld [vmem:[%s247 + $0x10c] sm:$0xf]
      %v595 = vld [vmem:[%s247 + $0x110] sm:$0xf]
      %v596 = vld [vmem:[%s247 + $0x114] sm:$0xf]
      %v597 = vld [vmem:[%s247 + $0x118] sm:$0xf]
      %v598 = vld [vmem:[%s247 + $0x11c] sm:$0xf]
      %v599 = vld [vmem:[%s247 + $0x120] sm:$0xf]
      %v600 = vld [vmem:[%s247 + $0x124] sm:$0xf]
      %v601 = vld [vmem:[%s247 + $0x128] sm:$0xf]
      %v602 = vld [vmem:[%s247 + $0x12c] sm:$0xf]
      %v603 = vld [vmem:[%s247 + $0x130] sm:$0xf]
      %v604 = vld [vmem:[%s247 + $0x134] sm:$0xf]
      %v605 = vld [vmem:[%s247 + $0x138] sm:$0xf]
      %v606 = vld [vmem:[%s247 + $0x13c] sm:$0xf]
      %v607 = vld [vmem:[%s247 + $0x140] sm:$0xf]
      %v608 = vld [vmem:[%s247 + $0x144] sm:$0xf]
      %v609 = vld [vmem:[%s247 + $0x148] sm:$0xf]
      %v610 = vld [vmem:[%s247 + $0x14c] sm:$0xf]
      %v611 = vld [vmem:[%s247 + $0x150] sm:$0xf]
      %v612 = vld [vmem:[%s247 + $0x154] sm:$0xf]
      %v613 = vld [vmem:[%s247 + $0x158] sm:$0xf]
      %v614 = vld [vmem:[%s247 + $0x15c] sm:$0xf]
      %v615 = vld [vmem:[%s247 + $0x160] sm:$0xf]
      %v616 = vld [vmem:[%s247 + $0x164] sm:$0xf]
      %v617 = vld [vmem:[%s247 + $0x168] sm:$0xf]
      %v618 = vld [vmem:[%s247 + $0x16c] sm:$0xf]
      %v619 = vld [vmem:[%s247 + $0x170] sm:$0xf]
      %v620 = vld [vmem:[%s247 + $0x174] sm:$0xf]
      %v621 = vld [vmem:[%s247 + $0x178] sm:$0xf]
      %v622 = vld [vmem:[%s247 + $0x17c] sm:$0xf]
      %v623 = vld [vmem:[%s247 + $0x180] sm:$0xf]
      %v624 = vld [vmem:[%s247 + $0x184] sm:$0xf]
      %v625 = vld [vmem:[%s247 + $0x188] sm:$0xf]
      %v626 = vld [vmem:[%s247 + $0x18c] sm:$0xf]
      %v627 = vld [vmem:[%s247 + $0x190] sm:$0xf]
      %v628 = vld [vmem:[%s247 + $0x194] sm:$0xf]
      %v629 = vld [vmem:[%s247 + $0x198] sm:$0xf]
      %v630 = vld [vmem:[%s247 + $0x19c] sm:$0xf]
      %v631 = vld [vmem:[%s247 + $0x1a0] sm:$0xf]
      %v632 = vld [vmem:[%s247 + $0x1a4] sm:$0xf]
      %v633 = vld [vmem:[%s247 + $0x1a8] sm:$0xf]
      %v634 = vld [vmem:[%s247 + $0x1ac] sm:$0xf]
      %v635 = vld [vmem:[%s247 + $0x1b0] sm:$0xf]
      %v636 = vld [vmem:[%s247 + $0x1b4] sm:$0xf]
      %v637 = vld [vmem:[%s247 + $0x1b8] sm:$0xf]
      %v638 = vld [vmem:[%s247 + $0x1bc] sm:$0xf]
      %v639 = vld [vmem:[%s247 + $0x1c0] sm:$0xf]
      %v640 = vld [vmem:[%s247 + $0x1c4] sm:$0xf]
      %v641 = vld [vmem:[%s247 + $0x1c8] sm:$0xf]
      %v642 = vld [vmem:[%s247 + $0x1cc] sm:$0xf]
      %v643 = vld [vmem:[%s247 + $0x1d0] sm:$0xf]
      %v644 = vld [vmem:[%s247 + $0x1d4] sm:$0xf]
      %v645 = vld [vmem:[%s247 + $0x1d8] sm:$0xf]
      %v646 = vld [vmem:[%s247 + $0x1dc] sm:$0xf]
      %v647 = vld [vmem:[%s247 + $0x1e0] sm:$0xf]
      %v648 = vld [vmem:[%s247 + $0x1e4] sm:$0xf]
      %v649 = vld [vmem:[%s247 + $0x1e8] sm:$0xf]
      %v650 = vld [vmem:[%s247 + $0x1ec] sm:$0xf]
      %v651 = vld [vmem:[%s247 + $0x1f0] sm:$0xf]
      %v652 = vld [vmem:[%s247 + $0x1f4] sm:$0xf]
      %v653 = vld [vmem:[%s247 + $0x1f8] sm:$0xf]
      %v654 = vld [vmem:[%s247 + $0x1fc] sm:$0xf]
      %v655 = vld [vmem:[%s252] sm:$0xf]
      %v784 = vunpack.c.l.b16 %v527
      %v785 = vunpack.c.l.b16 %v528
      %v786 = vunpack.c.l.b16 %v529
      %v787 = vunpack.c.l.b16 %v530
      %v788 = vunpack.c.l.b16 %v531
      %v789 = vunpack.c.l.b16 %v532
      %v790 = vunpack.c.l.b16 %v533
      %v791 = vunpack.c.l.b16 %v534
      %v792 = vunpack.c.l.b16 %v535
      %v793 = vunpack.c.l.b16 %v536
      %v794 = vunpack.c.l.b16 %v537
      %v795 = vunpack.c.l.b16 %v538
      %v796 = vunpack.c.l.b16 %v539
      %v797 = vunpack.c.l.b16 %v540
      %v798 = vunpack.c.l.b16 %v541
      %v799 = vunpack.c.l.b16 %v542
      %v800 = vunpack.c.l.b16 %v543
      %v801 = vunpack.c.l.b16 %v544
      %v802 = vunpack.c.l.b16 %v545
      %v803 = vunpack.c.l.b16 %v546
      %v804 = vunpack.c.l.b16 %v547
      %v805 = vunpack.c.l.b16 %v548
      %v806 = vunpack.c.l.b16 %v549
      %v807 = vunpack.c.l.b16 %v550
      %v808 = vunpack.c.l.b16 %v551
      %v809 = vunpack.c.l.b16 %v552
      %v810 = vunpack.c.l.b16 %v553
      %v811 = vunpack.c.l.b16 %v554
      %v812 = vunpack.c.l.b16 %v555
      %v813 = vunpack.c.l.b16 %v556
      %v814 = vunpack.c.l.b16 %v557
      %v815 = vunpack.c.l.b16 %v558
      %v816 = vunpack.c.l.b16 %v559
      %v817 = vunpack.c.l.b16 %v560
      %v818 = vunpack.c.l.b16 %v561
      %v819 = vunpack.c.l.b16 %v562
      %v820 = vunpack.c.l.b16 %v563
      %v821 = vunpack.c.l.b16 %v564
      %v822 = vunpack.c.l.b16 %v565
      %v823 = vunpack.c.l.b16 %v566
      %v824 = vunpack.c.l.b16 %v567
      %v825 = vunpack.c.l.b16 %v568
      %v826 = vunpack.c.l.b16 %v569
      %v827 = vunpack.c.l.b16 %v570
      %v828 = vunpack.c.l.b16 %v571
      %v829 = vunpack.c.l.b16 %v572
      %v830 = vunpack.c.l.b16 %v573
      %v831 = vunpack.c.l.b16 %v574
      %v832 = vunpack.c.l.b16 %v575
      %v833 = vunpack.c.l.b16 %v576
      %v834 = vunpack.c.l.b16 %v577
      %v835 = vunpack.c.l.b16 %v578
      %v836 = vunpack.c.l.b16 %v579
      %v837 = vunpack.c.l.b16 %v580
      %v838 = vunpack.c.l.b16 %v581
      %v839 = vunpack.c.l.b16 %v582
      %v840 = vunpack.c.l.b16 %v583
      %v841 = vunpack.c.l.b16 %v584
      %v842 = vunpack.c.l.b16 %v585
      %v843 = vunpack.c.l.b16 %v586
      %v844 = vunpack.c.l.b16 %v587
      %v845 = vunpack.c.l.b16 %v588
      %v846 = vunpack.c.l.b16 %v589
      %v847 = vunpack.c.l.b16 %v590
      %v848 = vunpack.c.l.b16 %v591
      %v849 = vunpack.c.l.b16 %v592
      %v850 = vunpack.c.l.b16 %v593
      %v851 = vunpack.c.l.b16 %v594
      %v852 = vunpack.c.l.b16 %v595
      %v853 = vunpack.c.l.b16 %v596
      %v854 = vunpack.c.l.b16 %v597
      %v855 = vunpack.c.l.b16 %v598
      %v856 = vunpack.c.l.b16 %v599
      %v857 = vunpack.c.l.b16 %v600
      %v858 = vunpack.c.l.b16 %v601
      %v859 = vunpack.c.l.b16 %v602
      %v860 = vunpack.c.l.b16 %v603
      %v861 = vunpack.c.l.b16 %v604
      %v862 = vunpack.c.l.b16 %v605
      %v863 = vunpack.c.l.b16 %v606
      %v864 = vunpack.c.l.b16 %v607
      %v865 = vunpack.c.l.b16 %v608
      %v866 = vunpack.c.l.b16 %v609
      %v867 = vunpack.c.l.b16 %v610
      %v868 = vunpack.c.l.b16 %v611
      %v869 = vunpack.c.l.b16 %v612
      %v870 = vunpack.c.l.b16 %v613
      %v871 = vunpack.c.l.b16 %v614
      %v872 = vunpack.c.l.b16 %v615
      %v873 = vunpack.c.l.b16 %v616
      %v874 = vunpack.c.l.b16 %v617
      %v875 = vunpack.c.l.b16 %v618
      %v876 = vunpack.c.l.b16 %v619
      %v877 = vunpack.c.l.b16 %v620
      %v878 = vunpack.c.l.b16 %v621
      %v879 = vunpack.c.l.b16 %v622
      %v880 = vunpack.c.l.b16 %v623
      %v881 = vunpack.c.l.b16 %v624
      %v882 = vunpack.c.l.b16 %v625
      %v883 = vunpack.c.l.b16 %v626
      %v884 = vunpack.c.l.b16 %v627
      %v885 = vunpack.c.l.b16 %v628
      %v886 = vunpack.c.l.b16 %v629
      %v887 = vunpack.c.l.b16 %v630
      %v888 = vunpack.c.l.b16 %v631
      %v889 = vunpack.c.l.b16 %v632
      %v890 = vunpack.c.l.b16 %v633
      %v891 = vunpack.c.l.b16 %v634
      %v892 = vunpack.c.l.b16 %v635
      %v893 = vunpack.c.l.b16 %v636
      %v894 = vunpack.c.l.b16 %v637
      %v895 = vunpack.c.l.b16 %v638
      %v896 = vunpack.c.l.b16 %v639
      %v897 = vunpack.c.l.b16 %v640
      %v898 = vunpack.c.l.b16 %v641
      %v899 = vunpack.c.l.b16 %v642
      %v900 = vunpack.c.l.b16 %v643
      %v901 = vunpack.c.l.b16 %v644
      %v902 = vunpack.c.l.b16 %v645
      %v903 = vunpack.c.l.b16 %v646
      %v904 = vunpack.c.l.b16 %v647
      %v905 = vunpack.c.l.b16 %v648
      %v906 = vunpack.c.l.b16 %v649
      %v907 = vunpack.c.l.b16 %v650
      %v908 = vunpack.c.l.b16 %v651
      %v909 = vunpack.c.l.b16 %v652
      %v910 = vunpack.c.l.b16 %v653
      %v911 = vunpack.c.l.b16 %v654
      %v912 = vpack.c.b16 %v785, %v784
      %v913 = vpack.c.b16 %v787, %v786
      %v914 = vpack.c.b16 %v789, %v788
      %v915 = vpack.c.b16 %v791, %v790
      %v916 = vpack.c.b16 %v793, %v792
      %v917 = vpack.c.b16 %v795, %v794
      %v918 = vpack.c.b16 %v797, %v796
      %v919 = vpack.c.b16 %v799, %v798
      %v920 = vpack.c.b16 %v801, %v800
      %v921 = vpack.c.b16 %v803, %v802
      %v922 = vpack.c.b16 %v805, %v804
      %v923 = vpack.c.b16 %v807, %v806
      %v924 = vpack.c.b16 %v809, %v808
      %v925 = vpack.c.b16 %v811, %v810
      %v926 = vpack.c.b16 %v813, %v812
      %v927 = vpack.c.b16 %v815, %v814
      %v928 = vpack.c.b16 %v817, %v816
      %v929 = vpack.c.b16 %v819, %v818
      %v930 = vpack.c.b16 %v821, %v820
      %v931 = vpack.c.b16 %v823, %v822
      %v932 = vpack.c.b16 %v825, %v824
      %v933 = vpack.c.b16 %v827, %v826
      %v934 = vpack.c.b16 %v829, %v828
      %v935 = vpack.c.b16 %v831, %v830
      %v936 = vpack.c.b16 %v833, %v832
      %v937 = vpack.c.b16 %v835, %v834
      %v938 = vpack.c.b16 %v837, %v836
      %v939 = vpack.c.b16 %v839, %v838
      %v940 = vpack.c.b16 %v841, %v840
      %v941 = vpack.c.b16 %v843, %v842
      %v942 = vpack.c.b16 %v845, %v844
      %v943 = vpack.c.b16 %v847, %v846
      %v944 = vpack.c.b16 %v849, %v848
      %v945 = vpack.c.b16 %v851, %v850
      %v946 = vpack.c.b16 %v853, %v852
      %v947 = vpack.c.b16 %v855, %v854
      %v948 = vpack.c.b16 %v857, %v856
      %v949 = vpack.c.b16 %v859, %v858
      %v950 = vpack.c.b16 %v861, %v860
      %v951 = vpack.c.b16 %v863, %v862
      %v952 = vpack.c.b16 %v865, %v864
      %v953 = vpack.c.b16 %v867, %v866
      %v954 = vpack.c.b16 %v869, %v868
      %v955 = vpack.c.b16 %v871, %v870
      %v956 = vpack.c.b16 %v873, %v872
      %v957 = vpack.c.b16 %v875, %v874
      %v958 = vpack.c.b16 %v877, %v876
      %v959 = vpack.c.b16 %v879, %v878
      %v960 = vpack.c.b16 %v881, %v880
      %v961 = vpack.c.b16 %v883, %v882
      %v962 = vpack.c.b16 %v885, %v884
      %v963 = vpack.c.b16 %v887, %v886
      %v964 = vpack.c.b16 %v889, %v888
      %v965 = vpack.c.b16 %v891, %v890
      %v966 = vpack.c.b16 %v893, %v892
      %v967 = vpack.c.b16 %v895, %v894
      %v968 = vpack.c.b16 %v897, %v896
      %v969 = vpack.c.b16 %v899, %v898
      %v970 = vpack.c.b16 %v901, %v900
      %v971 = vpack.c.b16 %v903, %v902
      %v972 = vpack.c.b16 %v905, %v904
      %v973 = vpack.c.b16 %v907, %v906
      %v974 = vpack.c.b16 %v909, %v908
      %v975 = vpack.c.b16 %v911, %v910
      %vm976 = vcmask 654336
      %v978 = vsel %vm976, %v912, 0
      %v981 = vsel %vm976, %v913, 0
      %v984 = vsel %vm976, %v914, 0
      %v987 = vsel %vm976, %v915, 0
      %v990 = vsel %vm976, %v916, 0
      %v993 = vsel %vm976, %v917, 0
      %v996 = vsel %vm976, %v918, 0
      %v999 = vsel %vm976, %v919, 0
      %v1002 = vsel %vm976, %v920, 0
      %v1005 = vsel %vm976, %v921, 0
      %v1008 = vsel %vm976, %v922, 0
      %v1011 = vsel %vm976, %v923, 0
      %v1014 = vsel %vm976, %v924, 0
      %v1017 = vsel %vm976, %v925, 0
      %v1020 = vsel %vm976, %v926, 0
      %v1023 = vsel %vm976, %v927, 0
      %v1026 = vsel %vm976, %v928, 0
      %v1029 = vsel %vm976, %v929, 0
      %v1032 = vsel %vm976, %v930, 0
      %v1035 = vsel %vm976, %v931, 0
      %v1038 = vsel %vm976, %v932, 0
      %v1041 = vsel %vm976, %v933, 0
      %v1044 = vsel %vm976, %v934, 0
      %v1047 = vsel %vm976, %v935, 0
      %v1050 = vsel %vm976, %v936, 0
      %v1053 = vsel %vm976, %v937, 0
      %v1056 = vsel %vm976, %v938, 0
      %v1059 = vsel %vm976, %v939, 0
      %v1062 = vsel %vm976, %v940, 0
      %v1065 = vsel %vm976, %v941, 0
      %v1068 = vsel %vm976, %v942, 0
      %v1071 = vsel %vm976, %v943, 0
      %v1074 = vsel %vm976, %v944, 0
      %v1077 = vsel %vm976, %v945, 0
      %v1080 = vsel %vm976, %v946, 0
      %v1083 = vsel %vm976, %v947, 0
      %v1086 = vsel %vm976, %v948, 0
      %v1089 = vsel %vm976, %v949, 0
      %v1092 = vsel %vm976, %v950, 0
      %v1095 = vsel %vm976, %v951, 0
      %v1098 = vsel %vm976, %v952, 0
      %v1101 = vsel %vm976, %v953, 0
      %v1104 = vsel %vm976, %v954, 0
      %v1107 = vsel %vm976, %v955, 0
      %v1110 = vsel %vm976, %v956, 0
      %v1113 = vsel %vm976, %v957, 0
      %v1116 = vsel %vm976, %v958, 0
      %v1119 = vsel %vm976, %v959, 0
      %v1122 = vsel %vm976, %v960, 0
      %v1125 = vsel %vm976, %v961, 0
      %v1128 = vsel %vm976, %v962, 0
      %v1131 = vsel %vm976, %v963, 0
      %v1134 = vsel %vm976, %v964, 0
      %v1137 = vsel %vm976, %v965, 0
      %v1140 = vsel %vm976, %v966, 0
      %v1143 = vsel %vm976, %v967, 0
      %v1146 = vsel %vm976, %v968, 0
      %v1149 = vsel %vm976, %v969, 0
      %v1152 = vsel %vm976, %v970, 0
      %v1155 = vsel %vm976, %v971, 0
      %v1158 = vsel %vm976, %v972, 0
      %v1161 = vsel %vm976, %v973, 0
      %v1164 = vsel %vm976, %v974, 0
      %v1167 = vsel %vm976, %v975, 0
      %1169 = vmatprep.subr.bf16.mxu0 %v508
      %1170 = vmatpush1.bf16.msra.mxu0 %v507
      %1171 = vmatprep.subr.bf16.mxu0 %v510
      %1172 = vmatpush1.bf16.msra.mxu0 %v509
      %1173 = vmatprep.subr.bf16.mxu0 %v512
      %1174 = vmatpush1.bf16.msra.mxu0 %v511
      %1175 = vmatprep.subr.bf16.mxu0 %v514
      %1176 = vmatpush1.bf16.msra.mxu0 %v513
      %1177 = vmatprep.subr.bf16.mxu0 %v516
      %1178 = vmatpush1.bf16.msra.mxu0 %v515
      %1179 = vmatprep.subr.bf16.mxu0 0
      %1180 = vmatpush1.bf16.msra.mxu0 0
      %1181 = vmatprep.subr.bf16.mxu0 0
      %1182 = vmatpush1.bf16.msra.mxu0 0
      %1183 = vmatprep.subr.bf16.mxu0 0
      %1184 = vmatpush1.bf16.msra.mxu0 0
      %1185 = vmatprep.subr.bf16.mxu0 0
      %1186 = vmatpush1.bf16.msra.mxu0 0
      %1187 = vmatprep.subr.bf16.mxu0 0
      %1188 = vmatpush1.bf16.msra.mxu0 0
      %1189 = vmatprep.subr.bf16.mxu0 0
      %1190 = vmatpush1.bf16.msra.mxu0 0
      %1191 = vmatprep.subr.bf16.mxu0 0
      %1192 = vmatpush1.bf16.msra.mxu0 0
      %1193 = vmatprep.subr.bf16.mxu0 0
      %1194 = vmatpush1.bf16.msra.mxu0 0
      %1195 = vmatprep.subr.bf16.mxu0 0
      %1196 = vmatpush1.bf16.msra.mxu0 0
      %1197 = vmatprep.subr.bf16.mxu0 0
      %1198 = vmatpush1.bf16.msra.mxu0 0
      %1199 = vmatprep.subr.bf16.mxu0 0
      %1200 = vmatpush1.bf16.msra.mxu0 0
      %1201 = vmatprep.mubr.bf16.mxu0 0
      %1202 = vmatmul.mubr.bf16.gmra.mrb[0].mxu0 %v978
      %v1203 = vpop.f32.mrb[0].mxu0
      %v1204 = vadd.f32 0.0, %v1203
      %v1205 = vpop.f32.mrb[0].mxu0
      %v1206 = vadd.f32 0.0, %v1205
      %v1207 = vpop.f32.mrb[0].mxu0
      %v1208 = vadd.f32 0.0, %v1207
      %v1209 = vpop.f32.mrb[0].mxu0
      %v1210 = vadd.f32 0.0, %v1209
      %1211 = vmatprep.mubr.bf16.mxu0 0
      %1212 = vmatmul.mubr.bf16.gmra.mrb[0].mxu0 %v981
      %v1213 = vpop.f32.mrb[0].mxu0
      %v1214 = vadd.f32 0.0, %v1213
      %v1215 = vpop.f32.mrb[0].mxu0
      %v1216 = vadd.f32 0.0, %v1215
      %v1217 = vpop.f32.mrb[0].mxu0
      %v1218 = vadd.f32 0.0, %v1217
      %v1219 = vpop.f32.mrb[0].mxu0
      %v1220 = vadd.f32 0.0, %v1219
      %1221 = vmatprep.mubr.bf16.mxu0 0
      %1222 = vmatmul.mubr.bf16.gmra.mrb[0].mxu0 %v984
      %v1223 = vpop.f32.mrb[0].mxu0
      %v1224 = vadd.f32 0.0, %v1223
      %v1225 = vpop.f32.mrb[0].mxu0
      %v1226 = vadd.f32 0.0, %v1225
      %v1227 = vpop.f32.mrb[0].mxu0
      %v1228 = vadd.f32 0.0, %v1227
      %v1229 = vpop.f32.mrb[0].mxu0
      %v1230 = vadd.f32 0.0, %v1229
      %1231 = vmatprep.mubr.bf16.mxu0 0
      %1232 = vmatmul.mubr.bf16.gmra.mrb[0].mxu0 %v987
      %v1233 = vpop.f32.mrb[0].mxu0
      %v1234 = vadd.f32 0.0, %v1233
      %v1235 = vpop.f32.mrb[0].mxu0
      %v1236 = vadd.f32 0.0, %v1235
      %v1237 = vpop.f32.mrb[0].mxu0
      %v1238 = vadd.f32 0.0, %v1237
      %v1239 = vpop.f32.mrb[0].mxu0
      %v1240 = vadd.f32 0.0, %v1239
      %1241 = vmatprep.mubr.bf16.mxu0 0
      %1242 = vmatmul.mubr.bf16.gmra.mrb[0].mxu0 %v990
      %v1243 = vpop.f32.mrb[0].mxu0
      %v1244 = vadd.f32 0.0, %v1243
      %v1245 = vpop.f32.mrb[0].mxu0
      %v1246 = vadd.f32 0.0, %v1245
      %v1247 = vpop.f32.mrb[0].mxu0
      %v1248 = vadd.f32 0.0, %v1247
      %v1249 = vpop.f32.mrb[0].mxu0
      %v1250 = vadd.f32 0.0, %v1249
      %1251 = vmatprep.mubr.bf16.mxu0 0
      %1252 = vmatmul.mubr.bf16.gmra.mrb[0].mxu0 %v993
      %v1253 = vpop.f32.mrb[0].mxu0
      %v1254 = vadd.f32 0.0, %v1253
      %v1255 = vpop.f32.mrb[0].mxu0
      %v1256 = vadd.f32 0.0, %v1255
      %v1257 = vpop.f32.mrb[0].mxu0
      %v1258 = vadd.f32 0.0, %v1257
      %v1259 = vpop.f32.mrb[0].mxu0
      %v1260 = vadd.f32 0.0, %v1259
      %1261 = vmatprep.mubr.bf16.mxu0 0
      %1262 = vmatmul.mubr.bf16.gmra.mrb[0].mxu0 %v996
      %v1263 = vpop.f32.mrb[0].mxu0
      %v1264 = vadd.f32 0.0, %v1263
      %v1265 = vpop.f32.mrb[0].mxu0
      %v1266 = vadd.f32 0.0, %v1265
      %v1267 = vpop.f32.mrb[0].mxu0
      %v1268 = vadd.f32 0.0, %v1267
      %v1269 = vpop.f32.mrb[0].mxu0
      %v1270 = vadd.f32 0.0, %v1269
      %1271 = vmatprep.mubr.bf16.mxu0 0
      %1272 = vmatmul.mubr.bf16.gmra.mrb[0].mxu0 %v999
      %v1273 = vpop.f32.mrb[0].mxu0
      %v1274 = vadd.f32 0.0, %v1273
      %v1275 = vpop.f32.mrb[0].mxu0
      %v1276 = vadd.f32 0.0, %v1275
      %v1277 = vpop.f32.mrb[0].mxu0
      %v1278 = vadd.f32 0.0, %v1277
      %v1279 = vpop.f32.mrb[0].mxu0
      %v1280 = vadd.f32 0.0, %v1279
      %1281 = vmatprep.mubr.bf16.mxu0 0
      %1282 = vmatmul.mubr.bf16.gmra.mrb[0].mxu0 %v1002
      %v1283 = vpop.f32.mrb[0].mxu0
      %v1284 = vadd.f32 0.0, %v1283
      %v1285 = vpop.f32.mrb[0].mxu0
      %v1286 = vadd.f32 0.0, %v1285
      %v1287 = vpop.f32.mrb[0].mxu0
      %v1288 = vadd.f32 0.0, %v1287
      %v1289 = vpop.f32.mrb[0].mxu0
      %v1290 = vadd.f32 0.0, %v1289
      %1291 = vmatprep.mubr.bf16.mxu0 0
      %1292 = vmatmul.mubr.bf16.gmra.mrb[0].mxu0 %v1005
      %v1293 = vpop.f32.mrb[0].mxu0
      %v1294 = vadd.f32 0.0, %v1293
      %v1295 = vpop.f32.mrb[0].mxu0
      %v1296 = vadd.f32 0.0, %v1295
      %v1297 = vpop.f32.mrb[0].mxu0
      %v1298 = vadd.f32 0.0, %v1297
      %v1299 = vpop.f32.mrb[0].mxu0
      %v1300 = vadd.f32 0.0, %v1299
      %1301 = vmatprep.mubr.bf16.mxu0 0
      %1302 = vmatmul.mubr.bf16.gmra.mrb[0].mxu0 %v1008
      %v1303 = vpop.f32.mrb[0].mxu0
      %v1304 = vadd.f32 0.0, %v1303
      %v1305 = vpop.f32.mrb[0].mxu0
      %v1306 = vadd.f32 0.0, %v1305
      %v1307 = vpop.f32.mrb[0].mxu0
      %v1308 = vadd.f32 0.0, %v1307
      %v1309 = vpop.f32.mrb[0].mxu0
      %v1310 = vadd.f32 0.0, %v1309
      %1311 = vmatprep.mubr.bf16.mxu0 0
      %1312 = vmatmul.mubr.bf16.gmra.mrb[0].mxu0 %v1011
      %v1313 = vpop.f32.mrb[0].mxu0
      %v1314 = vadd.f32 0.0, %v1313
      %v1315 = vpop.f32.mrb[0].mxu0
      %v1316 = vadd.f32 0.0, %v1315
      %v1317 = vpop.f32.mrb[0].mxu0
      %v1318 = vadd.f32 0.0, %v1317
      %v1319 = vpop.f32.mrb[0].mxu0
      %v1320 = vadd.f32 0.0, %v1319
      %1321 = vmatprep.mubr.bf16.mxu0 0
      %1322 = vmatmul.mubr.bf16.gmra.mrb[0].mxu0 %v1014
      %v1323 = vpop.f32.mrb[0].mxu0
      %v1324 = vadd.f32 0.0, %v1323
      %v1325 = vpop.f32.mrb[0].mxu0
      %v1326 = vadd.f32 0.0, %v1325
      %v1327 = vpop.f32.mrb[0].mxu0
      %v1328 = vadd.f32 0.0, %v1327
      %v1329 = vpop.f32.mrb[0].mxu0
      %v1330 = vadd.f32 0.0, %v1329
      %1331 = vmatprep.mubr.bf16.mxu0 0
      %1332 = vmatmul.mubr.bf16.gmra.mrb[0].mxu0 %v1017
      %v1333 = vpop.f32.mrb[0].mxu0
      %v1334 = vadd.f32 0.0, %v1333
      %v1335 = vpop.f32.mrb[0].mxu0
      %v1336 = vadd.f32 0.0, %v1335
      %v1337 = vpop.f32.mrb[0].mxu0
      %v1338 = vadd.f32 0.0, %v1337
      %v1339 = vpop.f32.mrb[0].mxu0
      %v1340 = vadd.f32 0.0, %v1339
      %1341 = vmatprep.mubr.bf16.mxu0 0
      %1342 = vmatmul.mubr.bf16.gmra.mrb[0].mxu0 %v1020
      %v1343 = vpop.f32.mrb[0].mxu0
      %v1344 = vadd.f32 0.0, %v1343
      %v1345 = vpop.f32.mrb[0].mxu0
      %v1346 = vadd.f32 0.0, %v1345
      %v1347 = vpop.f32.mrb[0].mxu0
      %v1348 = vadd.f32 0.0, %v1347
      %v1349 = vpop.f32.mrb[0].mxu0
      %v1350 = vadd.f32 0.0, %v1349
      %1351 = vmatprep.mubr.bf16.mxu0 0
      %1352 = vmatmul.mubr.bf16.gmra.mrb[0].mxu0 %v1023
      %v1353 = vpop.f32.mrb[0].mxu0
      %v1354 = vadd.f32 0.0, %v1353
      %v1355 = vpop.f32.mrb[0].mxu0
      %v1356 = vadd.f32 0.0, %v1355
      %v1357 = vpop.f32.mrb[0].mxu0
      %v1358 = vadd.f32 0.0, %v1357
      %v1359 = vpop.f32.mrb[0].mxu0
      %v1360 = vadd.f32 0.0, %v1359
      %1361 = vmatprep.mubr.bf16.mxu0 0
      %1362 = vmatmul.mubr.bf16.gmra.mrb[0].mxu0 %v1026
      %v1363 = vpop.f32.mrb[0].mxu0
      %v1364 = vadd.f32 0.0, %v1363
      %v1365 = vpop.f32.mrb[0].mxu0
      %v1366 = vadd.f32 0.0, %v1365
      %v1367 = vpop.f32.mrb[0].mxu0
      %v1368 = vadd.f32 0.0, %v1367
      %v1369 = vpop.f32.mrb[0].mxu0
      %v1370 = vadd.f32 0.0, %v1369
      %1371 = vmatprep.mubr.bf16.mxu0 0
      %1372 = vmatmul.mubr.bf16.gmra.mrb[0].mxu0 %v1029
      %v1373 = vpop.f32.mrb[0].mxu0
      %v1374 = vadd.f32 0.0, %v1373
      %v1375 = vpop.f32.mrb[0].mxu0
      %v1376 = vadd.f32 0.0, %v1375
      %v1377 = vpop.f32.mrb[0].mxu0
      %v1378 = vadd.f32 0.0, %v1377
      %v1379 = vpop.f32.mrb[0].mxu0
      %v1380 = vadd.f32 0.0, %v1379
      %1381 = vmatprep.mubr.bf16.mxu0 0
      %1382 = vmatmul.mubr.bf16.gmra.mrb[0].mxu0 %v1032
      %v1383 = vpop.f32.mrb[0].mxu0
      %v1384 = vadd.f32 0.0, %v1383
      %v1385 = vpop.f32.mrb[0].mxu0
      %v1386 = vadd.f32 0.0, %v1385
      %v1387 = vpop.f32.mrb[0].mxu0
      %v1388 = vadd.f32 0.0, %v1387
      %v1389 = vpop.f32.mrb[0].mxu0
      %v1390 = vadd.f32 0.0, %v1389
      %1391 = vmatprep.mubr.bf16.mxu0 0
      %1392 = vmatmul.mubr.bf16.gmra.mrb[0].mxu0 %v1035
      %v1393 = vpop.f32.mrb[0].mxu0
      %v1394 = vadd.f32 0.0, %v1393
      %v1395 = vpop.f32.mrb[0].mxu0
      %v1396 = vadd.f32 0.0, %v1395
      %v1397 = vpop.f32.mrb[0].mxu0
      %v1398 = vadd.f32 0.0, %v1397
      %v1399 = vpop.f32.mrb[0].mxu0
      %v1400 = vadd.f32 0.0, %v1399
      %1401 = vmatprep.mubr.bf16.mxu0 0
      %1402 = vmatmul.mubr.bf16.gmra.mrb[0].mxu0 %v1038
      %v1403 = vpop.f32.mrb[0].mxu0
      %v1404 = vadd.f32 0.0, %v1403
      %v1405 = vpop.f32.mrb[0].mxu0
      %v1406 = vadd.f32 0.0, %v1405
      %v1407 = vpop.f32.mrb[0].mxu0
      %v1408 = vadd.f32 0.0, %v1407
      %v1409 = vpop.f32.mrb[0].mxu0
      %v1410 = vadd.f32 0.0, %v1409
      %1411 = vmatprep.mubr.bf16.mxu0 0
      %1412 = vmatmul.mubr.bf16.gmra.mrb[0].mxu0 %v1041
      %v1413 = vpop.f32.mrb[0].mxu0
      %v1414 = vadd.f32 0.0, %v1413
      %v1415 = vpop.f32.mrb[0].mxu0
      %v1416 = vadd.f32 0.0, %v1415
      %v1417 = vpop.f32.mrb[0].mxu0
      %v1418 = vadd.f32 0.0, %v1417
      %v1419 = vpop.f32.mrb[0].mxu0
      %v1420 = vadd.f32 0.0, %v1419
      %1421 = vmatprep.mubr.bf16.mxu0 0
      %1422 = vmatmul.mubr.bf16.gmra.mrb[0].mxu0 %v1044
      %v1423 = vpop.f32.mrb[0].mxu0
      %v1424 = vadd.f32 0.0, %v1423
      %v1425 = vpop.f32.mrb[0].mxu0
      %v1426 = vadd.f32 0.0, %v1425
      %v1427 = vpop.f32.mrb[0].mxu0
      %v1428 = vadd.f32 0.0, %v1427
      %v1429 = vpop.f32.mrb[0].mxu0
      %v1430 = vadd.f32 0.0, %v1429
      %1431 = vmatprep.mubr.bf16.mxu0 0
      %1432 = vmatmul.mubr.bf16.gmra.mrb[0].mxu0 %v1047
      %v1433 = vpop.f32.mrb[0].mxu0
      %v1434 = vadd.f32 0.0, %v1433
      %v1435 = vpop.f32.mrb[0].mxu0
      %v1436 = vadd.f32 0.0, %v1435
      %v1437 = vpop.f32.mrb[0].mxu0
      %v1438 = vadd.f32 0.0, %v1437
      %v1439 = vpop.f32.mrb[0].mxu0
      %v1440 = vadd.f32 0.0, %v1439
      %1441 = vmatprep.mubr.bf16.mxu0 0
      %1442 = vmatmul.mubr.bf16.gmra.mrb[0].mxu0 %v1050
      %v1443 = vpop.f32.mrb[0].mxu0
      %v1444 = vadd.f32 0.0, %v1443
      %v1445 = vpop.f32.mrb[0].mxu0
      %v1446 = vadd.f32 0.0, %v1445
      %v1447 = vpop.f32.mrb[0].mxu0
      %v1448 = vadd.f32 0.0, %v1447
      %v1449 = vpop.f32.mrb[0].mxu0
      %v1450 = vadd.f32 0.0, %v1449
      %1451 = vmatprep.mubr.bf16.mxu0 0
      %1452 = vmatmul.mubr.bf16.gmra.mrb[0].mxu0 %v1053
      %v1453 = vpop.f32.mrb[0].mxu0
      %v1454 = vadd.f32 0.0, %v1453
      %v1455 = vpop.f32.mrb[0].mxu0
      %v1456 = vadd.f32 0.0, %v1455
      %v1457 = vpop.f32.mrb[0].mxu0
      %v1458 = vadd.f32 0.0, %v1457
      %v1459 = vpop.f32.mrb[0].mxu0
      %v1460 = vadd.f32 0.0, %v1459
      %1461 = vmatprep.mubr.bf16.mxu0 0
      %1462 = vmatmul.mubr.bf16.gmra.mrb[0].mxu0 %v1056
      %v1463 = vpop.f32.mrb[0].mxu0
      %v1464 = vadd.f32 0.0, %v1463
      %v1465 = vpop.f32.mrb[0].mxu0
      %v1466 = vadd.f32 0.0, %v1465
      %v1467 = vpop.f32.mrb[0].mxu0
      %v1468 = vadd.f32 0.0, %v1467
      %v1469 = vpop.f32.mrb[0].mxu0
      %v1470 = vadd.f32 0.0, %v1469
      %1471 = vmatprep.mubr.bf16.mxu0 0
      %1472 = vmatmul.mubr.bf16.gmra.mrb[0].mxu0 %v1059
      %v1473 = vpop.f32.mrb[0].mxu0
      %v1474 = vadd.f32 0.0, %v1473
      %v1475 = vpop.f32.mrb[0].mxu0
      %v1476 = vadd.f32 0.0, %v1475
      %v1477 = vpop.f32.mrb[0].mxu0
      %v1478 = vadd.f32 0.0, %v1477
      %v1479 = vpop.f32.mrb[0].mxu0
      %v1480 = vadd.f32 0.0, %v1479
      %1481 = vmatprep.mubr.bf16.mxu0 0
      %1482 = vmatmul.mubr.bf16.gmra.mrb[0].mxu0 %v1062
      %v1483 = vpop.f32.mrb[0].mxu0
      %v1484 = vadd.f32 0.0, %v1483
      %v1485 = vpop.f32.mrb[0].mxu0
      %v1486 = vadd.f32 0.0, %v1485
      %v1487 = vpop.f32.mrb[0].mxu0
      %v1488 = vadd.f32 0.0, %v1487
      %v1489 = vpop.f32.mrb[0].mxu0
      %v1490 = vadd.f32 0.0, %v1489
      %1491 = vmatprep.mubr.bf16.mxu0 0
      %1492 = vmatmul.mubr.bf16.gmra.mrb[0].mxu0 %v1065
      %v1493 = vpop.f32.mrb[0].mxu0
      %v1494 = vadd.f32 0.0, %v1493
      %v1495 = vpop.f32.mrb[0].mxu0
      %v1496 = vadd.f32 0.0, %v1495
      %v1497 = vpop.f32.mrb[0].mxu0
      %v1498 = vadd.f32 0.0, %v1497
      %v1499 = vpop.f32.mrb[0].mxu0
      %v1500 = vadd.f32 0.0, %v1499
      %1501 = vmatprep.mubr.bf16.mxu0 0
      %1502 = vmatmul.mubr.bf16.gmra.mrb[0].mxu0 %v1068
      %v1503 = vpop.f32.mrb[0].mxu0
      %v1504 = vadd.f32 0.0, %v1503
      %v1505 = vpop.f32.mrb[0].mxu0
      %v1506 = vadd.f32 0.0, %v1505
      %v1507 = vpop.f32.mrb[0].mxu0
      %v1508 = vadd.f32 0.0, %v1507
      %v1509 = vpop.f32.mrb[0].mxu0
      %v1510 = vadd.f32 0.0, %v1509
      %1511 = vmatprep.mubr.bf16.mxu0 0
      %1512 = vmatmul.mubr.bf16.gmra.mrb[0].mxu0 %v1071
      %v1513 = vpop.f32.mrb[0].mxu0
      %v1514 = vadd.f32 0.0, %v1513
      %v1515 = vpop.f32.mrb[0].mxu0
      %v1516 = vadd.f32 0.0, %v1515
      %v1517 = vpop.f32.mrb[0].mxu0
      %v1518 = vadd.f32 0.0, %v1517
      %v1519 = vpop.f32.mrb[0].mxu0
      %v1520 = vadd.f32 0.0, %v1519
      %1521 = vmatprep.mubr.bf16.mxu0 0
      %1522 = vmatmul.mubr.bf16.gmra.mrb[0].mxu0 %v1074
      %v1523 = vpop.f32.mrb[0].mxu0
      %v1524 = vadd.f32 0.0, %v1523
      %v1525 = vpop.f32.mrb[0].mxu0
      %v1526 = vadd.f32 0.0, %v1525
      %v1527 = vpop.f32.mrb[0].mxu0
      %v1528 = vadd.f32 0.0, %v1527
      %v1529 = vpop.f32.mrb[0].mxu0
      %v1530 = vadd.f32 0.0, %v1529
      %1531 = vmatprep.mubr.bf16.mxu0 0
      %1532 = vmatmul.mubr.bf16.gmra.mrb[0].mxu0 %v1077
      %v1533 = vpop.f32.mrb[0].mxu0
      %v1534 = vadd.f32 0.0, %v1533
      %v1535 = vpop.f32.mrb[0].mxu0
      %v1536 = vadd.f32 0.0, %v1535
      %v1537 = vpop.f32.mrb[0].mxu0
      %v1538 = vadd.f32 0.0, %v1537
      %v1539 = vpop.f32.mrb[0].mxu0
      %v1540 = vadd.f32 0.0, %v1539
      %1541 = vmatprep.mubr.bf16.mxu0 0
      %1542 = vmatmul.mubr.bf16.gmra.mrb[0].mxu0 %v1080
      %v1543 = vpop.f32.mrb[0].mxu0
      %v1544 = vadd.f32 0.0, %v1543
      %v1545 = vpop.f32.mrb[0].mxu0
      %v1546 = vadd.f32 0.0, %v1545
      %v1547 = vpop.f32.mrb[0].mxu0
      %v1548 = vadd.f32 0.0, %v1547
      %v1549 = vpop.f32.mrb[0].mxu0
      %v1550 = vadd.f32 0.0, %v1549
      %1551 = vmatprep.mubr.bf16.mxu0 0
      %1552 = vmatmul.mubr.bf16.gmra.mrb[0].mxu0 %v1083
      %v1553 = vpop.f32.mrb[0].mxu0
      %v1554 = vadd.f32 0.0, %v1553
      %v1555 = vpop.f32.mrb[0].mxu0
      %v1556 = vadd.f32 0.0, %v1555
      %v1557 = vpop.f32.mrb[0].mxu0
      %v1558 = vadd.f32 0.0, %v1557
      %v1559 = vpop.f32.mrb[0].mxu0
      %v1560 = vadd.f32 0.0, %v1559
      %1561 = vmatprep.mubr.bf16.mxu0 0
      %1562 = vmatmul.mubr.bf16.gmra.mrb[0].mxu0 %v1086
      %v1563 = vpop.f32.mrb[0].mxu0
      %v1564 = vadd.f32 0.0, %v1563
      %v1565 = vpop.f32.mrb[0].mxu0
      %v1566 = vadd.f32 0.0, %v1565
      %v1567 = vpop.f32.mrb[0].mxu0
      %v1568 = vadd.f32 0.0, %v1567
      %v1569 = vpop.f32.mrb[0].mxu0
      %v1570 = vadd.f32 0.0, %v1569
      %1571 = vmatprep.mubr.bf16.mxu0 0
      %1572 = vmatmul.mubr.bf16.gmra.mrb[0].mxu0 %v1089
      %v1573 = vpop.f32.mrb[0].mxu0
      %v1574 = vadd.f32 0.0, %v1573
      %v1575 = vpop.f32.mrb[0].mxu0
      %v1576 = vadd.f32 0.0, %v1575
      %v1577 = vpop.f32.mrb[0].mxu0
      %v1578 = vadd.f32 0.0, %v1577
      %v1579 = vpop.f32.mrb[0].mxu0
      %v1580 = vadd.f32 0.0, %v1579
      %1581 = vmatprep.mubr.bf16.mxu0 0
      %1582 = vmatmul.mubr.bf16.gmra.mrb[0].mxu0 %v1092
      %v1583 = vpop.f32.mrb[0].mxu0
      %v1584 = vadd.f32 0.0, %v1583
      %v1585 = vpop.f32.mrb[0].mxu0
      %v1586 = vadd.f32 0.0, %v1585
      %v1587 = vpop.f32.mrb[0].mxu0
      %v1588 = vadd.f32 0.0, %v1587
      %v1589 = vpop.f32.mrb[0].mxu0
      %v1590 = vadd.f32 0.0, %v1589
      %1591 = vmatprep.mubr.bf16.mxu0 0
      %1592 = vmatmul.mubr.bf16.gmra.mrb[0].mxu0 %v1095
      %v1593 = vpop.f32.mrb[0].mxu0
      %v1594 = vadd.f32 0.0, %v1593
      %v1595 = vpop.f32.mrb[0].mxu0
      %v1596 = vadd.f32 0.0, %v1595
      %v1597 = vpop.f32.mrb[0].mxu0
      %v1598 = vadd.f32 0.0, %v1597
      %v1599 = vpop.f32.mrb[0].mxu0
      %v1600 = vadd.f32 0.0, %v1599
      %1601 = vmatprep.mubr.bf16.mxu0 0
      %1602 = vmatmul.mubr.bf16.gmra.mrb[0].mxu0 %v1098
      %v1603 = vpop.f32.mrb[0].mxu0
      %v1604 = vadd.f32 0.0, %v1603
      %v1605 = vpop.f32.mrb[0].mxu0
      %v1606 = vadd.f32 0.0, %v1605
      %v1607 = vpop.f32.mrb[0].mxu0
      %v1608 = vadd.f32 0.0, %v1607
      %v1609 = vpop.f32.mrb[0].mxu0
      %v1610 = vadd.f32 0.0, %v1609
      %1611 = vmatprep.mubr.bf16.mxu0 0
      %1612 = vmatmul.mubr.bf16.gmra.mrb[0].mxu0 %v1101
      %v1613 = vpop.f32.mrb[0].mxu0
      %v1614 = vadd.f32 0.0, %v1613
      %v1615 = vpop.f32.mrb[0].mxu0
      %v1616 = vadd.f32 0.0, %v1615
      %v1617 = vpop.f32.mrb[0].mxu0
      %v1618 = vadd.f32 0.0, %v1617
      %v1619 = vpop.f32.mrb[0].mxu0
      %v1620 = vadd.f32 0.0, %v1619
      %1621 = vmatprep.mubr.bf16.mxu0 0
      %1622 = vmatmul.mubr.bf16.gmra.mrb[0].mxu0 %v1104
      %v1623 = vpop.f32.mrb[0].mxu0
      %v1624 = vadd.f32 0.0, %v1623
      %v1625 = vpop.f32.mrb[0].mxu0
      %v1626 = vadd.f32 0.0, %v1625
      %v1627 = vpop.f32.mrb[0].mxu0
      %v1628 = vadd.f32 0.0, %v1627
      %v1629 = vpop.f32.mrb[0].mxu0
      %v1630 = vadd.f32 0.0, %v1629
      %1631 = vmatprep.mubr.bf16.mxu0 0
      %1632 = vmatmul.mubr.bf16.gmra.mrb[0].mxu0 %v1107
      %v1633 = vpop.f32.mrb[0].mxu0
      %v1634 = vadd.f32 0.0, %v1633
      %v1635 = vpop.f32.mrb[0].mxu0
      %v1636 = vadd.f32 0.0, %v1635
      %v1637 = vpop.f32.mrb[0].mxu0
      %v1638 = vadd.f32 0.0, %v1637
      %v1639 = vpop.f32.mrb[0].mxu0
      %v1640 = vadd.f32 0.0, %v1639
      %1641 = vmatprep.mubr.bf16.mxu0 0
      %1642 = vmatmul.mubr.bf16.gmra.mrb[0].mxu0 %v1110
      %v1643 = vpop.f32.mrb[0].mxu0
      %v1644 = vadd.f32 0.0, %v1643
      %v1645 = vpop.f32.mrb[0].mxu0
      %v1646 = vadd.f32 0.0, %v1645
      %v1647 = vpop.f32.mrb[0].mxu0
      %v1648 = vadd.f32 0.0, %v1647
      %v1649 = vpop.f32.mrb[0].mxu0
      %v1650 = vadd.f32 0.0, %v1649
      %1651 = vmatprep.mubr.bf16.mxu0 0
      %1652 = vmatmul.mubr.bf16.gmra.mrb[0].mxu0 %v1113
      %v1653 = vpop.f32.mrb[0].mxu0
      %v1654 = vadd.f32 0.0, %v1653
      %v1655 = vpop.f32.mrb[0].mxu0
      %v1656 = vadd.f32 0.0, %v1655
      %v1657 = vpop.f32.mrb[0].mxu0
      %v1658 = vadd.f32 0.0, %v1657
      %v1659 = vpop.f32.mrb[0].mxu0
      %v1660 = vadd.f32 0.0, %v1659
      %1661 = vmatprep.mubr.bf16.mxu0 0
      %1662 = vmatmul.mubr.bf16.gmra.mrb[0].mxu0 %v1116
      %v1663 = vpop.f32.mrb[0].mxu0
      %v1664 = vadd.f32 0.0, %v1663
      %v1665 = vpop.f32.mrb[0].mxu0
      %v1666 = vadd.f32 0.0, %v1665
      %v1667 = vpop.f32.mrb[0].mxu0
      %v1668 = vadd.f32 0.0, %v1667
      %v1669 = vpop.f32.mrb[0].mxu0
      %v1670 = vadd.f32 0.0, %v1669
      %1671 = vmatprep.mubr.bf16.mxu0 0
      %1672 = vmatmul.mubr.bf16.gmra.mrb[0].mxu0 %v1119
      %v1673 = vpop.f32.mrb[0].mxu0
      %v1674 = vadd.f32 0.0, %v1673
      %v1675 = vpop.f32.mrb[0].mxu0
      %v1676 = vadd.f32 0.0, %v1675
      %v1677 = vpop.f32.mrb[0].mxu0
      %v1678 = vadd.f32 0.0, %v1677
      %v1679 = vpop.f32.mrb[0].mxu0
      %v1680 = vadd.f32 0.0, %v1679
      %1681 = vmatprep.mubr.bf16.mxu0 0
      %1682 = vmatmul.mubr.bf16.gmra.mrb[0].mxu0 %v1122
      %v1683 = vpop.f32.mrb[0].mxu0
      %v1684 = vadd.f32 0.0, %v1683
      %v1685 = vpop.f32.mrb[0].mxu0
      %v1686 = vadd.f32 0.0, %v1685
      %v1687 = vpop.f32.mrb[0].mxu0
      %v1688 = vadd.f32 0.0, %v1687
      %v1689 = vpop.f32.mrb[0].mxu0
      %v1690 = vadd.f32 0.0, %v1689
      %1691 = vmatprep.mubr.bf16.mxu0 0
      %1692 = vmatmul.mubr.bf16.gmra.mrb[0].mxu0 %v1125
      %v1693 = vpop.f32.mrb[0].mxu0
      %v1694 = vadd.f32 0.0, %v1693
      %v1695 = vpop.f32.mrb[0].mxu0
      %v1696 = vadd.f32 0.0, %v1695
      %v1697 = vpop.f32.mrb[0].mxu0
      %v1698 = vadd.f32 0.0, %v1697
      %v1699 = vpop.f32.mrb[0].mxu0
      %v1700 = vadd.f32 0.0, %v1699
      %1701 = vmatprep.mubr.bf16.mxu0 0
      %1702 = vmatmul.mubr.bf16.gmra.mrb[0].mxu0 %v1128
      %v1703 = vpop.f32.mrb[0].mxu0
      %v1704 = vadd.f32 0.0, %v1703
      %v1705 = vpop.f32.mrb[0].mxu0
      %v1706 = vadd.f32 0.0, %v1705
      %v1707 = vpop.f32.mrb[0].mxu0
      %v1708 = vadd.f32 0.0, %v1707
      %v1709 = vpop.f32.mrb[0].mxu0
      %v1710 = vadd.f32 0.0, %v1709
      %1711 = vmatprep.mubr.bf16.mxu0 0
      %1712 = vmatmul.mubr.bf16.gmra.mrb[0].mxu0 %v1131
      %v1713 = vpop.f32.mrb[0].mxu0
      %v1714 = vadd.f32 0.0, %v1713
      %v1715 = vpop.f32.mrb[0].mxu0
      %v1716 = vadd.f32 0.0, %v1715
      %v1717 = vpop.f32.mrb[0].mxu0
      %v1718 = vadd.f32 0.0, %v1717
      %v1719 = vpop.f32.mrb[0].mxu0
      %v1720 = vadd.f32 0.0, %v1719
      %1721 = vmatprep.mubr.bf16.mxu0 0
      %1722 = vmatmul.mubr.bf16.gmra.mrb[0].mxu0 %v1134
      %v1723 = vpop.f32.mrb[0].mxu0
      %v1724 = vadd.f32 0.0, %v1723
      %v1725 = vpop.f32.mrb[0].mxu0
      %v1726 = vadd.f32 0.0, %v1725
      %v1727 = vpop.f32.mrb[0].mxu0
      %v1728 = vadd.f32 0.0, %v1727
      %v1729 = vpop.f32.mrb[0].mxu0
      %v1730 = vadd.f32 0.0, %v1729
      %1731 = vmatprep.mubr.bf16.mxu0 0
      %1732 = vmatmul.mubr.bf16.gmra.mrb[0].mxu0 %v1137
      %v1733 = vpop.f32.mrb[0].mxu0
      %v1734 = vadd.f32 0.0, %v1733
      %v1735 = vpop.f32.mrb[0].mxu0
      %v1736 = vadd.f32 0.0, %v1735
      %v1737 = vpop.f32.mrb[0].mxu0
      %v1738 = vadd.f32 0.0, %v1737
      %v1739 = vpop.f32.mrb[0].mxu0
      %v1740 = vadd.f32 0.0, %v1739
      %1741 = vmatprep.mubr.bf16.mxu0 0
      %1742 = vmatmul.mubr.bf16.gmra.mrb[0].mxu0 %v1140
      %v1743 = vpop.f32.mrb[0].mxu0
      %v1744 = vadd.f32 0.0, %v1743
      %v1745 = vpop.f32.mrb[0].mxu0
      %v1746 = vadd.f32 0.0, %v1745
      %v1747 = vpop.f32.mrb[0].mxu0
      %v1748 = vadd.f32 0.0, %v1747
      %v1749 = vpop.f32.mrb[0].mxu0
      %v1750 = vadd.f32 0.0, %v1749
      %1751 = vmatprep.mubr.bf16.mxu0 0
      %1752 = vmatmul.mubr.bf16.gmra.mrb[0].mxu0 %v1143
      %v1753 = vpop.f32.mrb[0].mxu0
      %v1754 = vadd.f32 0.0, %v1753
      %v1755 = vpop.f32.mrb[0].mxu0
      %v1756 = vadd.f32 0.0, %v1755
      %v1757 = vpop.f32.mrb[0].mxu0
      %v1758 = vadd.f32 0.0, %v1757
      %v1759 = vpop.f32.mrb[0].mxu0
      %v1760 = vadd.f32 0.0, %v1759
      %1761 = vmatprep.mubr.bf16.mxu0 0
      %1762 = vmatmul.mubr.bf16.gmra.mrb[0].mxu0 %v1146
      %v1763 = vpop.f32.mrb[0].mxu0
      %v1764 = vadd.f32 0.0, %v1763
      %v1765 = vpop.f32.mrb[0].mxu0
      %v1766 = vadd.f32 0.0, %v1765
      %v1767 = vpop.f32.mrb[0].mxu0
      %v1768 = vadd.f32 0.0, %v1767
      %v1769 = vpop.f32.mrb[0].mxu0
      %v1770 = vadd.f32 0.0, %v1769
      %1771 = vmatprep.mubr.bf16.mxu0 0
      %1772 = vmatmul.mubr.bf16.gmra.mrb[0].mxu0 %v1149
      %v1773 = vpop.f32.mrb[0].mxu0
      %v1774 = vadd.f32 0.0, %v1773
      %v1775 = vpop.f32.mrb[0].mxu0
      %v1776 = vadd.f32 0.0, %v1775
      %v1777 = vpop.f32.mrb[0].mxu0
      %v1778 = vadd.f32 0.0, %v1777
      %v1779 = vpop.f32.mrb[0].mxu0
      %v1780 = vadd.f32 0.0, %v1779
      %1781 = vmatprep.mubr.bf16.mxu0 0
      %1782 = vmatmul.mubr.bf16.gmra.mrb[0].mxu0 %v1152
      %v1783 = vpop.f32.mrb[0].mxu0
      %v1784 = vadd.f32 0.0, %v1783
      %v1785 = vpop.f32.mrb[0].mxu0
      %v1786 = vadd.f32 0.0, %v1785
      %v1787 = vpop.f32.mrb[0].mxu0
      %v1788 = vadd.f32 0.0, %v1787
      %v1789 = vpop.f32.mrb[0].mxu0
      %v1790 = vadd.f32 0.0, %v1789
      %1791 = vmatprep.mubr.bf16.mxu0 0
      %1792 = vmatmul.mubr.bf16.gmra.mrb[0].mxu0 %v1155
      %v1793 = vpop.f32.mrb[0].mxu0
      %v1794 = vadd.f32 0.0, %v1793
      %v1795 = vpop.f32.mrb[0].mxu0
      %v1796 = vadd.f32 0.0, %v1795
      %v1797 = vpop.f32.mrb[0].mxu0
      %v1798 = vadd.f32 0.0, %v1797
      %v1799 = vpop.f32.mrb[0].mxu0
      %v1800 = vadd.f32 0.0, %v1799
      %1801 = vmatprep.mubr.bf16.mxu0 0
      %1802 = vmatmul.mubr.bf16.gmra.mrb[0].mxu0 %v1158
      %v1803 = vpop.f32.mrb[0].mxu0
      %v1804 = vadd.f32 0.0, %v1803
      %v1805 = vpop.f32.mrb[0].mxu0
      %v1806 = vadd.f32 0.0, %v1805
      %v1807 = vpop.f32.mrb[0].mxu0
      %v1808 = vadd.f32 0.0, %v1807
      %v1809 = vpop.f32.mrb[0].mxu0
      %v1810 = vadd.f32 0.0, %v1809
      %1811 = vmatprep.mubr.bf16.mxu0 0
      %1812 = vmatmul.mubr.bf16.gmra.mrb[0].mxu0 %v1161
      %v1813 = vpop.f32.mrb[0].mxu0
      %v1814 = vadd.f32 0.0, %v1813
      %v1815 = vpop.f32.mrb[0].mxu0
      %v1816 = vadd.f32 0.0, %v1815
      %v1817 = vpop.f32.mrb[0].mxu0
      %v1818 = vadd.f32 0.0, %v1817
      %v1819 = vpop.f32.mrb[0].mxu0
      %v1820 = vadd.f32 0.0, %v1819
      %1821 = vmatprep.mubr.bf16.mxu0 0
      %1822 = vmatmul.mubr.bf16.gmra.mrb[0].mxu0 %v1164
      %v1823 = vpop.f32.mrb[0].mxu0
      %v1824 = vadd.f32 0.0, %v1823
      %v1825 = vpop.f32.mrb[0].mxu0
      %v1826 = vadd.f32 0.0, %v1825
      %v1827 = vpop.f32.mrb[0].mxu0
      %v1828 = vadd.f32 0.0, %v1827
      %v1829 = vpop.f32.mrb[0].mxu0
      %v1830 = vadd.f32 0.0, %v1829
      %1831 = vmatprep.mubr.bf16.mxu0 0
      %1832 = vmatmul.mubr.bf16.gmra.mrb[0].mxu0 %v1167
      %v1833 = vpop.f32.mrb[0].mxu0
      %v1834 = vadd.f32 0.0, %v1833
      %v1835 = vpop.f32.mrb[0].mxu0
      %v1836 = vadd.f32 0.0, %v1835
      %v1837 = vpop.f32.mrb[0].mxu0
      %v1838 = vadd.f32 0.0, %v1837
      %v1839 = vpop.f32.mrb[0].mxu0
      %v1840 = vadd.f32 0.0, %v1839
      %1841 = vdwg.mxu0
      %v1842 = vmax.f32 %v1204, 0.0
      %v1843 = vmax.f32 %v1206, 0.0
      %v1844 = vmax.f32 %v1208, 0.0
      %v1845 = vmax.f32 %v1210, 0.0
      %v1846 = vmax.f32 %v1214, 0.0
      %v1847 = vmax.f32 %v1216, 0.0
      %v1848 = vmax.f32 %v1218, 0.0
      %v1849 = vmax.f32 %v1220, 0.0
      %v1850 = vmax.f32 %v1224, 0.0
      %v1851 = vmax.f32 %v1226, 0.0
      %v1852 = vmax.f32 %v1228, 0.0
      %v1853 = vmax.f32 %v1230, 0.0
      %v1854 = vmax.f32 %v1234, 0.0
      %v1855 = vmax.f32 %v1236, 0.0
      %v1856 = vmax.f32 %v1238, 0.0
      %v1857 = vmax.f32 %v1240, 0.0
      %v1858 = vmax.f32 %v1244, 0.0
      %v1859 = vmax.f32 %v1246, 0.0
      %v1860 = vmax.f32 %v1248, 0.0
      %v1861 = vmax.f32 %v1250, 0.0
      %v1862 = vmax.f32 %v1254, 0.0
      %v1863 = vmax.f32 %v1256, 0.0
      %v1864 = vmax.f32 %v1258, 0.0
      %v1865 = vmax.f32 %v1260, 0.0
      %v1866 = vmax.f32 %v1264, 0.0
      %v1867 = vmax.f32 %v1266, 0.0
      %v1868 = vmax.f32 %v1268, 0.0
      %v1869 = vmax.f32 %v1270, 0.0
      %v1870 = vmax.f32 %v1274, 0.0
      %v1871 = vmax.f32 %v1276, 0.0
      %v1872 = vmax.f32 %v1278, 0.0
      %v1873 = vmax.f32 %v1280, 0.0
      %v1874 = vmax.f32 %v1284, 0.0
      %v1875 = vmax.f32 %v1286, 0.0
      %v1876 = vmax.f32 %v1288, 0.0
      %v1877 = vmax.f32 %v1290, 0.0
      %v1878 = vmax.f32 %v1294, 0.0
      %v1879 = vmax.f32 %v1296, 0.0
      %v1880 = vmax.f32 %v1298, 0.0
      %v1881 = vmax.f32 %v1300, 0.0
      %v1882 = vmax.f32 %v1304, 0.0
      %v1883 = vmax.f32 %v1306, 0.0
      %v1884 = vmax.f32 %v1308, 0.0
      %v1885 = vmax.f32 %v1310, 0.0
      %v1886 = vmax.f32 %v1314, 0.0
      %v1887 = vmax.f32 %v1316, 0.0
      %v1888 = vmax.f32 %v1318, 0.0
      %v1889 = vmax.f32 %v1320, 0.0
      %v1890 = vmax.f32 %v1324, 0.0
      %v1891 = vmax.f32 %v1326, 0.0
      %v1892 = vmax.f32 %v1328, 0.0
      %v1893 = vmax.f32 %v1330, 0.0
      %v1894 = vmax.f32 %v1334, 0.0
      %v1895 = vmax.f32 %v1336, 0.0
      %v1896 = vmax.f32 %v1338, 0.0
      %v1897 = vmax.f32 %v1340, 0.0
      %v1898 = vmax.f32 %v1344, 0.0
      %v1899 = vmax.f32 %v1346, 0.0
      %v1900 = vmax.f32 %v1348, 0.0
      %v1901 = vmax.f32 %v1350, 0.0
      %v1902 = vmax.f32 %v1354, 0.0
      %v1903 = vmax.f32 %v1356, 0.0
      %v1904 = vmax.f32 %v1358, 0.0
      %v1905 = vmax.f32 %v1360, 0.0
      %v1906 = vmax.f32 %v1364, 0.0
      %v1907 = vmax.f32 %v1366, 0.0
      %v1908 = vmax.f32 %v1368, 0.0
      %v1909 = vmax.f32 %v1370, 0.0
      %v1910 = vmax.f32 %v1374, 0.0
      %v1911 = vmax.f32 %v1376, 0.0
      %v1912 = vmax.f32 %v1378, 0.0
      %v1913 = vmax.f32 %v1380, 0.0
      %v1914 = vmax.f32 %v1384, 0.0
      %v1915 = vmax.f32 %v1386, 0.0
      %v1916 = vmax.f32 %v1388, 0.0
      %v1917 = vmax.f32 %v1390, 0.0
      %v1918 = vmax.f32 %v1394, 0.0
      %v1919 = vmax.f32 %v1396, 0.0
      %v1920 = vmax.f32 %v1398, 0.0
      %v1921 = vmax.f32 %v1400, 0.0
      %v1922 = vmax.f32 %v1404, 0.0
      %v1923 = vmax.f32 %v1406, 0.0
      %v1924 = vmax.f32 %v1408, 0.0
      %v1925 = vmax.f32 %v1410, 0.0
      %v1926 = vmax.f32 %v1414, 0.0
      %v1927 = vmax.f32 %v1416, 0.0
      %v1928 = vmax.f32 %v1418, 0.0
      %v1929 = vmax.f32 %v1420, 0.0
      %v1930 = vmax.f32 %v1424, 0.0
      %v1931 = vmax.f32 %v1426, 0.0
      %v1932 = vmax.f32 %v1428, 0.0
      %v1933 = vmax.f32 %v1430, 0.0
      %v1934 = vmax.f32 %v1434, 0.0
      %v1935 = vmax.f32 %v1436, 0.0
      %v1936 = vmax.f32 %v1438, 0.0
      %v1937 = vmax.f32 %v1440, 0.0
      %v1938 = vmax.f32 %v1444, 0.0
      %v1939 = vmax.f32 %v1446, 0.0
      %v1940 = vmax.f32 %v1448, 0.0
      %v1941 = vmax.f32 %v1450, 0.0
      %v1942 = vmax.f32 %v1454, 0.0
      %v1943 = vmax.f32 %v1456, 0.0
      %v1944 = vmax.f32 %v1458, 0.0
      %v1945 = vmax.f32 %v1460, 0.0
      %v1946 = vmax.f32 %v1464, 0.0
      %v1947 = vmax.f32 %v1466, 0.0
      %v1948 = vmax.f32 %v1468, 0.0
      %v1949 = vmax.f32 %v1470, 0.0
      %v1950 = vmax.f32 %v1474, 0.0
      %v1951 = vmax.f32 %v1476, 0.0
      %v1952 = vmax.f32 %v1478, 0.0
      %v1953 = vmax.f32 %v1480, 0.0
      %v1954 = vmax.f32 %v1484, 0.0
      %v1955 = vmax.f32 %v1486, 0.0
      %v1956 = vmax.f32 %v1488, 0.0
      %v1957 = vmax.f32 %v1490, 0.0
      %v1958 = vmax.f32 %v1494, 0.0
      %v1959 = vmax.f32 %v1496, 0.0
      %v1960 = vmax.f32 %v1498, 0.0
      %v1961 = vmax.f32 %v1500, 0.0
      %v1962 = vmax.f32 %v1504, 0.0
      %v1963 = vmax.f32 %v1506, 0.0
      %v1964 = vmax.f32 %v1508, 0.0
      %v1965 = vmax.f32 %v1510, 0.0
      %v1966 = vmax.f32 %v1514, 0.0
      %v1967 = vmax.f32 %v1516, 0.0
      %v1968 = vmax.f32 %v1518, 0.0
      %v1969 = vmax.f32 %v1520, 0.0
      %v1970 = vmax.f32 %v1524, 0.0
      %v1971 = vmax.f32 %v1526, 0.0
      %v1972 = vmax.f32 %v1528, 0.0
      %v1973 = vmax.f32 %v1530, 0.0
      %v1974 = vmax.f32 %v1534, 0.0
      %v1975 = vmax.f32 %v1536, 0.0
      %v1976 = vmax.f32 %v1538, 0.0
      %v1977 = vmax.f32 %v1540, 0.0
      %v1978 = vmax.f32 %v1544, 0.0
      %v1979 = vmax.f32 %v1546, 0.0
      %v1980 = vmax.f32 %v1548, 0.0
      %v1981 = vmax.f32 %v1550, 0.0
      %v1982 = vmax.f32 %v1554, 0.0
      %v1983 = vmax.f32 %v1556, 0.0
      %v1984 = vmax.f32 %v1558, 0.0
      %v1985 = vmax.f32 %v1560, 0.0
      %v1986 = vmax.f32 %v1564, 0.0
      %v1987 = vmax.f32 %v1566, 0.0
      %v1988 = vmax.f32 %v1568, 0.0
      %v1989 = vmax.f32 %v1570, 0.0
      %v1990 = vmax.f32 %v1574, 0.0
      %v1991 = vmax.f32 %v1576, 0.0
      %v1992 = vmax.f32 %v1578, 0.0
      %v1993 = vmax.f32 %v1580, 0.0
      %v1994 = vmax.f32 %v1584, 0.0
      %v1995 = vmax.f32 %v1586, 0.0
      %v1996 = vmax.f32 %v1588, 0.0
      %v1997 = vmax.f32 %v1590, 0.0
      %v1998 = vmax.f32 %v1594, 0.0
      %v1999 = vmax.f32 %v1596, 0.0
      %v2000 = vmax.f32 %v1598, 0.0
      %v2001 = vmax.f32 %v1600, 0.0
      %v2002 = vmax.f32 %v1604, 0.0
      %v2003 = vmax.f32 %v1606, 0.0
      %v2004 = vmax.f32 %v1608, 0.0
      %v2005 = vmax.f32 %v1610, 0.0
      %v2006 = vmax.f32 %v1614, 0.0
      %v2007 = vmax.f32 %v1616, 0.0
      %v2008 = vmax.f32 %v1618, 0.0
      %v2009 = vmax.f32 %v1620, 0.0
      %v2010 = vmax.f32 %v1624, 0.0
      %v2011 = vmax.f32 %v1626, 0.0
      %v2012 = vmax.f32 %v1628, 0.0
      %v2013 = vmax.f32 %v1630, 0.0
      %v2014 = vmax.f32 %v1634, 0.0
      %v2015 = vmax.f32 %v1636, 0.0
      %v2016 = vmax.f32 %v1638, 0.0
      %v2017 = vmax.f32 %v1640, 0.0
      %v2018 = vmax.f32 %v1644, 0.0
      %v2019 = vmax.f32 %v1646, 0.0
      %v2020 = vmax.f32 %v1648, 0.0
      %v2021 = vmax.f32 %v1650, 0.0
      %v2022 = vmax.f32 %v1654, 0.0
      %v2023 = vmax.f32 %v1656, 0.0
      %v2024 = vmax.f32 %v1658, 0.0
      %v2025 = vmax.f32 %v1660, 0.0
      %v2026 = vmax.f32 %v1664, 0.0
      %v2027 = vmax.f32 %v1666, 0.0
      %v2028 = vmax.f32 %v1668, 0.0
      %v2029 = vmax.f32 %v1670, 0.0
      %v2030 = vmax.f32 %v1674, 0.0
      %v2031 = vmax.f32 %v1676, 0.0
      %v2032 = vmax.f32 %v1678, 0.0
      %v2033 = vmax.f32 %v1680, 0.0
      %v2034 = vmax.f32 %v1684, 0.0
      %v2035 = vmax.f32 %v1686, 0.0
      %v2036 = vmax.f32 %v1688, 0.0
      %v2037 = vmax.f32 %v1690, 0.0
      %v2038 = vmax.f32 %v1694, 0.0
      %v2039 = vmax.f32 %v1696, 0.0
      %v2040 = vmax.f32 %v1698, 0.0
      %v2041 = vmax.f32 %v1700, 0.0
      %v2042 = vmax.f32 %v1704, 0.0
      %v2043 = vmax.f32 %v1706, 0.0
      %v2044 = vmax.f32 %v1708, 0.0
      %v2045 = vmax.f32 %v1710, 0.0
      %v2046 = vmax.f32 %v1714, 0.0
      %v2047 = vmax.f32 %v1716, 0.0
      %v2048 = vmax.f32 %v1718, 0.0
      %v2049 = vmax.f32 %v1720, 0.0
      %v2050 = vmax.f32 %v1724, 0.0
      %v2051 = vmax.f32 %v1726, 0.0
      %v2052 = vmax.f32 %v1728, 0.0
      %v2053 = vmax.f32 %v1730, 0.0
      %v2054 = vmax.f32 %v1734, 0.0
      %v2055 = vmax.f32 %v1736, 0.0
      %v2056 = vmax.f32 %v1738, 0.0
      %v2057 = vmax.f32 %v1740, 0.0
      %v2058 = vmax.f32 %v1744, 0.0
      %v2059 = vmax.f32 %v1746, 0.0
      %v2060 = vmax.f32 %v1748, 0.0
      %v2061 = vmax.f32 %v1750, 0.0
      %v2062 = vmax.f32 %v1754, 0.0
      %v2063 = vmax.f32 %v1756, 0.0
      %v2064 = vmax.f32 %v1758, 0.0
      %v2065 = vmax.f32 %v1760, 0.0
      %v2066 = vmax.f32 %v1764, 0.0
      %v2067 = vmax.f32 %v1766, 0.0
      %v2068 = vmax.f32 %v1768, 0.0
      %v2069 = vmax.f32 %v1770, 0.0
      %v2070 = vmax.f32 %v1774, 0.0
      %v2071 = vmax.f32 %v1776, 0.0
      %v2072 = vmax.f32 %v1778, 0.0
      %v2073 = vmax.f32 %v1780, 0.0
      %v2074 = vmax.f32 %v1784, 0.0
      %v2075 = vmax.f32 %v1786, 0.0
      %v2076 = vmax.f32 %v1788, 0.0
      %v2077 = vmax.f32 %v1790, 0.0
      %v2078 = vmax.f32 %v1794, 0.0
      %v2079 = vmax.f32 %v1796, 0.0
      %v2080 = vmax.f32 %v1798, 0.0
      %v2081 = vmax.f32 %v1800, 0.0
      %v2082 = vmax.f32 %v1804, 0.0
      %v2083 = vmax.f32 %v1806, 0.0
      %v2084 = vmax.f32 %v1808, 0.0
      %v2085 = vmax.f32 %v1810, 0.0
      %v2086 = vmax.f32 %v1814, 0.0
      %v2087 = vmax.f32 %v1816, 0.0
      %v2088 = vmax.f32 %v1818, 0.0
      %v2089 = vmax.f32 %v1820, 0.0
      %v2090 = vmax.f32 %v1824, 0.0
      %v2091 = vmax.f32 %v1826, 0.0
      %v2092 = vmax.f32 %v1828, 0.0
      %v2093 = vmax.f32 %v1830, 0.0
      %v2094 = vmax.f32 %v1834, 0.0
      %v2095 = vmax.f32 %v1836, 0.0
      %v2096 = vmax.f32 %v1838, 0.0
      %v2097 = vmax.f32 %v1840, 0.0
      %v2098 = vadd.f32 %v1842, %v1844
      %v2099 = vadd.f32 %v2098, %v1846
      %v2100 = vadd.f32 %v2099, %v1848
      %v2101 = vadd.f32 %v2100, %v1850
      %v2102 = vadd.f32 %v2101, %v1852
      %v2103 = vadd.f32 %v2102, %v1854
      %v2104 = vadd.f32 %v2103, %v1856
      %v2105 = vadd.f32 %v2104, %v1858
      %v2106 = vadd.f32 %v2105, %v1860
      %v2107 = vadd.f32 %v2106, %v1862
      %v2108 = vadd.f32 %v2107, %v1864
      %v2109 = vadd.f32 %v2108, %v1866
      %v2110 = vadd.f32 %v2109, %v1868
      %v2111 = vadd.f32 %v2110, %v1870
      %v2112 = vadd.f32 %v2111, %v1872
      %v2113 = vadd.f32 %v2112, %v1874
      %v2114 = vadd.f32 %v2113, %v1876
      %v2115 = vadd.f32 %v2114, %v1878
      %v2116 = vadd.f32 %v2115, %v1880
      %v2117 = vadd.f32 %v2116, %v1882
      %v2118 = vadd.f32 %v2117, %v1884
      %v2119 = vadd.f32 %v2118, %v1886
      %v2120 = vadd.f32 %v2119, %v1888
      %v2121 = vadd.f32 %v2120, %v1890
      %v2122 = vadd.f32 %v2121, %v1892
      %v2123 = vadd.f32 %v2122, %v1894
      %v2124 = vadd.f32 %v2123, %v1896
      %v2125 = vadd.f32 %v2124, %v1898
      %v2126 = vadd.f32 %v2125, %v1900
      %v2127 = vadd.f32 %v2126, %v1902
      %v2128 = vadd.f32 %v2127, %v1904
      %v2129 = vrot.slane %v2128, 4
      %v2130 = vadd.f32 %v2128, %v2129
      %v2131 = vrot.slane %v2130, 2
      %v2132 = vadd.f32 %v2130, %v2131
      %v2133 = vrot.slane %v2132, 1
      %v2134 = vadd.f32 %v2132, %v2133
      %v2135 = vadd.f32 %v1843, %v1845
      %v2136 = vadd.f32 %v2135, %v1847
      %v2137 = vadd.f32 %v2136, %v1849
      %v2138 = vadd.f32 %v2137, %v1851
      %v2139 = vadd.f32 %v2138, %v1853
      %v2140 = vadd.f32 %v2139, %v1855
      %v2141 = vadd.f32 %v2140, %v1857
      %v2142 = vadd.f32 %v2141, %v1859
      %v2143 = vadd.f32 %v2142, %v1861
      %v2144 = vadd.f32 %v2143, %v1863
      %v2145 = vadd.f32 %v2144, %v1865
      %v2146 = vadd.f32 %v2145, %v1867
      %v2147 = vadd.f32 %v2146, %v1869
      %v2148 = vadd.f32 %v2147, %v1871
      %v2149 = vadd.f32 %v2148, %v1873
      %v2150 = vadd.f32 %v2149, %v1875
      %v2151 = vadd.f32 %v2150, %v1877
      %v2152 = vadd.f32 %v2151, %v1879
      %v2153 = vadd.f32 %v2152, %v1881
      %v2154 = vadd.f32 %v2153, %v1883
      %v2155 = vadd.f32 %v2154, %v1885
      %v2156 = vadd.f32 %v2155, %v1887
      %v2157 = vadd.f32 %v2156, %v1889
      %v2158 = vadd.f32 %v2157, %v1891
      %v2159 = vadd.f32 %v2158, %v1893
      %v2160 = vadd.f32 %v2159, %v1895
      %v2161 = vadd.f32 %v2160, %v1897
      %v2162 = vadd.f32 %v2161, %v1899
      %v2163 = vadd.f32 %v2162, %v1901
      %v2164 = vadd.f32 %v2163, %v1903
      %v2165 = vadd.f32 %v2164, %v1905
      %v2166 = vrot.slane %v2165, 4
      %v2167 = vadd.f32 %v2165, %v2166
      %v2168 = vrot.slane %v2167, 2
      %v2169 = vadd.f32 %v2167, %v2168
      %v2170 = vrot.slane %v2169, 1
      %v2171 = vadd.f32 %v2169, %v2170
      %v2172 = vadd.f32 %v1906, %v1908
      %v2173 = vadd.f32 %v2172, %v1910
      %v2174 = vadd.f32 %v2173, %v1912
      %v2175 = vadd.f32 %v2174, %v1914
      %v2176 = vadd.f32 %v2175, %v1916
      %v2177 = vadd.f32 %v2176, %v1918
      %v2178 = vadd.f32 %v2177, %v1920
      %v2179 = vadd.f32 %v2178, %v1922
      %v2180 = vadd.f32 %v2179, %v1924
      %v2181 = vadd.f32 %v2180, %v1926
      %v2182 = vadd.f32 %v2181, %v1928
      %v2183 = vadd.f32 %v2182, %v1930
      %v2184 = vadd.f32 %v2183, %v1932
      %v2185 = vadd.f32 %v2184, %v1934
      %v2186 = vadd.f32 %v2185, %v1936
      %v2187 = vadd.f32 %v2186, %v1938
      %v2188 = vadd.f32 %v2187, %v1940
      %v2189 = vadd.f32 %v2188, %v1942
      %v2190 = vadd.f32 %v2189, %v1944
      %v2191 = vadd.f32 %v2190, %v1946
      %v2192 = vadd.f32 %v2191, %v1948
      %v2193 = vadd.f32 %v2192, %v1950
      %v2194 = vadd.f32 %v2193, %v1952
      %v2195 = vadd.f32 %v2194, %v1954
      %v2196 = vadd.f32 %v2195, %v1956
      %v2197 = vadd.f32 %v2196, %v1958
      %v2198 = vadd.f32 %v2197, %v1960
      %v2199 = vadd.f32 %v2198, %v1962
      %v2200 = vadd.f32 %v2199, %v1964
      %v2201 = vadd.f32 %v2200, %v1966
      %v2202 = vadd.f32 %v2201, %v1968
      %v2203 = vrot.slane %v2202, 4
      %v2204 = vadd.f32 %v2202, %v2203
      %v2205 = vrot.slane %v2204, 2
      %v2206 = vadd.f32 %v2204, %v2205
      %v2207 = vrot.slane %v2206, 1
      %v2208 = vadd.f32 %v2206, %v2207
      %v2209 = vadd.f32 %v1907, %v1909
      %v2210 = vadd.f32 %v2209, %v1911
      %v2211 = vadd.f32 %v2210, %v1913
      %v2212 = vadd.f32 %v2211, %v1915
      %v2213 = vadd.f32 %v2212, %v1917
      %v2214 = vadd.f32 %v2213, %v1919
      %v2215 = vadd.f32 %v2214, %v1921
      %v2216 = vadd.f32 %v2215, %v1923
      %v2217 = vadd.f32 %v2216, %v1925
      %v2218 = vadd.f32 %v2217, %v1927
      %v2219 = vadd.f32 %v2218, %v1929
      %v2220 = vadd.f32 %v2219, %v1931
      %v2221 = vadd.f32 %v2220, %v1933
      %v2222 = vadd.f32 %v2221, %v1935
      %v2223 = vadd.f32 %v2222, %v1937
      %v2224 = vadd.f32 %v2223, %v1939
      %v2225 = vadd.f32 %v2224, %v1941
      %v2226 = vadd.f32 %v2225, %v1943
      %v2227 = vadd.f32 %v2226, %v1945
      %v2228 = vadd.f32 %v2227, %v1947
      %v2229 = vadd.f32 %v2228, %v1949
      %v2230 = vadd.f32 %v2229, %v1951
      %v2231 = vadd.f32 %v2230, %v1953
      %v2232 = vadd.f32 %v2231, %v1955
      %v2233 = vadd.f32 %v2232, %v1957
      %v2234 = vadd.f32 %v2233, %v1959
      %v2235 = vadd.f32 %v2234, %v1961
      %v2236 = vadd.f32 %v2235, %v1963
      %v2237 = vadd.f32 %v2236, %v1965
      %v2238 = vadd.f32 %v2237, %v1967
      %v2239 = vadd.f32 %v2238, %v1969
      %v2240 = vrot.slane %v2239, 4
      %v2241 = vadd.f32 %v2239, %v2240
      %v2242 = vrot.slane %v2241, 2
      %v2243 = vadd.f32 %v2241, %v2242
      %v2244 = vrot.slane %v2243, 1
      %v2245 = vadd.f32 %v2243, %v2244
      %v2246 = vadd.f32 %v1970, %v1972
      %v2247 = vadd.f32 %v2246, %v1974
      %v2248 = vadd.f32 %v2247, %v1976
      %v2249 = vadd.f32 %v2248, %v1978
      %v2250 = vadd.f32 %v2249, %v1980
      %v2251 = vadd.f32 %v2250, %v1982
      %v2252 = vadd.f32 %v2251, %v1984
      %v2253 = vadd.f32 %v2252, %v1986
      %v2254 = vadd.f32 %v2253, %v1988
      %v2255 = vadd.f32 %v2254, %v1990
      %v2256 = vadd.f32 %v2255, %v1992
      %v2257 = vadd.f32 %v2256, %v1994
      %v2258 = vadd.f32 %v2257, %v1996
      %v2259 = vadd.f32 %v2258, %v1998
      %v2260 = vadd.f32 %v2259, %v2000
      %v2261 = vadd.f32 %v2260, %v2002
      %v2262 = vadd.f32 %v2261, %v2004
      %v2263 = vadd.f32 %v2262, %v2006
      %v2264 = vadd.f32 %v2263, %v2008
      %v2265 = vadd.f32 %v2264, %v2010
      %v2266 = vadd.f32 %v2265, %v2012
      %v2267 = vadd.f32 %v2266, %v2014
      %v2268 = vadd.f32 %v2267, %v2016
      %v2269 = vadd.f32 %v2268, %v2018
      %v2270 = vadd.f32 %v2269, %v2020
      %v2271 = vadd.f32 %v2270, %v2022
      %v2272 = vadd.f32 %v2271, %v2024
      %v2273 = vadd.f32 %v2272, %v2026
      %v2274 = vadd.f32 %v2273, %v2028
      %v2275 = vadd.f32 %v2274, %v2030
      %v2276 = vadd.f32 %v2275, %v2032
      %v2277 = vrot.slane %v2276, 4
      %v2278 = vadd.f32 %v2276, %v2277
      %v2279 = vrot.slane %v2278, 2
      %v2280 = vadd.f32 %v2278, %v2279
      %v2281 = vrot.slane %v2280, 1
      %v2282 = vadd.f32 %v2280, %v2281
      %v2283 = vadd.f32 %v1971, %v1973
      %v2284 = vadd.f32 %v2283, %v1975
      %v2285 = vadd.f32 %v2284, %v1977
      %v2286 = vadd.f32 %v2285, %v1979
      %v2287 = vadd.f32 %v2286, %v1981
      %v2288 = vadd.f32 %v2287, %v1983
      %v2289 = vadd.f32 %v2288, %v1985
      %v2290 = vadd.f32 %v2289, %v1987
      %v2291 = vadd.f32 %v2290, %v1989
      %v2292 = vadd.f32 %v2291, %v1991
      %v2293 = vadd.f32 %v2292, %v1993
      %v2294 = vadd.f32 %v2293, %v1995
      %v2295 = vadd.f32 %v2294, %v1997
      %v2296 = vadd.f32 %v2295, %v1999
      %v2297 = vadd.f32 %v2296, %v2001
      %v2298 = vadd.f32 %v2297, %v2003
      %v2299 = vadd.f32 %v2298, %v2005
      %v2300 = vadd.f32 %v2299, %v2007
      %v2301 = vadd.f32 %v2300, %v2009
      %v2302 = vadd.f32 %v2301, %v2011
      %v2303 = vadd.f32 %v2302, %v2013
      %v2304 = vadd.f32 %v2303, %v2015
      %v2305 = vadd.f32 %v2304, %v2017
      %v2306 = vadd.f32 %v2305, %v2019
      %v2307 = vadd.f32 %v2306, %v2021
      %v2308 = vadd.f32 %v2307, %v2023
      %v2309 = vadd.f32 %v2308, %v2025
      %v2310 = vadd.f32 %v2309, %v2027
      %v2311 = vadd.f32 %v2310, %v2029
      %v2312 = vadd.f32 %v2311, %v2031
      %v2313 = vadd.f32 %v2312, %v2033
      %v2314 = vrot.slane %v2313, 4
      %v2315 = vadd.f32 %v2313, %v2314
      %v2316 = vrot.slane %v2315, 2
      %v2317 = vadd.f32 %v2315, %v2316
      %v2318 = vrot.slane %v2317, 1
      %v2319 = vadd.f32 %v2317, %v2318
      %v2320 = vadd.f32 %v2034, %v2036
      %v2321 = vadd.f32 %v2320, %v2038
      %v2322 = vadd.f32 %v2321, %v2040
      %v2323 = vadd.f32 %v2322, %v2042
      %v2324 = vadd.f32 %v2323, %v2044
      %v2325 = vadd.f32 %v2324, %v2046
      %v2326 = vadd.f32 %v2325, %v2048
      %v2327 = vadd.f32 %v2326, %v2050
      %v2328 = vadd.f32 %v2327, %v2052
      %v2329 = vadd.f32 %v2328, %v2054
      %v2330 = vadd.f32 %v2329, %v2056
      %v2331 = vadd.f32 %v2330, %v2058
      %v2332 = vadd.f32 %v2331, %v2060
      %v2333 = vadd.f32 %v2332, %v2062
      %v2334 = vadd.f32 %v2333, %v2064
      %v2335 = vadd.f32 %v2334, %v2066
      %v2336 = vadd.f32 %v2335, %v2068
      %v2337 = vadd.f32 %v2336, %v2070
      %v2338 = vadd.f32 %v2337, %v2072
      %v2339 = vadd.f32 %v2338, %v2074
      %v2340 = vadd.f32 %v2339, %v2076
      %v2341 = vadd.f32 %v2340, %v2078
      %v2342 = vadd.f32 %v2341, %v2080
      %v2343 = vadd.f32 %v2342, %v2082
      %v2344 = vadd.f32 %v2343, %v2084
      %v2345 = vadd.f32 %v2344, %v2086
      %v2346 = vadd.f32 %v2345, %v2088
      %v2347 = vadd.f32 %v2346, %v2090
      %v2348 = vadd.f32 %v2347, %v2092
      %v2349 = vadd.f32 %v2348, %v2094
      %v2350 = vadd.f32 %v2349, %v2096
      %v2351 = vrot.slane %v2350, 4
      %v2352 = vadd.f32 %v2350, %v2351
      %v2353 = vrot.slane %v2352, 2
      %v2354 = vadd.f32 %v2352, %v2353
      %v2355 = vrot.slane %v2354, 1
      %v2356 = vadd.f32 %v2354, %v2355
      %v2357 = vadd.f32 %v2035, %v2037
      %v2358 = vadd.f32 %v2357, %v2039
      %v2359 = vadd.f32 %v2358, %v2041
      %v2360 = vadd.f32 %v2359, %v2043
      %v2361 = vadd.f32 %v2360, %v2045
      %v2362 = vadd.f32 %v2361, %v2047
      %v2363 = vadd.f32 %v2362, %v2049
      %v2364 = vadd.f32 %v2363, %v2051
      %v2365 = vadd.f32 %v2364, %v2053
      %v2366 = vadd.f32 %v2365, %v2055
      %v2367 = vadd.f32 %v2366, %v2057
      %v2368 = vadd.f32 %v2367, %v2059
      %v2369 = vadd.f32 %v2368, %v2061
      %v2370 = vadd.f32 %v2369, %v2063
      %v2371 = vadd.f32 %v2370, %v2065
      %v2372 = vadd.f32 %v2371, %v2067
      %v2373 = vadd.f32 %v2372, %v2069
      %v2374 = vadd.f32 %v2373, %v2071
      %v2375 = vadd.f32 %v2374, %v2073
      %v2376 = vadd.f32 %v2375, %v2075
      %v2377 = vadd.f32 %v2376, %v2077
      %v2378 = vadd.f32 %v2377, %v2079
      %v2379 = vadd.f32 %v2378, %v2081
      %v2380 = vadd.f32 %v2379, %v2083
      %v2381 = vadd.f32 %v2380, %v2085
      %v2382 = vadd.f32 %v2381, %v2087
      %v2383 = vadd.f32 %v2382, %v2089
      %v2384 = vadd.f32 %v2383, %v2091
      %v2385 = vadd.f32 %v2384, %v2093
      %v2386 = vadd.f32 %v2385, %v2095
      %v2387 = vadd.f32 %v2386, %v2097
      %v2388 = vrot.slane %v2387, 4
      %v2389 = vadd.f32 %v2387, %v2388
      %v2390 = vrot.slane %v2389, 2
      %v2391 = vadd.f32 %v2389, %v2390
      %v2392 = vrot.slane %v2391, 1
      %v2393 = vadd.f32 %v2391, %v2392
      %vm2402 = vcmask 1041409
      %v2403 = vsel %vm2402, %v2208, %v2134
      %vm2404 = vcmask 1042434
      %v2405 = vsel %vm2404, %v2282, %v2403
      %vm2406 = vcmask 1043459
      %v2407 = vsel %vm2406, %v2356, %v2405
      %v2408 = vsel %vm2402, %v2245, %v2171
      %v2409 = vsel %vm2404, %v2319, %v2408
      %v2410 = vsel %vm2406, %v2393, %v2409
      %vm2413 = vcmask 1043456
      %v2414 = vsel %vm2413, %v2407, 0.0
      %v2415 = vsel %vm2413, %v2410, 0.0
      %v2416 = vadd.f32 %v2414, %v2415
      %2417 = vadd.xlane.f32.xlu0 %v2416
      %v2418 = vpop.xlane.xlu0 %2417
      %v2419 = vmul.f32 %v2418, 1.5258789e-05
      %v2420 = vmul.f32 %v655, %v2419
      %v2421 = vsel %vm2413, %v2420, 0.0
      %v2422 = vrot.slane %v2421, 4
      %v2423 = vadd.f32 %v2421, %v2422
      %v2424 = vrot.slane %v2423, 2
      %v2425 = vadd.f32 %v2423, %v2424
      %v2426 = vrot.slane %v2425, 1
      %v2427 = vadd.f32 %v2425, %v2426
      %2428 = vmatprep.subr.bf16.mxu0 %v518
      %2429 = vmatpush1.bf16.msra.mxu0 %v517
      %2430 = vmatprep.subr.bf16.mxu0 %v520
      %2431 = vmatpush1.bf16.msra.mxu0 %v519
      %2432 = vmatprep.subr.bf16.mxu0 %v522
      %2433 = vmatpush1.bf16.msra.mxu0 %v521
      %2434 = vmatprep.subr.bf16.mxu0 %v524
      %2435 = vmatpush1.bf16.msra.mxu0 %v523
      %2436 = vmatprep.subr.bf16.mxu0 %v526
      %2437 = vmatpush1.bf16.msra.mxu0 %v525
      %2438 = vmatprep.subr.bf16.mxu0 0
      %2439 = vmatpush1.bf16.msra.mxu0 0
      %2440 = vmatprep.subr.bf16.mxu0 0
      %2441 = vmatpush1.bf16.msra.mxu0 0
      %2442 = vmatprep.subr.bf16.mxu0 0
      %2443 = vmatpush1.bf16.msra.mxu0 0
      %2444 = vmatprep.subr.bf16.mxu0 0
      %2445 = vmatpush1.bf16.msra.mxu0 0
      %2446 = vmatprep.subr.bf16.mxu0 0
      %2447 = vmatpush1.bf16.msra.mxu0 0
      %2448 = vmatprep.subr.bf16.mxu0 0
      %2449 = vmatpush1.bf16.msra.mxu0 0
      %2450 = vmatprep.subr.bf16.mxu0 0
      %2451 = vmatpush1.bf16.msra.mxu0 0
      %2452 = vmatprep.subr.bf16.mxu0 0
      %2453 = vmatpush1.bf16.msra.mxu0 0
      %2454 = vmatprep.subr.bf16.mxu0 0
      %2455 = vmatpush1.bf16.msra.mxu0 0
      %2456 = vmatprep.subr.bf16.mxu0 0
      %2457 = vmatpush1.bf16.msra.mxu0 0
      %2458 = vmatprep.subr.bf16.mxu0 0
      %2459 = vmatpush1.bf16.msra.mxu0 0
      %2460 = vmatprep.mubr.bf16.mxu0 0
      %2461 = vmatmul.mubr.bf16.gmra.mrb[0].mxu0 %v978
      %v2462 = vpop.f32.mrb[0].mxu0
      %v2463 = vadd.f32 0.0, %v2462
      %v2464 = vpop.f32.mrb[0].mxu0
      %v2465 = vadd.f32 0.0, %v2464
      %v2466 = vpop.f32.mrb[0].mxu0
      %v2467 = vadd.f32 0.0, %v2466
      %v2468 = vpop.f32.mrb[0].mxu0
      %v2469 = vadd.f32 0.0, %v2468
      %2470 = vmatprep.mubr.bf16.mxu0 0
      %2471 = vmatmul.mubr.bf16.gmra.mrb[0].mxu0 %v981
      %v2472 = vpop.f32.mrb[0].mxu0
      %v2473 = vadd.f32 0.0, %v2472
      %v2474 = vpop.f32.mrb[0].mxu0
      %v2475 = vadd.f32 0.0, %v2474
      %v2476 = vpop.f32.mrb[0].mxu0
      %v2477 = vadd.f32 0.0, %v2476
      %v2478 = vpop.f32.mrb[0].mxu0
      %v2479 = vadd.f32 0.0, %v2478
      %2480 = vmatprep.mubr.bf16.mxu0 0
      %2481 = vmatmul.mubr.bf16.gmra.mrb[0].mxu0 %v984
      %v2482 = vpop.f32.mrb[0].mxu0
      %v2483 = vadd.f32 0.0, %v2482
      %v2484 = vpop.f32.mrb[0].mxu0
      %v2485 = vadd.f32 0.0, %v2484
      %v2486 = vpop.f32.mrb[0].mxu0
      %v2487 = vadd.f32 0.0, %v2486
      %v2488 = vpop.f32.mrb[0].mxu0
      %v2489 = vadd.f32 0.0, %v2488
      %2490 = vmatprep.mubr.bf16.mxu0 0
      %2491 = vmatmul.mubr.bf16.gmra.mrb[0].mxu0 %v987
      %v2492 = vpop.f32.mrb[0].mxu0
      %v2493 = vadd.f32 0.0, %v2492
      %v2494 = vpop.f32.mrb[0].mxu0
      %v2495 = vadd.f32 0.0, %v2494
      %v2496 = vpop.f32.mrb[0].mxu0
      %v2497 = vadd.f32 0.0, %v2496
      %v2498 = vpop.f32.mrb[0].mxu0
      %v2499 = vadd.f32 0.0, %v2498
      %2500 = vmatprep.mubr.bf16.mxu0 0
      %2501 = vmatmul.mubr.bf16.gmra.mrb[0].mxu0 %v990
      %v2502 = vpop.f32.mrb[0].mxu0
      %v2503 = vadd.f32 0.0, %v2502
      %v2504 = vpop.f32.mrb[0].mxu0
      %v2505 = vadd.f32 0.0, %v2504
      %v2506 = vpop.f32.mrb[0].mxu0
      %v2507 = vadd.f32 0.0, %v2506
      %v2508 = vpop.f32.mrb[0].mxu0
      %v2509 = vadd.f32 0.0, %v2508
      %2510 = vmatprep.mubr.bf16.mxu0 0
      %2511 = vmatmul.mubr.bf16.gmra.mrb[0].mxu0 %v993
      %v2512 = vpop.f32.mrb[0].mxu0
      %v2513 = vadd.f32 0.0, %v2512
      %v2514 = vpop.f32.mrb[0].mxu0
      %v2515 = vadd.f32 0.0, %v2514
      %v2516 = vpop.f32.mrb[0].mxu0
      %v2517 = vadd.f32 0.0, %v2516
      %v2518 = vpop.f32.mrb[0].mxu0
      %v2519 = vadd.f32 0.0, %v2518
      %2520 = vmatprep.mubr.bf16.mxu0 0
      %2521 = vmatmul.mubr.bf16.gmra.mrb[0].mxu0 %v996
      %v2522 = vpop.f32.mrb[0].mxu0
      %v2523 = vadd.f32 0.0, %v2522
      %v2524 = vpop.f32.mrb[0].mxu0
      %v2525 = vadd.f32 0.0, %v2524
      %v2526 = vpop.f32.mrb[0].mxu0
      %v2527 = vadd.f32 0.0, %v2526
      %v2528 = vpop.f32.mrb[0].mxu0
      %v2529 = vadd.f32 0.0, %v2528
      %2530 = vmatprep.mubr.bf16.mxu0 0
      %2531 = vmatmul.mubr.bf16.gmra.mrb[0].mxu0 %v999
      %v2532 = vpop.f32.mrb[0].mxu0
      %v2533 = vadd.f32 0.0, %v2532
      %v2534 = vpop.f32.mrb[0].mxu0
      %v2535 = vadd.f32 0.0, %v2534
      %v2536 = vpop.f32.mrb[0].mxu0
      %v2537 = vadd.f32 0.0, %v2536
      %v2538 = vpop.f32.mrb[0].mxu0
      %v2539 = vadd.f32 0.0, %v2538
      %2540 = vmatprep.mubr.bf16.mxu0 0
      %2541 = vmatmul.mubr.bf16.gmra.mrb[0].mxu0 %v1002
      %v2542 = vpop.f32.mrb[0].mxu0
      %v2543 = vadd.f32 0.0, %v2542
      %v2544 = vpop.f32.mrb[0].mxu0
      %v2545 = vadd.f32 0.0, %v2544
      %v2546 = vpop.f32.mrb[0].mxu0
      %v2547 = vadd.f32 0.0, %v2546
      %v2548 = vpop.f32.mrb[0].mxu0
      %v2549 = vadd.f32 0.0, %v2548
      %2550 = vmatprep.mubr.bf16.mxu0 0
      %2551 = vmatmul.mubr.bf16.gmra.mrb[0].mxu0 %v1005
      %v2552 = vpop.f32.mrb[0].mxu0
      %v2553 = vadd.f32 0.0, %v2552
      %v2554 = vpop.f32.mrb[0].mxu0
      %v2555 = vadd.f32 0.0, %v2554
      %v2556 = vpop.f32.mrb[0].mxu0
      %v2557 = vadd.f32 0.0, %v2556
      %v2558 = vpop.f32.mrb[0].mxu0
      %v2559 = vadd.f32 0.0, %v2558
      %2560 = vmatprep.mubr.bf16.mxu0 0
      %2561 = vmatmul.mubr.bf16.gmra.mrb[0].mxu0 %v1008
      %v2562 = vpop.f32.mrb[0].mxu0
      %v2563 = vadd.f32 0.0, %v2562
      %v2564 = vpop.f32.mrb[0].mxu0
      %v2565 = vadd.f32 0.0, %v2564
      %v2566 = vpop.f32.mrb[0].mxu0
      %v2567 = vadd.f32 0.0, %v2566
      %v2568 = vpop.f32.mrb[0].mxu0
      %v2569 = vadd.f32 0.0, %v2568
      %2570 = vmatprep.mubr.bf16.mxu0 0
      %2571 = vmatmul.mubr.bf16.gmra.mrb[0].mxu0 %v1011
      %v2572 = vpop.f32.mrb[0].mxu0
      %v2573 = vadd.f32 0.0, %v2572
      %v2574 = vpop.f32.mrb[0].mxu0
      %v2575 = vadd.f32 0.0, %v2574
      %v2576 = vpop.f32.mrb[0].mxu0
      %v2577 = vadd.f32 0.0, %v2576
      %v2578 = vpop.f32.mrb[0].mxu0
      %v2579 = vadd.f32 0.0, %v2578
      %2580 = vmatprep.mubr.bf16.mxu0 0
      %2581 = vmatmul.mubr.bf16.gmra.mrb[0].mxu0 %v1014
      %v2582 = vpop.f32.mrb[0].mxu0
      %v2583 = vadd.f32 0.0, %v2582
      %v2584 = vpop.f32.mrb[0].mxu0
      %v2585 = vadd.f32 0.0, %v2584
      %v2586 = vpop.f32.mrb[0].mxu0
      %v2587 = vadd.f32 0.0, %v2586
      %v2588 = vpop.f32.mrb[0].mxu0
      %v2589 = vadd.f32 0.0, %v2588
      %2590 = vmatprep.mubr.bf16.mxu0 0
      %2591 = vmatmul.mubr.bf16.gmra.mrb[0].mxu0 %v1017
      %v2592 = vpop.f32.mrb[0].mxu0
      %v2593 = vadd.f32 0.0, %v2592
      %v2594 = vpop.f32.mrb[0].mxu0
      %v2595 = vadd.f32 0.0, %v2594
      %v2596 = vpop.f32.mrb[0].mxu0
      %v2597 = vadd.f32 0.0, %v2596
      %v2598 = vpop.f32.mrb[0].mxu0
      %v2599 = vadd.f32 0.0, %v2598
      %2600 = vmatprep.mubr.bf16.mxu0 0
      %2601 = vmatmul.mubr.bf16.gmra.mrb[0].mxu0 %v1020
      %v2602 = vpop.f32.mrb[0].mxu0
      %v2603 = vadd.f32 0.0, %v2602
      %v2604 = vpop.f32.mrb[0].mxu0
      %v2605 = vadd.f32 0.0, %v2604
      %v2606 = vpop.f32.mrb[0].mxu0
      %v2607 = vadd.f32 0.0, %v2606
      %v2608 = vpop.f32.mrb[0].mxu0
      %v2609 = vadd.f32 0.0, %v2608
      %2610 = vmatprep.mubr.bf16.mxu0 0
      %2611 = vmatmul.mubr.bf16.gmra.mrb[0].mxu0 %v1023
      %v2612 = vpop.f32.mrb[0].mxu0
      %v2613 = vadd.f32 0.0, %v2612
      %v2614 = vpop.f32.mrb[0].mxu0
      %v2615 = vadd.f32 0.0, %v2614
      %v2616 = vpop.f32.mrb[0].mxu0
      %v2617 = vadd.f32 0.0, %v2616
      %v2618 = vpop.f32.mrb[0].mxu0
      %v2619 = vadd.f32 0.0, %v2618
      %2620 = vmatprep.mubr.bf16.mxu0 0
      %2621 = vmatmul.mubr.bf16.gmra.mrb[0].mxu0 %v1026
      %v2622 = vpop.f32.mrb[0].mxu0
      %v2623 = vadd.f32 0.0, %v2622
      %v2624 = vpop.f32.mrb[0].mxu0
      %v2625 = vadd.f32 0.0, %v2624
      %v2626 = vpop.f32.mrb[0].mxu0
      %v2627 = vadd.f32 0.0, %v2626
      %v2628 = vpop.f32.mrb[0].mxu0
      %v2629 = vadd.f32 0.0, %v2628
      %2630 = vmatprep.mubr.bf16.mxu0 0
      %2631 = vmatmul.mubr.bf16.gmra.mrb[0].mxu0 %v1029
      %v2632 = vpop.f32.mrb[0].mxu0
      %v2633 = vadd.f32 0.0, %v2632
      %v2634 = vpop.f32.mrb[0].mxu0
      %v2635 = vadd.f32 0.0, %v2634
      %v2636 = vpop.f32.mrb[0].mxu0
      %v2637 = vadd.f32 0.0, %v2636
      %v2638 = vpop.f32.mrb[0].mxu0
      %v2639 = vadd.f32 0.0, %v2638
      %2640 = vmatprep.mubr.bf16.mxu0 0
      %2641 = vmatmul.mubr.bf16.gmra.mrb[0].mxu0 %v1032
      %v2642 = vpop.f32.mrb[0].mxu0
      %v2643 = vadd.f32 0.0, %v2642
      %v2644 = vpop.f32.mrb[0].mxu0
      %v2645 = vadd.f32 0.0, %v2644
      %v2646 = vpop.f32.mrb[0].mxu0
      %v2647 = vadd.f32 0.0, %v2646
      %v2648 = vpop.f32.mrb[0].mxu0
      %v2649 = vadd.f32 0.0, %v2648
      %2650 = vmatprep.mubr.bf16.mxu0 0
      %2651 = vmatmul.mubr.bf16.gmra.mrb[0].mxu0 %v1035
      %v2652 = vpop.f32.mrb[0].mxu0
      %v2653 = vadd.f32 0.0, %v2652
      %v2654 = vpop.f32.mrb[0].mxu0
      %v2655 = vadd.f32 0.0, %v2654
      %v2656 = vpop.f32.mrb[0].mxu0
      %v2657 = vadd.f32 0.0, %v2656
      %v2658 = vpop.f32.mrb[0].mxu0
      %v2659 = vadd.f32 0.0, %v2658
      %2660 = vmatprep.mubr.bf16.mxu0 0
      %2661 = vmatmul.mubr.bf16.gmra.mrb[0].mxu0 %v1038
      %v2662 = vpop.f32.mrb[0].mxu0
      %v2663 = vadd.f32 0.0, %v2662
      %v2664 = vpop.f32.mrb[0].mxu0
      %v2665 = vadd.f32 0.0, %v2664
      %v2666 = vpop.f32.mrb[0].mxu0
      %v2667 = vadd.f32 0.0, %v2666
      %v2668 = vpop.f32.mrb[0].mxu0
      %v2669 = vadd.f32 0.0, %v2668
      %2670 = vmatprep.mubr.bf16.mxu0 0
      %2671 = vmatmul.mubr.bf16.gmra.mrb[0].mxu0 %v1041
      %v2672 = vpop.f32.mrb[0].mxu0
      %v2673 = vadd.f32 0.0, %v2672
      %v2674 = vpop.f32.mrb[0].mxu0
      %v2675 = vadd.f32 0.0, %v2674
      %v2676 = vpop.f32.mrb[0].mxu0
      %v2677 = vadd.f32 0.0, %v2676
      %v2678 = vpop.f32.mrb[0].mxu0
      %v2679 = vadd.f32 0.0, %v2678
      %2680 = vmatprep.mubr.bf16.mxu0 0
      %2681 = vmatmul.mubr.bf16.gmra.mrb[0].mxu0 %v1044
      %v2682 = vpop.f32.mrb[0].mxu0
      %v2683 = vadd.f32 0.0, %v2682
      %v2684 = vpop.f32.mrb[0].mxu0
      %v2685 = vadd.f32 0.0, %v2684
      %v2686 = vpop.f32.mrb[0].mxu0
      %v2687 = vadd.f32 0.0, %v2686
      %v2688 = vpop.f32.mrb[0].mxu0
      %v2689 = vadd.f32 0.0, %v2688
      %2690 = vmatprep.mubr.bf16.mxu0 0
      %2691 = vmatmul.mubr.bf16.gmra.mrb[0].mxu0 %v1047
      %v2692 = vpop.f32.mrb[0].mxu0
      %v2693 = vadd.f32 0.0, %v2692
      %v2694 = vpop.f32.mrb[0].mxu0
      %v2695 = vadd.f32 0.0, %v2694
      %v2696 = vpop.f32.mrb[0].mxu0
      %v2697 = vadd.f32 0.0, %v2696
      %v2698 = vpop.f32.mrb[0].mxu0
      %v2699 = vadd.f32 0.0, %v2698
      %2700 = vmatprep.mubr.bf16.mxu0 0
      %2701 = vmatmul.mubr.bf16.gmra.mrb[0].mxu0 %v1050
      %v2702 = vpop.f32.mrb[0].mxu0
      %v2703 = vadd.f32 0.0, %v2702
      %v2704 = vpop.f32.mrb[0].mxu0
      %v2705 = vadd.f32 0.0, %v2704
      %v2706 = vpop.f32.mrb[0].mxu0
      %v2707 = vadd.f32 0.0, %v2706
      %v2708 = vpop.f32.mrb[0].mxu0
      %v2709 = vadd.f32 0.0, %v2708
      %2710 = vmatprep.mubr.bf16.mxu0 0
      %2711 = vmatmul.mubr.bf16.gmra.mrb[0].mxu0 %v1053
      %v2712 = vpop.f32.mrb[0].mxu0
      %v2713 = vadd.f32 0.0, %v2712
      %v2714 = vpop.f32.mrb[0].mxu0
      %v2715 = vadd.f32 0.0, %v2714
      %v2716 = vpop.f32.mrb[0].mxu0
      %v2717 = vadd.f32 0.0, %v2716
      %v2718 = vpop.f32.mrb[0].mxu0
      %v2719 = vadd.f32 0.0, %v2718
      %2720 = vmatprep.mubr.bf16.mxu0 0
      %2721 = vmatmul.mubr.bf16.gmra.mrb[0].mxu0 %v1056
      %v2722 = vpop.f32.mrb[0].mxu0
      %v2723 = vadd.f32 0.0, %v2722
      %v2724 = vpop.f32.mrb[0].mxu0
      %v2725 = vadd.f32 0.0, %v2724
      %v2726 = vpop.f32.mrb[0].mxu0
      %v2727 = vadd.f32 0.0, %v2726
      %v2728 = vpop.f32.mrb[0].mxu0
      %v2729 = vadd.f32 0.0, %v2728
      %2730 = vmatprep.mubr.bf16.mxu0 0
      %2731 = vmatmul.mubr.bf16.gmra.mrb[0].mxu0 %v1059
      %v2732 = vpop.f32.mrb[0].mxu0
      %v2733 = vadd.f32 0.0, %v2732
      %v2734 = vpop.f32.mrb[0].mxu0
      %v2735 = vadd.f32 0.0, %v2734
      %v2736 = vpop.f32.mrb[0].mxu0
      %v2737 = vadd.f32 0.0, %v2736
      %v2738 = vpop.f32.mrb[0].mxu0
      %v2739 = vadd.f32 0.0, %v2738
      %2740 = vmatprep.mubr.bf16.mxu0 0
      %2741 = vmatmul.mubr.bf16.gmra.mrb[0].mxu0 %v1062
      %v2742 = vpop.f32.mrb[0].mxu0
      %v2743 = vadd.f32 0.0, %v2742
      %v2744 = vpop.f32.mrb[0].mxu0
      %v2745 = vadd.f32 0.0, %v2744
      %v2746 = vpop.f32.mrb[0].mxu0
      %v2747 = vadd.f32 0.0, %v2746
      %v2748 = vpop.f32.mrb[0].mxu0
      %v2749 = vadd.f32 0.0, %v2748
      %2750 = vmatprep.mubr.bf16.mxu0 0
      %2751 = vmatmul.mubr.bf16.gmra.mrb[0].mxu0 %v1065
      %v2752 = vpop.f32.mrb[0].mxu0
      %v2753 = vadd.f32 0.0, %v2752
      %v2754 = vpop.f32.mrb[0].mxu0
      %v2755 = vadd.f32 0.0, %v2754
      %v2756 = vpop.f32.mrb[0].mxu0
      %v2757 = vadd.f32 0.0, %v2756
      %v2758 = vpop.f32.mrb[0].mxu0
      %v2759 = vadd.f32 0.0, %v2758
      %2760 = vmatprep.mubr.bf16.mxu0 0
      %2761 = vmatmul.mubr.bf16.gmra.mrb[0].mxu0 %v1068
      %v2762 = vpop.f32.mrb[0].mxu0
      %v2763 = vadd.f32 0.0, %v2762
      %v2764 = vpop.f32.mrb[0].mxu0
      %v2765 = vadd.f32 0.0, %v2764
      %v2766 = vpop.f32.mrb[0].mxu0
      %v2767 = vadd.f32 0.0, %v2766
      %v2768 = vpop.f32.mrb[0].mxu0
      %v2769 = vadd.f32 0.0, %v2768
      %2770 = vmatprep.mubr.bf16.mxu0 0
      %2771 = vmatmul.mubr.bf16.gmra.mrb[0].mxu0 %v1071
      %v2772 = vpop.f32.mrb[0].mxu0
      %v2773 = vadd.f32 0.0, %v2772
      %v2774 = vpop.f32.mrb[0].mxu0
      %v2775 = vadd.f32 0.0, %v2774
      %v2776 = vpop.f32.mrb[0].mxu0
      %v2777 = vadd.f32 0.0, %v2776
      %v2778 = vpop.f32.mrb[0].mxu0
      %v2779 = vadd.f32 0.0, %v2778
      %2780 = vmatprep.mubr.bf16.mxu0 0
      %2781 = vmatmul.mubr.bf16.gmra.mrb[0].mxu0 %v1074
      %v2782 = vpop.f32.mrb[0].mxu0
      %v2783 = vadd.f32 0.0, %v2782
      %v2784 = vpop.f32.mrb[0].mxu0
      %v2785 = vadd.f32 0.0, %v2784
      %v2786 = vpop.f32.mrb[0].mxu0
      %v2787 = vadd.f32 0.0, %v2786
      %v2788 = vpop.f32.mrb[0].mxu0
      %v2789 = vadd.f32 0.0, %v2788
      %2790 = vmatprep.mubr.bf16.mxu0 0
      %2791 = vmatmul.mubr.bf16.gmra.mrb[0].mxu0 %v1077
      %v2792 = vpop.f32.mrb[0].mxu0
      %v2793 = vadd.f32 0.0, %v2792
      %v2794 = vpop.f32.mrb[0].mxu0
      %v2795 = vadd.f32 0.0, %v2794
      %v2796 = vpop.f32.mrb[0].mxu0
      %v2797 = vadd.f32 0.0, %v2796
      %v2798 = vpop.f32.mrb[0].mxu0
      %v2799 = vadd.f32 0.0, %v2798
      %2800 = vmatprep.mubr.bf16.mxu0 0
      %2801 = vmatmul.mubr.bf16.gmra.mrb[0].mxu0 %v1080
      %v2802 = vpop.f32.mrb[0].mxu0
      %v2803 = vadd.f32 0.0, %v2802
      %v2804 = vpop.f32.mrb[0].mxu0
      %v2805 = vadd.f32 0.0, %v2804
      %v2806 = vpop.f32.mrb[0].mxu0
      %v2807 = vadd.f32 0.0, %v2806
      %v2808 = vpop.f32.mrb[0].mxu0
      %v2809 = vadd.f32 0.0, %v2808
      %2810 = vmatprep.mubr.bf16.mxu0 0
      %2811 = vmatmul.mubr.bf16.gmra.mrb[0].mxu0 %v1083
      %v2812 = vpop.f32.mrb[0].mxu0
      %v2813 = vadd.f32 0.0, %v2812
      %v2814 = vpop.f32.mrb[0].mxu0
      %v2815 = vadd.f32 0.0, %v2814
      %v2816 = vpop.f32.mrb[0].mxu0
      %v2817 = vadd.f32 0.0, %v2816
      %v2818 = vpop.f32.mrb[0].mxu0
      %v2819 = vadd.f32 0.0, %v2818
      %2820 = vmatprep.mubr.bf16.mxu0 0
      %2821 = vmatmul.mubr.bf16.gmra.mrb[0].mxu0 %v1086
      %v2822 = vpop.f32.mrb[0].mxu0
      %v2823 = vadd.f32 0.0, %v2822
      %v2824 = vpop.f32.mrb[0].mxu0
      %v2825 = vadd.f32 0.0, %v2824
      %v2826 = vpop.f32.mrb[0].mxu0
      %v2827 = vadd.f32 0.0, %v2826
      %v2828 = vpop.f32.mrb[0].mxu0
      %v2829 = vadd.f32 0.0, %v2828
      %2830 = vmatprep.mubr.bf16.mxu0 0
      %2831 = vmatmul.mubr.bf16.gmra.mrb[0].mxu0 %v1089
      %v2832 = vpop.f32.mrb[0].mxu0
      %v2833 = vadd.f32 0.0, %v2832
      %v2834 = vpop.f32.mrb[0].mxu0
      %v2835 = vadd.f32 0.0, %v2834
      %v2836 = vpop.f32.mrb[0].mxu0
      %v2837 = vadd.f32 0.0, %v2836
      %v2838 = vpop.f32.mrb[0].mxu0
      %v2839 = vadd.f32 0.0, %v2838
      %2840 = vmatprep.mubr.bf16.mxu0 0
      %2841 = vmatmul.mubr.bf16.gmra.mrb[0].mxu0 %v1092
      %v2842 = vpop.f32.mrb[0].mxu0
      %v2843 = vadd.f32 0.0, %v2842
      %v2844 = vpop.f32.mrb[0].mxu0
      %v2845 = vadd.f32 0.0, %v2844
      %v2846 = vpop.f32.mrb[0].mxu0
      %v2847 = vadd.f32 0.0, %v2846
      %v2848 = vpop.f32.mrb[0].mxu0
      %v2849 = vadd.f32 0.0, %v2848
      %2850 = vmatprep.mubr.bf16.mxu0 0
      %2851 = vmatmul.mubr.bf16.gmra.mrb[0].mxu0 %v1095
      %v2852 = vpop.f32.mrb[0].mxu0
      %v2853 = vadd.f32 0.0, %v2852
      %v2854 = vpop.f32.mrb[0].mxu0
      %v2855 = vadd.f32 0.0, %v2854
      %v2856 = vpop.f32.mrb[0].mxu0
      %v2857 = vadd.f32 0.0, %v2856
      %v2858 = vpop.f32.mrb[0].mxu0
      %v2859 = vadd.f32 0.0, %v2858
      %2860 = vmatprep.mubr.bf16.mxu0 0
      %2861 = vmatmul.mubr.bf16.gmra.mrb[0].mxu0 %v1098
      %v2862 = vpop.f32.mrb[0].mxu0
      %v2863 = vadd.f32 0.0, %v2862
      %v2864 = vpop.f32.mrb[0].mxu0
      %v2865 = vadd.f32 0.0, %v2864
      %v2866 = vpop.f32.mrb[0].mxu0
      %v2867 = vadd.f32 0.0, %v2866
      %v2868 = vpop.f32.mrb[0].mxu0
      %v2869 = vadd.f32 0.0, %v2868
      %2870 = vmatprep.mubr.bf16.mxu0 0
      %2871 = vmatmul.mubr.bf16.gmra.mrb[0].mxu0 %v1101
      %v2872 = vpop.f32.mrb[0].mxu0
      %v2873 = vadd.f32 0.0, %v2872
      %v2874 = vpop.f32.mrb[0].mxu0
      %v2875 = vadd.f32 0.0, %v2874
      %v2876 = vpop.f32.mrb[0].mxu0
      %v2877 = vadd.f32 0.0, %v2876
      %v2878 = vpop.f32.mrb[0].mxu0
      %v2879 = vadd.f32 0.0, %v2878
      %2880 = vmatprep.mubr.bf16.mxu0 0
      %2881 = vmatmul.mubr.bf16.gmra.mrb[0].mxu0 %v1104
      %v2882 = vpop.f32.mrb[0].mxu0
      %v2883 = vadd.f32 0.0, %v2882
      %v2884 = vpop.f32.mrb[0].mxu0
      %v2885 = vadd.f32 0.0, %v2884
      %v2886 = vpop.f32.mrb[0].mxu0
      %v2887 = vadd.f32 0.0, %v2886
      %v2888 = vpop.f32.mrb[0].mxu0
      %v2889 = vadd.f32 0.0, %v2888
      %2890 = vmatprep.mubr.bf16.mxu0 0
      %2891 = vmatmul.mubr.bf16.gmra.mrb[0].mxu0 %v1107
      %v2892 = vpop.f32.mrb[0].mxu0
      %v2893 = vadd.f32 0.0, %v2892
      %v2894 = vpop.f32.mrb[0].mxu0
      %v2895 = vadd.f32 0.0, %v2894
      %v2896 = vpop.f32.mrb[0].mxu0
      %v2897 = vadd.f32 0.0, %v2896
      %v2898 = vpop.f32.mrb[0].mxu0
      %v2899 = vadd.f32 0.0, %v2898
      %2900 = vmatprep.mubr.bf16.mxu0 0
      %2901 = vmatmul.mubr.bf16.gmra.mrb[0].mxu0 %v1110
      %v2902 = vpop.f32.mrb[0].mxu0
      %v2903 = vadd.f32 0.0, %v2902
      %v2904 = vpop.f32.mrb[0].mxu0
      %v2905 = vadd.f32 0.0, %v2904
      %v2906 = vpop.f32.mrb[0].mxu0
      %v2907 = vadd.f32 0.0, %v2906
      %v2908 = vpop.f32.mrb[0].mxu0
      %v2909 = vadd.f32 0.0, %v2908
      %2910 = vmatprep.mubr.bf16.mxu0 0
      %2911 = vmatmul.mubr.bf16.gmra.mrb[0].mxu0 %v1113
      %v2912 = vpop.f32.mrb[0].mxu0
      %v2913 = vadd.f32 0.0, %v2912
      %v2914 = vpop.f32.mrb[0].mxu0
      %v2915 = vadd.f32 0.0, %v2914
      %v2916 = vpop.f32.mrb[0].mxu0
      %v2917 = vadd.f32 0.0, %v2916
      %v2918 = vpop.f32.mrb[0].mxu0
      %v2919 = vadd.f32 0.0, %v2918
      %2920 = vmatprep.mubr.bf16.mxu0 0
      %2921 = vmatmul.mubr.bf16.gmra.mrb[0].mxu0 %v1116
      %v2922 = vpop.f32.mrb[0].mxu0
      %v2923 = vadd.f32 0.0, %v2922
      %v2924 = vpop.f32.mrb[0].mxu0
      %v2925 = vadd.f32 0.0, %v2924
      %v2926 = vpop.f32.mrb[0].mxu0
      %v2927 = vadd.f32 0.0, %v2926
      %v2928 = vpop.f32.mrb[0].mxu0
      %v2929 = vadd.f32 0.0, %v2928
      %2930 = vmatprep.mubr.bf16.mxu0 0
      %2931 = vmatmul.mubr.bf16.gmra.mrb[0].mxu0 %v1119
      %v2932 = vpop.f32.mrb[0].mxu0
      %v2933 = vadd.f32 0.0, %v2932
      %v2934 = vpop.f32.mrb[0].mxu0
      %v2935 = vadd.f32 0.0, %v2934
      %v2936 = vpop.f32.mrb[0].mxu0
      %v2937 = vadd.f32 0.0, %v2936
      %v2938 = vpop.f32.mrb[0].mxu0
      %v2939 = vadd.f32 0.0, %v2938
      %2940 = vmatprep.mubr.bf16.mxu0 0
      %2941 = vmatmul.mubr.bf16.gmra.mrb[0].mxu0 %v1122
      %v2942 = vpop.f32.mrb[0].mxu0
      %v2943 = vadd.f32 0.0, %v2942
      %v2944 = vpop.f32.mrb[0].mxu0
      %v2945 = vadd.f32 0.0, %v2944
      %v2946 = vpop.f32.mrb[0].mxu0
      %v2947 = vadd.f32 0.0, %v2946
      %v2948 = vpop.f32.mrb[0].mxu0
      %v2949 = vadd.f32 0.0, %v2948
      %2950 = vmatprep.mubr.bf16.mxu0 0
      %2951 = vmatmul.mubr.bf16.gmra.mrb[0].mxu0 %v1125
      %v2952 = vpop.f32.mrb[0].mxu0
      %v2953 = vadd.f32 0.0, %v2952
      %v2954 = vpop.f32.mrb[0].mxu0
      %v2955 = vadd.f32 0.0, %v2954
      %v2956 = vpop.f32.mrb[0].mxu0
      %v2957 = vadd.f32 0.0, %v2956
      %v2958 = vpop.f32.mrb[0].mxu0
      %v2959 = vadd.f32 0.0, %v2958
      %2960 = vmatprep.mubr.bf16.mxu0 0
      %2961 = vmatmul.mubr.bf16.gmra.mrb[0].mxu0 %v1128
      %v2962 = vpop.f32.mrb[0].mxu0
      %v2963 = vadd.f32 0.0, %v2962
      %v2964 = vpop.f32.mrb[0].mxu0
      %v2965 = vadd.f32 0.0, %v2964
      %v2966 = vpop.f32.mrb[0].mxu0
      %v2967 = vadd.f32 0.0, %v2966
      %v2968 = vpop.f32.mrb[0].mxu0
      %v2969 = vadd.f32 0.0, %v2968
      %2970 = vmatprep.mubr.bf16.mxu0 0
      %2971 = vmatmul.mubr.bf16.gmra.mrb[0].mxu0 %v1131
      %v2972 = vpop.f32.mrb[0].mxu0
      %v2973 = vadd.f32 0.0, %v2972
      %v2974 = vpop.f32.mrb[0].mxu0
      %v2975 = vadd.f32 0.0, %v2974
      %v2976 = vpop.f32.mrb[0].mxu0
      %v2977 = vadd.f32 0.0, %v2976
      %v2978 = vpop.f32.mrb[0].mxu0
      %v2979 = vadd.f32 0.0, %v2978
      %2980 = vmatprep.mubr.bf16.mxu0 0
      %2981 = vmatmul.mubr.bf16.gmra.mrb[0].mxu0 %v1134
      %v2982 = vpop.f32.mrb[0].mxu0
      %v2983 = vadd.f32 0.0, %v2982
      %v2984 = vpop.f32.mrb[0].mxu0
      %v2985 = vadd.f32 0.0, %v2984
      %v2986 = vpop.f32.mrb[0].mxu0
      %v2987 = vadd.f32 0.0, %v2986
      %v2988 = vpop.f32.mrb[0].mxu0
      %v2989 = vadd.f32 0.0, %v2988
      %2990 = vmatprep.mubr.bf16.mxu0 0
      %2991 = vmatmul.mubr.bf16.gmra.mrb[0].mxu0 %v1137
      %v2992 = vpop.f32.mrb[0].mxu0
      %v2993 = vadd.f32 0.0, %v2992
      %v2994 = vpop.f32.mrb[0].mxu0
      %v2995 = vadd.f32 0.0, %v2994
      %v2996 = vpop.f32.mrb[0].mxu0
      %v2997 = vadd.f32 0.0, %v2996
      %v2998 = vpop.f32.mrb[0].mxu0
      %v2999 = vadd.f32 0.0, %v2998
      %3000 = vmatprep.mubr.bf16.mxu0 0
      %3001 = vmatmul.mubr.bf16.gmra.mrb[0].mxu0 %v1140
      %v3002 = vpop.f32.mrb[0].mxu0
      %v3003 = vadd.f32 0.0, %v3002
      %v3004 = vpop.f32.mrb[0].mxu0
      %v3005 = vadd.f32 0.0, %v3004
      %v3006 = vpop.f32.mrb[0].mxu0
      %v3007 = vadd.f32 0.0, %v3006
      %v3008 = vpop.f32.mrb[0].mxu0
      %v3009 = vadd.f32 0.0, %v3008
      %3010 = vmatprep.mubr.bf16.mxu0 0
      %3011 = vmatmul.mubr.bf16.gmra.mrb[0].mxu0 %v1143
      %v3012 = vpop.f32.mrb[0].mxu0
      %v3013 = vadd.f32 0.0, %v3012
      %v3014 = vpop.f32.mrb[0].mxu0
      %v3015 = vadd.f32 0.0, %v3014
      %v3016 = vpop.f32.mrb[0].mxu0
      %v3017 = vadd.f32 0.0, %v3016
      %v3018 = vpop.f32.mrb[0].mxu0
      %v3019 = vadd.f32 0.0, %v3018
      %3020 = vmatprep.mubr.bf16.mxu0 0
      %3021 = vmatmul.mubr.bf16.gmra.mrb[0].mxu0 %v1146
      %v3022 = vpop.f32.mrb[0].mxu0
      %v3023 = vadd.f32 0.0, %v3022
      %v3024 = vpop.f32.mrb[0].mxu0
      %v3025 = vadd.f32 0.0, %v3024
      %v3026 = vpop.f32.mrb[0].mxu0
      %v3027 = vadd.f32 0.0, %v3026
      %v3028 = vpop.f32.mrb[0].mxu0
      %v3029 = vadd.f32 0.0, %v3028
      %3030 = vmatprep.mubr.bf16.mxu0 0
      %3031 = vmatmul.mubr.bf16.gmra.mrb[0].mxu0 %v1149
      %v3032 = vpop.f32.mrb[0].mxu0
      %v3033 = vadd.f32 0.0, %v3032
      %v3034 = vpop.f32.mrb[0].mxu0
      %v3035 = vadd.f32 0.0, %v3034
      %v3036 = vpop.f32.mrb[0].mxu0
      %v3037 = vadd.f32 0.0, %v3036
      %v3038 = vpop.f32.mrb[0].mxu0
      %v3039 = vadd.f32 0.0, %v3038
      %3040 = vmatprep.mubr.bf16.mxu0 0
      %3041 = vmatmul.mubr.bf16.gmra.mrb[0].mxu0 %v1152
      %v3042 = vpop.f32.mrb[0].mxu0
      %v3043 = vadd.f32 0.0, %v3042
      %v3044 = vpop.f32.mrb[0].mxu0
      %v3045 = vadd.f32 0.0, %v3044
      %v3046 = vpop.f32.mrb[0].mxu0
      %v3047 = vadd.f32 0.0, %v3046
      %v3048 = vpop.f32.mrb[0].mxu0
      %v3049 = vadd.f32 0.0, %v3048
      %3050 = vmatprep.mubr.bf16.mxu0 0
      %3051 = vmatmul.mubr.bf16.gmra.mrb[0].mxu0 %v1155
      %v3052 = vpop.f32.mrb[0].mxu0
      %v3053 = vadd.f32 0.0, %v3052
      %v3054 = vpop.f32.mrb[0].mxu0
      %v3055 = vadd.f32 0.0, %v3054
      %v3056 = vpop.f32.mrb[0].mxu0
      %v3057 = vadd.f32 0.0, %v3056
      %v3058 = vpop.f32.mrb[0].mxu0
      %v3059 = vadd.f32 0.0, %v3058
      %3060 = vmatprep.mubr.bf16.mxu0 0
      %3061 = vmatmul.mubr.bf16.gmra.mrb[0].mxu0 %v1158
      %v3062 = vpop.f32.mrb[0].mxu0
      %v3063 = vadd.f32 0.0, %v3062
      %v3064 = vpop.f32.mrb[0].mxu0
      %v3065 = vadd.f32 0.0, %v3064
      %v3066 = vpop.f32.mrb[0].mxu0
      %v3067 = vadd.f32 0.0, %v3066
      %v3068 = vpop.f32.mrb[0].mxu0
      %v3069 = vadd.f32 0.0, %v3068
      %3070 = vmatprep.mubr.bf16.mxu0 0
      %3071 = vmatmul.mubr.bf16.gmra.mrb[0].mxu0 %v1161
      %v3072 = vpop.f32.mrb[0].mxu0
      %v3073 = vadd.f32 0.0, %v3072
      %v3074 = vpop.f32.mrb[0].mxu0
      %v3075 = vadd.f32 0.0, %v3074
      %v3076 = vpop.f32.mrb[0].mxu0
      %v3077 = vadd.f32 0.0, %v3076
      %v3078 = vpop.f32.mrb[0].mxu0
      %v3079 = vadd.f32 0.0, %v3078
      %3080 = vmatprep.mubr.bf16.mxu0 0
      %3081 = vmatmul.mubr.bf16.gmra.mrb[0].mxu0 %v1164
      %v3082 = vpop.f32.mrb[0].mxu0
      %v3083 = vadd.f32 0.0, %v3082
      %v3084 = vpop.f32.mrb[0].mxu0
      %v3085 = vadd.f32 0.0, %v3084
      %v3086 = vpop.f32.mrb[0].mxu0
      %v3087 = vadd.f32 0.0, %v3086
      %v3088 = vpop.f32.mrb[0].mxu0
      %v3089 = vadd.f32 0.0, %v3088
      %3090 = vmatprep.mubr.bf16.mxu0 0
      %3091 = vmatmul.mubr.bf16.gmra.mrb[0].mxu0 %v1167
      %v3092 = vpop.f32.mrb[0].mxu0
      %v3093 = vadd.f32 0.0, %v3092
      %v3094 = vpop.f32.mrb[0].mxu0
      %v3095 = vadd.f32 0.0, %v3094
      %v3096 = vpop.f32.mrb[0].mxu0
      %v3097 = vadd.f32 0.0, %v3096
      %v3098 = vpop.f32.mrb[0].mxu0
      %v3099 = vadd.f32 0.0, %v3098
      %3100 = vdwg.mxu0
      %v3101 = vmax.f32 %v2463, 0.0
      %v3102 = vmax.f32 %v2465, 0.0
      %v3103 = vmax.f32 %v2467, 0.0
      %v3104 = vmax.f32 %v2469, 0.0
      %v3105 = vmax.f32 %v2473, 0.0
      %v3106 = vmax.f32 %v2475, 0.0
      %v3107 = vmax.f32 %v2477, 0.0
      %v3108 = vmax.f32 %v2479, 0.0
      %v3109 = vmax.f32 %v2483, 0.0
      %v3110 = vmax.f32 %v2485, 0.0
      %v3111 = vmax.f32 %v2487, 0.0
      %v3112 = vmax.f32 %v2489, 0.0
      %v3113 = vmax.f32 %v2493, 0.0
      %v3114 = vmax.f32 %v2495, 0.0
      %v3115 = vmax.f32 %v2497, 0.0
      %v3116 = vmax.f32 %v2499, 0.0
      %v3117 = vmax.f32 %v2503, 0.0
      %v3118 = vmax.f32 %v2505, 0.0
      %v3119 = vmax.f32 %v2507, 0.0
      %v3120 = vmax.f32 %v2509, 0.0
      %v3121 = vmax.f32 %v2513, 0.0
      %v3122 = vmax.f32 %v2515, 0.0
      %v3123 = vmax.f32 %v2517, 0.0
      %v3124 = vmax.f32 %v2519, 0.0
      %v3125 = vmax.f32 %v2523, 0.0
      %v3126 = vmax.f32 %v2525, 0.0
      %v3127 = vmax.f32 %v2527, 0.0
      %v3128 = vmax.f32 %v2529, 0.0
      %v3129 = vmax.f32 %v2533, 0.0
      %v3130 = vmax.f32 %v2535, 0.0
      %v3131 = vmax.f32 %v2537, 0.0
      %v3132 = vmax.f32 %v2539, 0.0
      %v3133 = vmax.f32 %v2543, 0.0
      %v3134 = vmax.f32 %v2545, 0.0
      %v3135 = vmax.f32 %v2547, 0.0
      %v3136 = vmax.f32 %v2549, 0.0
      %v3137 = vmax.f32 %v2553, 0.0
      %v3138 = vmax.f32 %v2555, 0.0
      %v3139 = vmax.f32 %v2557, 0.0
      %v3140 = vmax.f32 %v2559, 0.0
      %v3141 = vmax.f32 %v2563, 0.0
      %v3142 = vmax.f32 %v2565, 0.0
      %v3143 = vmax.f32 %v2567, 0.0
      %v3144 = vmax.f32 %v2569, 0.0
      %v3145 = vmax.f32 %v2573, 0.0
      %v3146 = vmax.f32 %v2575, 0.0
      %v3147 = vmax.f32 %v2577, 0.0
      %v3148 = vmax.f32 %v2579, 0.0
      %v3149 = vmax.f32 %v2583, 0.0
      %v3150 = vmax.f32 %v2585, 0.0
      %v3151 = vmax.f32 %v2587, 0.0
      %v3152 = vmax.f32 %v2589, 0.0
      %v3153 = vmax.f32 %v2593, 0.0
      %v3154 = vmax.f32 %v2595, 0.0
      %v3155 = vmax.f32 %v2597, 0.0
      %v3156 = vmax.f32 %v2599, 0.0
      %v3157 = vmax.f32 %v2603, 0.0
      %v3158 = vmax.f32 %v2605, 0.0
      %v3159 = vmax.f32 %v2607, 0.0
      %v3160 = vmax.f32 %v2609, 0.0
      %v3161 = vmax.f32 %v2613, 0.0
      %v3162 = vmax.f32 %v2615, 0.0
      %v3163 = vmax.f32 %v2617, 0.0
      %v3164 = vmax.f32 %v2619, 0.0
      %v3165 = vmax.f32 %v2623, 0.0
      %v3166 = vmax.f32 %v2625, 0.0
      %v3167 = vmax.f32 %v2627, 0.0
      %v3168 = vmax.f32 %v2629, 0.0
      %v3169 = vmax.f32 %v2633, 0.0
      %v3170 = vmax.f32 %v2635, 0.0
      %v3171 = vmax.f32 %v2637, 0.0
      %v3172 = vmax.f32 %v2639, 0.0
      %v3173 = vmax.f32 %v2643, 0.0
      %v3174 = vmax.f32 %v2645, 0.0
      %v3175 = vmax.f32 %v2647, 0.0
      %v3176 = vmax.f32 %v2649, 0.0
      %v3177 = vmax.f32 %v2653, 0.0
      %v3178 = vmax.f32 %v2655, 0.0
      %v3179 = vmax.f32 %v2657, 0.0
      %v3180 = vmax.f32 %v2659, 0.0
      %v3181 = vmax.f32 %v2663, 0.0
      %v3182 = vmax.f32 %v2665, 0.0
      %v3183 = vmax.f32 %v2667, 0.0
      %v3184 = vmax.f32 %v2669, 0.0
      %v3185 = vmax.f32 %v2673, 0.0
      %v3186 = vmax.f32 %v2675, 0.0
      %v3187 = vmax.f32 %v2677, 0.0
      %v3188 = vmax.f32 %v2679, 0.0
      %v3189 = vmax.f32 %v2683, 0.0
      %v3190 = vmax.f32 %v2685, 0.0
      %v3191 = vmax.f32 %v2687, 0.0
      %v3192 = vmax.f32 %v2689, 0.0
      %v3193 = vmax.f32 %v2693, 0.0
      %v3194 = vmax.f32 %v2695, 0.0
      %v3195 = vmax.f32 %v2697, 0.0
      %v3196 = vmax.f32 %v2699, 0.0
      %v3197 = vmax.f32 %v2703, 0.0
      %v3198 = vmax.f32 %v2705, 0.0
      %v3199 = vmax.f32 %v2707, 0.0
      %v3200 = vmax.f32 %v2709, 0.0
      %v3201 = vmax.f32 %v2713, 0.0
      %v3202 = vmax.f32 %v2715, 0.0
      %v3203 = vmax.f32 %v2717, 0.0
      %v3204 = vmax.f32 %v2719, 0.0
      %v3205 = vmax.f32 %v2723, 0.0
      %v3206 = vmax.f32 %v2725, 0.0
      %v3207 = vmax.f32 %v2727, 0.0
      %v3208 = vmax.f32 %v2729, 0.0
      %v3209 = vmax.f32 %v2733, 0.0
      %v3210 = vmax.f32 %v2735, 0.0
      %v3211 = vmax.f32 %v2737, 0.0
      %v3212 = vmax.f32 %v2739, 0.0
      %v3213 = vmax.f32 %v2743, 0.0
      %v3214 = vmax.f32 %v2745, 0.0
      %v3215 = vmax.f32 %v2747, 0.0
      %v3216 = vmax.f32 %v2749, 0.0
      %v3217 = vmax.f32 %v2753, 0.0
      %v3218 = vmax.f32 %v2755, 0.0
      %v3219 = vmax.f32 %v2757, 0.0
      %v3220 = vmax.f32 %v2759, 0.0
      %v3221 = vmax.f32 %v2763, 0.0
      %v3222 = vmax.f32 %v2765, 0.0
      %v3223 = vmax.f32 %v2767, 0.0
      %v3224 = vmax.f32 %v2769, 0.0
      %v3225 = vmax.f32 %v2773, 0.0
      %v3226 = vmax.f32 %v2775, 0.0
      %v3227 = vmax.f32 %v2777, 0.0
      %v3228 = vmax.f32 %v2779, 0.0
      %v3229 = vmax.f32 %v2783, 0.0
      %v3230 = vmax.f32 %v2785, 0.0
      %v3231 = vmax.f32 %v2787, 0.0
      %v3232 = vmax.f32 %v2789, 0.0
      %v3233 = vmax.f32 %v2793, 0.0
      %v3234 = vmax.f32 %v2795, 0.0
      %v3235 = vmax.f32 %v2797, 0.0
      %v3236 = vmax.f32 %v2799, 0.0
      %v3237 = vmax.f32 %v2803, 0.0
      %v3238 = vmax.f32 %v2805, 0.0
      %v3239 = vmax.f32 %v2807, 0.0
      %v3240 = vmax.f32 %v2809, 0.0
      %v3241 = vmax.f32 %v2813, 0.0
      %v3242 = vmax.f32 %v2815, 0.0
      %v3243 = vmax.f32 %v2817, 0.0
      %v3244 = vmax.f32 %v2819, 0.0
      %v3245 = vmax.f32 %v2823, 0.0
      %v3246 = vmax.f32 %v2825, 0.0
      %v3247 = vmax.f32 %v2827, 0.0
      %v3248 = vmax.f32 %v2829, 0.0
      %v3249 = vmax.f32 %v2833, 0.0
      %v3250 = vmax.f32 %v2835, 0.0
      %v3251 = vmax.f32 %v2837, 0.0
      %v3252 = vmax.f32 %v2839, 0.0
      %v3253 = vmax.f32 %v2843, 0.0
      %v3254 = vmax.f32 %v2845, 0.0
      %v3255 = vmax.f32 %v2847, 0.0
      %v3256 = vmax.f32 %v2849, 0.0
      %v3257 = vmax.f32 %v2853, 0.0
      %v3258 = vmax.f32 %v2855, 0.0
      %v3259 = vmax.f32 %v2857, 0.0
      %v3260 = vmax.f32 %v2859, 0.0
      %v3261 = vmax.f32 %v2863, 0.0
      %v3262 = vmax.f32 %v2865, 0.0
      %v3263 = vmax.f32 %v2867, 0.0
      %v3264 = vmax.f32 %v2869, 0.0
      %v3265 = vmax.f32 %v2873, 0.0
      %v3266 = vmax.f32 %v2875, 0.0
      %v3267 = vmax.f32 %v2877, 0.0
      %v3268 = vmax.f32 %v2879, 0.0
      %v3269 = vmax.f32 %v2883, 0.0
      %v3270 = vmax.f32 %v2885, 0.0
      %v3271 = vmax.f32 %v2887, 0.0
      %v3272 = vmax.f32 %v2889, 0.0
      %v3273 = vmax.f32 %v2893, 0.0
      %v3274 = vmax.f32 %v2895, 0.0
      %v3275 = vmax.f32 %v2897, 0.0
      %v3276 = vmax.f32 %v2899, 0.0
      %v3277 = vmax.f32 %v2903, 0.0
      %v3278 = vmax.f32 %v2905, 0.0
      %v3279 = vmax.f32 %v2907, 0.0
      %v3280 = vmax.f32 %v2909, 0.0
      %v3281 = vmax.f32 %v2913, 0.0
      %v3282 = vmax.f32 %v2915, 0.0
      %v3283 = vmax.f32 %v2917, 0.0
      %v3284 = vmax.f32 %v2919, 0.0
      %v3285 = vmax.f32 %v2923, 0.0
      %v3286 = vmax.f32 %v2925, 0.0
      %v3287 = vmax.f32 %v2927, 0.0
      %v3288 = vmax.f32 %v2929, 0.0
      %v3289 = vmax.f32 %v2933, 0.0
      %v3290 = vmax.f32 %v2935, 0.0
      %v3291 = vmax.f32 %v2937, 0.0
      %v3292 = vmax.f32 %v2939, 0.0
      %v3293 = vmax.f32 %v2943, 0.0
      %v3294 = vmax.f32 %v2945, 0.0
      %v3295 = vmax.f32 %v2947, 0.0
      %v3296 = vmax.f32 %v2949, 0.0
      %v3297 = vmax.f32 %v2953, 0.0
      %v3298 = vmax.f32 %v2955, 0.0
      %v3299 = vmax.f32 %v2957, 0.0
      %v3300 = vmax.f32 %v2959, 0.0
      %v3301 = vmax.f32 %v2963, 0.0
      %v3302 = vmax.f32 %v2965, 0.0
      %v3303 = vmax.f32 %v2967, 0.0
      %v3304 = vmax.f32 %v2969, 0.0
      %v3305 = vmax.f32 %v2973, 0.0
      %v3306 = vmax.f32 %v2975, 0.0
      %v3307 = vmax.f32 %v2977, 0.0
      %v3308 = vmax.f32 %v2979, 0.0
      %v3309 = vmax.f32 %v2983, 0.0
      %v3310 = vmax.f32 %v2985, 0.0
      %v3311 = vmax.f32 %v2987, 0.0
      %v3312 = vmax.f32 %v2989, 0.0
      %v3313 = vmax.f32 %v2993, 0.0
      %v3314 = vmax.f32 %v2995, 0.0
      %v3315 = vmax.f32 %v2997, 0.0
      %v3316 = vmax.f32 %v2999, 0.0
      %v3317 = vmax.f32 %v3003, 0.0
      %v3318 = vmax.f32 %v3005, 0.0
      %v3319 = vmax.f32 %v3007, 0.0
      %v3320 = vmax.f32 %v3009, 0.0
      %v3321 = vmax.f32 %v3013, 0.0
      %v3322 = vmax.f32 %v3015, 0.0
      %v3323 = vmax.f32 %v3017, 0.0
      %v3324 = vmax.f32 %v3019, 0.0
      %v3325 = vmax.f32 %v3023, 0.0
      %v3326 = vmax.f32 %v3025, 0.0
      %v3327 = vmax.f32 %v3027, 0.0
      %v3328 = vmax.f32 %v3029, 0.0
      %v3329 = vmax.f32 %v3033, 0.0
      %v3330 = vmax.f32 %v3035, 0.0
      %v3331 = vmax.f32 %v3037, 0.0
      %v3332 = vmax.f32 %v3039, 0.0
      %v3333 = vmax.f32 %v3043, 0.0
      %v3334 = vmax.f32 %v3045, 0.0
      %v3335 = vmax.f32 %v3047, 0.0
      %v3336 = vmax.f32 %v3049, 0.0
      %v3337 = vmax.f32 %v3053, 0.0
      %v3338 = vmax.f32 %v3055, 0.0
      %v3339 = vmax.f32 %v3057, 0.0
      %v3340 = vmax.f32 %v3059, 0.0
      %v3341 = vmax.f32 %v3063, 0.0
      %v3342 = vmax.f32 %v3065, 0.0
      %v3343 = vmax.f32 %v3067, 0.0
      %v3344 = vmax.f32 %v3069, 0.0
      %v3345 = vmax.f32 %v3073, 0.0
      %v3346 = vmax.f32 %v3075, 0.0
      %v3347 = vmax.f32 %v3077, 0.0
      %v3348 = vmax.f32 %v3079, 0.0
      %v3349 = vmax.f32 %v3083, 0.0
      %v3350 = vmax.f32 %v3085, 0.0
      %v3351 = vmax.f32 %v3087, 0.0
      %v3352 = vmax.f32 %v3089, 0.0
      %v3353 = vmax.f32 %v3093, 0.0
      %v3354 = vmax.f32 %v3095, 0.0
      %v3355 = vmax.f32 %v3097, 0.0
      %v3356 = vmax.f32 %v3099, 0.0
      %v3357 = vadd.f32 %v3101, %v3103
      %v3358 = vadd.f32 %v3357, %v3105
      %v3359 = vadd.f32 %v3358, %v3107
      %v3360 = vadd.f32 %v3359, %v3109
      %v3361 = vadd.f32 %v3360, %v3111
      %v3362 = vadd.f32 %v3361, %v3113
      %v3363 = vadd.f32 %v3362, %v3115
      %v3364 = vadd.f32 %v3363, %v3117
      %v3365 = vadd.f32 %v3364, %v3119
      %v3366 = vadd.f32 %v3365, %v3121
      %v3367 = vadd.f32 %v3366, %v3123
      %v3368 = vadd.f32 %v3367, %v3125
      %v3369 = vadd.f32 %v3368, %v3127
      %v3370 = vadd.f32 %v3369, %v3129
      %v3371 = vadd.f32 %v3370, %v3131
      %v3372 = vadd.f32 %v3371, %v3133
      %v3373 = vadd.f32 %v3372, %v3135
      %v3374 = vadd.f32 %v3373, %v3137
      %v3375 = vadd.f32 %v3374, %v3139
      %v3376 = vadd.f32 %v3375, %v3141
      %v3377 = vadd.f32 %v3376, %v3143
      %v3378 = vadd.f32 %v3377, %v3145
      %v3379 = vadd.f32 %v3378, %v3147
      %v3380 = vadd.f32 %v3379, %v3149
      %v3381 = vadd.f32 %v3380, %v3151
      %v3382 = vadd.f32 %v3381, %v3153
      %v3383 = vadd.f32 %v3382, %v3155
      %v3384 = vadd.f32 %v3383, %v3157
      %v3385 = vadd.f32 %v3384, %v3159
      %v3386 = vadd.f32 %v3385, %v3161
      %v3387 = vadd.f32 %v3386, %v3163
      %v3388 = vrot.slane %v3387, 4
      %v3389 = vadd.f32 %v3387, %v3388
      %v3390 = vrot.slane %v3389, 2
      %v3391 = vadd.f32 %v3389, %v3390
      %v3392 = vrot.slane %v3391, 1
      %v3393 = vadd.f32 %v3391, %v3392
      %v3394 = vadd.f32 %v3102, %v3104
      %v3395 = vadd.f32 %v3394, %v3106
      %v3396 = vadd.f32 %v3395, %v3108
      %v3397 = vadd.f32 %v3396, %v3110
      %v3398 = vadd.f32 %v3397, %v3112
      %v3399 = vadd.f32 %v3398, %v3114
      %v3400 = vadd.f32 %v3399, %v3116
      %v3401 = vadd.f32 %v3400, %v3118
      %v3402 = vadd.f32 %v3401, %v3120
      %v3403 = vadd.f32 %v3402, %v3122
      %v3404 = vadd.f32 %v3403, %v3124
      %v3405 = vadd.f32 %v3404, %v3126
      %v3406 = vadd.f32 %v3405, %v3128
      %v3407 = vadd.f32 %v3406, %v3130
      %v3408 = vadd.f32 %v3407, %v3132
      %v3409 = vadd.f32 %v3408, %v3134
      %v3410 = vadd.f32 %v3409, %v3136
      %v3411 = vadd.f32 %v3410, %v3138
      %v3412 = vadd.f32 %v3411, %v3140
      %v3413 = vadd.f32 %v3412, %v3142
      %v3414 = vadd.f32 %v3413, %v3144
      %v3415 = vadd.f32 %v3414, %v3146
      %v3416 = vadd.f32 %v3415, %v3148
      %v3417 = vadd.f32 %v3416, %v3150
      %v3418 = vadd.f32 %v3417, %v3152
      %v3419 = vadd.f32 %v3418, %v3154
      %v3420 = vadd.f32 %v3419, %v3156
      %v3421 = vadd.f32 %v3420, %v3158
      %v3422 = vadd.f32 %v3421, %v3160
      %v3423 = vadd.f32 %v3422, %v3162
      %v3424 = vadd.f32 %v3423, %v3164
      %v3425 = vrot.slane %v3424, 4
      %v3426 = vadd.f32 %v3424, %v3425
      %v3427 = vrot.slane %v3426, 2
      %v3428 = vadd.f32 %v3426, %v3427
      %v3429 = vrot.slane %v3428, 1
      %v3430 = vadd.f32 %v3428, %v3429
      %v3431 = vadd.f32 %v3165, %v3167
      %v3432 = vadd.f32 %v3431, %v3169
      %v3433 = vadd.f32 %v3432, %v3171
      %v3434 = vadd.f32 %v3433, %v3173
      %v3435 = vadd.f32 %v3434, %v3175
      %v3436 = vadd.f32 %v3435, %v3177
      %v3437 = vadd.f32 %v3436, %v3179
      %v3438 = vadd.f32 %v3437, %v3181
      %v3439 = vadd.f32 %v3438, %v3183
      %v3440 = vadd.f32 %v3439, %v3185
      %v3441 = vadd.f32 %v3440, %v3187
      %v3442 = vadd.f32 %v3441, %v3189
      %v3443 = vadd.f32 %v3442, %v3191
      %v3444 = vadd.f32 %v3443, %v3193
      %v3445 = vadd.f32 %v3444, %v3195
      %v3446 = vadd.f32 %v3445, %v3197
      %v3447 = vadd.f32 %v3446, %v3199
      %v3448 = vadd.f32 %v3447, %v3201
      %v3449 = vadd.f32 %v3448, %v3203
      %v3450 = vadd.f32 %v3449, %v3205
      %v3451 = vadd.f32 %v3450, %v3207
      %v3452 = vadd.f32 %v3451, %v3209
      %v3453 = vadd.f32 %v3452, %v3211
      %v3454 = vadd.f32 %v3453, %v3213
      %v3455 = vadd.f32 %v3454, %v3215
      %v3456 = vadd.f32 %v3455, %v3217
      %v3457 = vadd.f32 %v3456, %v3219
      %v3458 = vadd.f32 %v3457, %v3221
      %v3459 = vadd.f32 %v3458, %v3223
      %v3460 = vadd.f32 %v3459, %v3225
      %v3461 = vadd.f32 %v3460, %v3227
      %v3462 = vrot.slane %v3461, 4
      %v3463 = vadd.f32 %v3461, %v3462
      %v3464 = vrot.slane %v3463, 2
      %v3465 = vadd.f32 %v3463, %v3464
      %v3466 = vrot.slane %v3465, 1
      %v3467 = vadd.f32 %v3465, %v3466
      %v3468 = vadd.f32 %v3166, %v3168
      %v3469 = vadd.f32 %v3468, %v3170
      %v3470 = vadd.f32 %v3469, %v3172
      %v3471 = vadd.f32 %v3470, %v3174
      %v3472 = vadd.f32 %v3471, %v3176
      %v3473 = vadd.f32 %v3472, %v3178
      %v3474 = vadd.f32 %v3473, %v3180
      %v3475 = vadd.f32 %v3474, %v3182
      %v3476 = vadd.f32 %v3475, %v3184
      %v3477 = vadd.f32 %v3476, %v3186
      %v3478 = vadd.f32 %v3477, %v3188
      %v3479 = vadd.f32 %v3478, %v3190
      %v3480 = vadd.f32 %v3479, %v3192
      %v3481 = vadd.f32 %v3480, %v3194
      %v3482 = vadd.f32 %v3481, %v3196
      %v3483 = vadd.f32 %v3482, %v3198
      %v3484 = vadd.f32 %v3483, %v3200
      %v3485 = vadd.f32 %v3484, %v3202
      %v3486 = vadd.f32 %v3485, %v3204
      %v3487 = vadd.f32 %v3486, %v3206
      %v3488 = vadd.f32 %v3487, %v3208
      %v3489 = vadd.f32 %v3488, %v3210
      %v3490 = vadd.f32 %v3489, %v3212
      %v3491 = vadd.f32 %v3490, %v3214
      %v3492 = vadd.f32 %v3491, %v3216
      %v3493 = vadd.f32 %v3492, %v3218
      %v3494 = vadd.f32 %v3493, %v3220
      %v3495 = vadd.f32 %v3494, %v3222
      %v3496 = vadd.f32 %v3495, %v3224
      %v3497 = vadd.f32 %v3496, %v3226
      %v3498 = vadd.f32 %v3497, %v3228
      %v3499 = vrot.slane %v3498, 4
      %v3500 = vadd.f32 %v3498, %v3499
      %v3501 = vrot.slane %v3500, 2
      %v3502 = vadd.f32 %v3500, %v3501
      %v3503 = vrot.slane %v3502, 1
      %v3504 = vadd.f32 %v3502, %v3503
      %v3505 = vadd.f32 %v3229, %v3231
      %v3506 = vadd.f32 %v3505, %v3233
      %v3507 = vadd.f32 %v3506, %v3235
      %v3508 = vadd.f32 %v3507, %v3237
      %v3509 = vadd.f32 %v3508, %v3239
      %v3510 = vadd.f32 %v3509, %v3241
      %v3511 = vadd.f32 %v3510, %v3243
      %v3512 = vadd.f32 %v3511, %v3245
      %v3513 = vadd.f32 %v3512, %v3247
      %v3514 = vadd.f32 %v3513, %v3249
      %v3515 = vadd.f32 %v3514, %v3251
      %v3516 = vadd.f32 %v3515, %v3253
      %v3517 = vadd.f32 %v3516, %v3255
      %v3518 = vadd.f32 %v3517, %v3257
      %v3519 = vadd.f32 %v3518, %v3259
      %v3520 = vadd.f32 %v3519, %v3261
      %v3521 = vadd.f32 %v3520, %v3263
      %v3522 = vadd.f32 %v3521, %v3265
      %v3523 = vadd.f32 %v3522, %v3267
      %v3524 = vadd.f32 %v3523, %v3269
      %v3525 = vadd.f32 %v3524, %v3271
      %v3526 = vadd.f32 %v3525, %v3273
      %v3527 = vadd.f32 %v3526, %v3275
      %v3528 = vadd.f32 %v3527, %v3277
      %v3529 = vadd.f32 %v3528, %v3279
      %v3530 = vadd.f32 %v3529, %v3281
      %v3531 = vadd.f32 %v3530, %v3283
      %v3532 = vadd.f32 %v3531, %v3285
      %v3533 = vadd.f32 %v3532, %v3287
      %v3534 = vadd.f32 %v3533, %v3289
      %v3535 = vadd.f32 %v3534, %v3291
      %v3536 = vrot.slane %v3535, 4
      %v3537 = vadd.f32 %v3535, %v3536
      %v3538 = vrot.slane %v3537, 2
      %v3539 = vadd.f32 %v3537, %v3538
      %v3540 = vrot.slane %v3539, 1
      %v3541 = vadd.f32 %v3539, %v3540
      %v3542 = vadd.f32 %v3230, %v3232
      %v3543 = vadd.f32 %v3542, %v3234
      %v3544 = vadd.f32 %v3543, %v3236
      %v3545 = vadd.f32 %v3544, %v3238
      %v3546 = vadd.f32 %v3545, %v3240
      %v3547 = vadd.f32 %v3546, %v3242
      %v3548 = vadd.f32 %v3547, %v3244
      %v3549 = vadd.f32 %v3548, %v3246
      %v3550 = vadd.f32 %v3549, %v3248
      %v3551 = vadd.f32 %v3550, %v3250
      %v3552 = vadd.f32 %v3551, %v3252
      %v3553 = vadd.f32 %v3552, %v3254
      %v3554 = vadd.f32 %v3553, %v3256
      %v3555 = vadd.f32 %v3554, %v3258
      %v3556 = vadd.f32 %v3555, %v3260
      %v3557 = vadd.f32 %v3556, %v3262
      %v3558 = vadd.f32 %v3557, %v3264
      %v3559 = vadd.f32 %v3558, %v3266
      %v3560 = vadd.f32 %v3559, %v3268
      %v3561 = vadd.f32 %v3560, %v3270
      %v3562 = vadd.f32 %v3561, %v3272
      %v3563 = vadd.f32 %v3562, %v3274
      %v3564 = vadd.f32 %v3563, %v3276
      %v3565 = vadd.f32 %v3564, %v3278
      %v3566 = vadd.f32 %v3565, %v3280
      %v3567 = vadd.f32 %v3566, %v3282
      %v3568 = vadd.f32 %v3567, %v3284
      %v3569 = vadd.f32 %v3568, %v3286
      %v3570 = vadd.f32 %v3569, %v3288
      %v3571 = vadd.f32 %v3570, %v3290
      %v3572 = vadd.f32 %v3571, %v3292
      %v3573 = vrot.slane %v3572, 4
      %v3574 = vadd.f32 %v3572, %v3573
      %v3575 = vrot.slane %v3574, 2
      %v3576 = vadd.f32 %v3574, %v3575
      %v3577 = vrot.slane %v3576, 1
      %v3578 = vadd.f32 %v3576, %v3577
      %v3579 = vadd.f32 %v3293, %v3295
      %v3580 = vadd.f32 %v3579, %v3297
      %v3581 = vadd.f32 %v3580, %v3299
      %v3582 = vadd.f32 %v3581, %v3301
      %v3583 = vadd.f32 %v3582, %v3303
      %v3584 = vadd.f32 %v3583, %v3305
      %v3585 = vadd.f32 %v3584, %v3307
      %v3586 = vadd.f32 %v3585, %v3309
      %v3587 = vadd.f32 %v3586, %v3311
      %v3588 = vadd.f32 %v3587, %v3313
      %v3589 = vadd.f32 %v3588, %v3315
      %v3590 = vadd.f32 %v3589, %v3317
      %v3591 = vadd.f32 %v3590, %v3319
      %v3592 = vadd.f32 %v3591, %v3321
      %v3593 = vadd.f32 %v3592, %v3323
      %v3594 = vadd.f32 %v3593, %v3325
      %v3595 = vadd.f32 %v3594, %v3327
      %v3596 = vadd.f32 %v3595, %v3329
      %v3597 = vadd.f32 %v3596, %v3331
      %v3598 = vadd.f32 %v3597, %v3333
      %v3599 = vadd.f32 %v3598, %v3335
      %v3600 = vadd.f32 %v3599, %v3337
      %v3601 = vadd.f32 %v3600, %v3339
      %v3602 = vadd.f32 %v3601, %v3341
      %v3603 = vadd.f32 %v3602, %v3343
      %v3604 = vadd.f32 %v3603, %v3345
      %v3605 = vadd.f32 %v3604, %v3347
      %v3606 = vadd.f32 %v3605, %v3349
      %v3607 = vadd.f32 %v3606, %v3351
      %v3608 = vadd.f32 %v3607, %v3353
      %v3609 = vadd.f32 %v3608, %v3355
      %v3610 = vrot.slane %v3609, 4
      %v3611 = vadd.f32 %v3609, %v3610
      %v3612 = vrot.slane %v3611, 2
      %v3613 = vadd.f32 %v3611, %v3612
      %v3614 = vrot.slane %v3613, 1
      %v3615 = vadd.f32 %v3613, %v3614
      %v3616 = vadd.f32 %v3294, %v3296
      %v3617 = vadd.f32 %v3616, %v3298
      %v3618 = vadd.f32 %v3617, %v3300
      %v3619 = vadd.f32 %v3618, %v3302
      %v3620 = vadd.f32 %v3619, %v3304
      %v3621 = vadd.f32 %v3620, %v3306
      %v3622 = vadd.f32 %v3621, %v3308
      %v3623 = vadd.f32 %v3622, %v3310
      %v3624 = vadd.f32 %v3623, %v3312
      %v3625 = vadd.f32 %v3624, %v3314
      %v3626 = vadd.f32 %v3625, %v3316
      %v3627 = vadd.f32 %v3626, %v3318
      %v3628 = vadd.f32 %v3627, %v3320
      %v3629 = vadd.f32 %v3628, %v3322
      %v3630 = vadd.f32 %v3629, %v3324
      %v3631 = vadd.f32 %v3630, %v3326
      %v3632 = vadd.f32 %v3631, %v3328
      %v3633 = vadd.f32 %v3632, %v3330
      %v3634 = vadd.f32 %v3633, %v3332
      %v3635 = vadd.f32 %v3634, %v3334
      %v3636 = vadd.f32 %v3635, %v3336
      %v3637 = vadd.f32 %v3636, %v3338
      %v3638 = vadd.f32 %v3637, %v3340
      %v3639 = vadd.f32 %v3638, %v3342
      %v3640 = vadd.f32 %v3639, %v3344
      %v3641 = vadd.f32 %v3640, %v3346
      %v3642 = vadd.f32 %v3641, %v3348
      %v3643 = vadd.f32 %v3642, %v3350
      %v3644 = vadd.f32 %v3643, %v3352
      %v3645 = vadd.f32 %v3644, %v3354
      %v3646 = vadd.f32 %v3645, %v3356
      %v3647 = vrot.slane %v3646, 4
      %v3648 = vadd.f32 %v3646, %v3647
      %v3649 = vrot.slane %v3648, 2
      %v3650 = vadd.f32 %v3648, %v3649
      %v3651 = vrot.slane %v3650, 1
      %v3652 = vadd.f32 %v3650, %v3651
      %v3661 = vsel %vm2402, %v3467, %v3393
      %v3662 = vsel %vm2404, %v3541, %v3661
      %v3663 = vsel %vm2406, %v3615, %v3662
      %v3664 = vsel %vm2402, %v3504, %v3430
      %v3665 = vsel %vm2404, %v3578, %v3664
      %v3666 = vsel %vm2406, %v3652, %v3665
      %v3669 = vsel %vm2413, %v3663, 0.0
      %v3670 = vsel %vm2413, %v3666, 0.0
      %v3671 = vadd.f32 %v3669, %v3670
      %3672 = vadd.xlane.f32.xlu0 %v3671
      %v3673 = vpop.xlane.xlu0 %3672
      %v3674 = vmul.f32 %v3673, 1.5258789e-05
      %v3675 = vmul.f32 %v655, %v3674
      %v3676 = vsel %vm2413, %v3675, 0.0
      %v3677 = vrot.slane %v3676, 4
      %v3678 = vadd.f32 %v3676, %v3677
      %v3679 = vrot.slane %v3678, 2
      %v3680 = vadd.f32 %v3678, %v3679
      %v3681 = vrot.slane %v3680, 1
      %v3682 = vadd.f32 %v3680, %v3681
      %vm3683 = vcmask 1040384
      %v3684 = vsel %vm3683, %v2427, %v3682
      %3685 = vst [vmem:[%s259] sm:$0x3] %v3684
      %p3686 = scmp.lt.s32.totalorder %s20, 1
      %s3687 = scalar_select %p3686, %s20, 1
      %p3688 = scmp.lt.s32.totalorder %s19, 0
      %s3689 = scalar_select %p3688, %s19, 0
      %s3690 = sadd.s32 %s3689, %s3687
      %s3691 = smul.addr %s3690, 2
      %s3692 = scalar_lea.vmem %s4, %s3691
      // Predicated region
      $region37: #{generic_backbone_forward.1} parent=35 // pred_check
        %p3693 = pneg %p146
      $region38: #{generic_backbone_forward.1} parent=35 // pred_check_branch
        %3695 = sbr.rel (%p3693) target = $region40
      $region39: #{generic_backbone_forward.1} parent=35 // pred_region
        _
      $region40: #{generic_backbone_forward.1} parent=35 // pred_fallthru
        _
    $region36: #{generic_backbone_forward.1} parent=5 // pred_fallthru
      _
    %p3696 = scmp.le.s32.totalorder 2, %s10
    // Predicated region
    $region41: #{generic_backbone_forward.1} parent=5 // pred_check
      %p3697 = pneg %p3696
    $region42: #{generic_backbone_forward.1} parent=5 // pred_check_branch
      %3699 = sbr.rel (%p3697) target = $region44
    $region43: #{generic_backbone_forward.1} parent=5 // pred_region
      %s3700 = ssub.s32 %s10, 2
      // Predicated region
      $region45: #{generic_backbone_forward.1} parent=43 // pred_check
        %p3701 = pneg %p152
      $region46: #{generic_backbone_forward.1} parent=43 // pred_check_branch
        %3703 = sbr.rel (%p3701) target = $region48
      $region47: #{generic_backbone_forward.1} parent=43 // pred_region
        %p3704 = scmp.lt.s32.totalorder %s22, 1
        %s3705 = scalar_select %p3704, %s22, 1
        %p3706 = scmp.lt.s32.totalorder %s21, 0
        %s3707 = scalar_select %p3706, %s21, 0
        %s3708 = sadd.s32 %s3707, %s3705
        %s3709 = smul.addr %s3708, 2
        %s3710 = scalar_lea.vmem %s4, %s3709
      $region48: #{generic_backbone_forward.1} parent=43 // pred_fallthru
        _
    $region44: #{generic_backbone_forward.1} parent=5 // pred_fallthru
      _
  $region6: #{generic_backbone_forward.1} parent=0 // loop_footer
    %s14 = sadd.s32 1, %s10
  $region7: #{generic_backbone_forward.1} parent=0 // loop_footer_branch
    %9 = sbr.rel target = $region3
  $region8: #{generic_backbone_forward.1} parent=0 // loop_exit
    _

</llo_original>
